<compile_context>
chip_gen: v7x
topology: tpu7x:2x2x1
jax: 0.10.0
libtpu: 0.0.40
codegen_flags: <defaults>
</compile_context>

<pallas_src>
import functools

import jax
import jax.numpy as jnp
from jax.experimental import pallas as pl
from jax.experimental.pallas import tpu as pltpu


# ---------------------------------------------------------------------------
# Model geometry (matches the PyTorch nn.Sequential)
# 562 -> 512 -> 512 -> 512 -> 512 -> 256 -> 256 -> 256 -> 256 -> 128 -> 64 -> 32 -> 1
# ---------------------------------------------------------------------------
LAYER_DIMS = [562, 512, 512, 512, 512, 256, 256, 256, 256, 128, 64, 32, 1]
NUM_LAYERS = len(LAYER_DIMS) - 1
NEG_SLOPE = 0.01


def _round_up(n, m):
    return ((n + m - 1) // m) * m


# Padded feature widths: input 562 -> 576 (cheap, sublane/lane friendly);
# every other width padded to >= 128 lanes (64/32/1 -> 128) so nothing below a
# full 128-lane vreg is ever stored.
PAD_IN = [576] + [max(128, _round_up(d, 128)) for d in LAYER_DIMS[1:-1]]
PAD_OUT = [max(128, _round_up(d, 128)) for d in LAYER_DIMS[1:]]

# Dense weight-slab layout (single bf16 [TOTAL_ROWS, 512] array): layer i's
# padded [PAD_IN[i], PAD_OUT[i]] block lives at (ROW_OFF[i], COL_OFF[i]).
# Tail layers are packed side-by-side so only ~3% of the slab is zero padding
# (vs ~28% in a naive left-aligned layout).  Row offsets are multiples of 16
# and column offsets multiples of 128 -> static in-kernel slices stay aligned
# to the bf16 (16, 128) tile and never materialize VMEM copies.
ROW_OFF = [0, 576, 1088, 1600, 2112, 2112, 2368, 2624, 2624, 2624, 2752, 2880]
COL_OFF = [0,   0,    0,    0,    0,  256,  256,    0,  256,  384,  384,    0]
TOTAL_ROWS = 3008          # multiple of 16 -> bf16 tile aligned
SLAB_W = 512

LAYER_SPECS = tuple(
    (ROW_OFF[i], COL_OFF[i], PAD_IN[i], PAD_OUT[i], i < NUM_LAYERS - 1)
    for i in range(NUM_LAYERS)
)


def _check_layout():
    """Sanity-check the hand-packed slab layout (alignment, bounds, overlap)."""
    for i in range(NUM_LAYERS - 1):
        assert PAD_OUT[i] == PAD_IN[i + 1]            # activation widths chain
    for r, c, din, dout, _ in LAYER_SPECS:
        assert r % 16 == 0 and c % 128 == 0
        assert r + din <= TOTAL_ROWS and c + dout <= SLAB_W
    for a in range(NUM_LAYERS):
        ra, ca, ha, wa, _ = LAYER_SPECS[a]
        for b in range(a + 1, NUM_LAYERS):
            rb, cb, hb, wb, _ = LAYER_SPECS[b]
            assert (ra + ha <= rb or rb + hb <= ra or
                    ca + wa <= cb or cb + wb <= ca), (a, b)


_check_layout()


# ---------------------------------------------------------------------------
# Fused kernel: whole MLP in one body; activations never leave VMEM.
# ---------------------------------------------------------------------------
def _fused_mlp_kernel(x_ref, w_ref, b_ref, o_ref, *, layer_specs, neg_slope):
    # x_ref: (TB, 576) bf16          w_ref: (3008, 512) bf16 (resident, single copy)
    # b_ref: (12, 512) f32           o_ref: (TB, 128) f32
    h = x_ref[...]                                        # bf16 activations
    for li, (r0, c0, din_p, dout_p, apply_act) in enumerate(layer_specs):
        w = w_ref[r0:r0 + din_p, c0:c0 + dout_p]          # bf16, tile-aligned slice
        b = b_ref[li:li + 1, 0:dout_p]                    # f32 (1, dout_p)
        # bf16 x bf16 on the MXU with f32 accumulation; bias + LeakyReLU in f32.
        y = jnp.dot(h, w, preferred_element_type=jnp.float32) + b
        if apply_act:
            y = jnp.where(y > 0, y, neg_slope * y)        # VPU, f32
            h = y.astype(jnp.bfloat16)                    # keep activations bf16
        else:
            h = y                                         # final layer stays f32
    o_ref[...] = h.astype(o_ref.dtype)


# ---------------------------------------------------------------------------
# Host-side parameter init + packing into the dense aligned slabs.
# ---------------------------------------------------------------------------
def init_params(key):
    """PyTorch nn.Linear default init: W, b ~ U(-1/sqrt(fan_in), 1/sqrt(fan_in)).

    Weights here are generated as [in, out].  NOTE: a real PyTorch checkpoint
    stores nn.Linear.weight as [out, in] (y = x @ W.T) — transpose each weight
    before calling pack_params when importing torch weights.
    """
    params = []
    for din, dout in zip(LAYER_DIMS[:-1], LAYER_DIMS[1:]):
        key, kw, kb = jax.random.split(key, 3)
        bound = 1.0 / (din ** 0.5)
        w = jax.random.uniform(kw, (din, dout), jnp.float32, -bound, bound)
        b = jax.random.uniform(kb, (dout,), jnp.float32, -bound, bound)
        params.append((w, b))
    return params


def pack_params(params):
    """Pack all 12 layers into one dense zero-padded bf16 weight slab + f32 bias slab."""
    w_slab = jnp.zeros((TOTAL_ROWS, SLAB_W), jnp.bfloat16)
    b_slab = jnp.zeros((NUM_LAYERS, SLAB_W), jnp.float32)
    for i, (w, b) in enumerate(params):
        din, dout = w.shape
        assert (din, dout) == (LAYER_DIMS[i], LAYER_DIMS[i + 1])
        r0, c0 = ROW_OFF[i], COL_OFF[i]
        w_slab = w_slab.at[r0:r0 + din, c0:c0 + dout].set(w.astype(jnp.bfloat16))
        b_slab = b_slab.at[i, :dout].set(b.astype(jnp.float32))
    return w_slab, b_slab


# ---------------------------------------------------------------------------
# Batch tiling heuristic.
# ---------------------------------------------------------------------------
def _choose_tiling(B):
    """Return (batch_tile, padded_batch)."""
    if B <= 256:
        # Small batch (inference): single tile — the kernel is dominated by
        # the one-shot ~3 MiB weight copy, so splitting cores would only
        # duplicate that copy.
        tb = _round_up(max(B, 8), 8)
        return tb, tb
    # Larger batches: 128-row granularity (padding waste < 128 rows), tile
    # capped at 512 rows, and grid >= 2 so the "parallel" batch axis shards
    # across TensorCores on v7x megacore.
    b_pad = _round_up(B, 128)
    chunks = b_pad // 128
    for c in (4, 3, 2, 1):
        if chunks % c == 0 and chunks // c >= 2:
            return c * 128, b_pad
    return b_pad, b_pad   # unreachable for B > 256; kept for safety


# ---------------------------------------------------------------------------
# Forward pass: one pallas_call for the whole network.
# ---------------------------------------------------------------------------
@jax.jit
def linear_model_forward(x, w_slab, b_slab):
    B, din = x.shape
    assert din == LAYER_DIMS[0]

    tb, b_pad = _choose_tiling(B)
    in_pad, out_pad = PAD_IN[0], PAD_OUT[-1]

    # bf16 input (halves the per-tile DMA); pad only by what is actually needed.
    x_p = x.astype(jnp.bfloat16)
    if b_pad != B or in_pad != din:
        x_p = jnp.pad(x_p, ((0, b_pad - B), (0, in_pad - din)))

    kernel = functools.partial(_fused_mlp_kernel,
                               layer_specs=LAYER_SPECS, neg_slope=NEG_SLOPE)

    y_p = pl.pallas_call(
        kernel,
        out_shape=jax.ShapeDtypeStruct((b_pad, out_pad), jnp.float32),
        grid_spec=pltpu.PrefetchScalarGridSpec(
            num_scalar_prefetch=0,
            grid=(b_pad // tb,),
            in_specs=[
                pl.BlockSpec((tb, in_pad), lambda i: (i, 0)),
                # Whole slabs placed in VMEM once (unblocked -> not part of the
                # pipeline, so no double buffering): single resident copy
                # shared by every grid step.
                pl.BlockSpec(memory_space=pltpu.MemorySpace.VMEM),
                pl.BlockSpec(memory_space=pltpu.MemorySpace.VMEM),
            ],
            out_specs=pl.BlockSpec((tb, out_pad), lambda i: (i, 0)),
        ),
        compiler_params=pltpu.CompilerParams(
            dimension_semantics=("parallel",),
            vmem_limit_bytes=32 * 1024 * 1024,
        ),
    )(x_p, w_slab, b_slab)

    # Only column 0 is real output (tail layers are lane-padded to 128 so no
    # sub-128-lane store ever happens inside the kernel).
    return y_p[:B, :1]


# ---------------------------------------------------------------------------
# Pure-JAX reference mirroring the kernel's precision (bf16 weights and
# activations into every matmul, f32 accumulation, f32 bias + LeakyReLU).
# ---------------------------------------------------------------------------
def reference_forward(x, params):
    h = x.astype(jnp.bfloat16)
    for i, (w, b) in enumerate(params):
        y = jnp.dot(h, w.astype(jnp.bfloat16),
                    preferred_element_type=jnp.float32) + b
        if i < NUM_LAYERS - 1:
            y = jnp.where(y > 0, y, NEG_SLOPE * y)
            h = y.astype(jnp.bfloat16)
        else:
            h = y
    return h


if __name__ == "__main__":
    key = jax.random.PRNGKey(0)
    key, kx1, kx2 = jax.random.split(key, 3)

    params = init_params(key)
    w_slab, b_slab = pack_params(params)

    # Small-batch path (single tile, grid = 1).
    x_small = jax.random.normal(kx1, (8, LAYER_DIMS[0]), dtype=jnp.float32)
    out_small = jax.block_until_ready(linear_model_forward(x_small, w_slab, b_slab))
    assert out_small.shape == (8, 1), out_small.shape
    assert out_small.dtype == jnp.float32, out_small.dtype
    ref_small = jax.block_until_ready(reference_forward(x_small, params))
    assert jnp.allclose(out_small, ref_small, atol=5e-3, rtol=5e-3), (
        float(jnp.max(jnp.abs(out_small - ref_small))))

    # Multi-tile path (B > 256 -> 128-row tiles, grid >= 2, padded batch rows).
    x_big = jax.random.normal(kx2, (260, LAYER_DIMS[0]), dtype=jnp.float32)
    out_big = jax.block_until_ready(linear_model_forward(x_big, w_slab, b_slab))
    assert out_big.shape == (260, 1), out_big.shape
    assert out_big.dtype == jnp.float32, out_big.dtype
    ref_big = jax.block_until_ready(reference_forward(x_big, params))
    assert jnp.allclose(out_big, ref_big, atol=5e-3, rtol=5e-3), (
        float(jnp.max(jnp.abs(out_big - ref_big))))

    print("KERNEL_OK")
</pallas_src>

<mosaic_0001>
module attributes {stable_mosaic.version = 11 : i64} {
  func.func @_fused_mlp_kernel(%arg0: i32, %arg1: memref<8x576xbf16, #tpu.memory_space<vmem>>, %arg2: memref<3008x512xbf16, #tpu.memory_space<vmem>>, %arg3: memref<12x512xf32, #tpu.memory_space<vmem>>, %arg4: memref<8x128xf32, #tpu.memory_space<vmem>>) attributes {dimension_semantics = [#tpu.dimension_semantics<parallel>], iteration_bounds = array<i64: 1>, scalar_prefetch = 0 : i64, scratch_operands = 0 : i64, tpu.core_type = #tpu.core_type<tc>, window_params = [{transform_indices = @transform_0, window_bounds = array<i64: 8, 576>}, {pipeline_mode = #tpu.pipeline_mode<synchronous>, transform_indices = @transform_1, window_bounds = array<i64: 3008, 512>}, {pipeline_mode = #tpu.pipeline_mode<synchronous>, transform_indices = @transform_2, window_bounds = array<i64: 12, 512>}, {transform_indices = @transform_3, window_bounds = array<i64: 8, 128>}]} {
    %c0 = arith.constant 0 : index
    %c0_0 = arith.constant 0 : index
    %0 = vector.load %arg1[%c0, %c0_0] : memref<8x576xbf16, #tpu.memory_space<vmem>>, vector<8x576xbf16>
    %c0_1 = arith.constant 0 : index
    %c0_2 = arith.constant 0 : index
    %1 = vector.load %arg2[%c0_1, %c0_2] : memref<3008x512xbf16, #tpu.memory_space<vmem>>, vector<576x512xbf16>
    %c0_3 = arith.constant 0 : index
    %c0_4 = arith.constant 0 : index
    %2 = vector.load %arg3[%c0_3, %c0_4] : memref<12x512xf32, #tpu.memory_space<vmem>>, vector<1x512xf32>
    %cst = arith.constant dense<0.000000e+00> : vector<8x512xf32>
    %3 = tpu.matmul %0, %1, %cst {dimension_numbers = #tpu.dot_dimension_numbers<[1], [0], [0], [1], [0, 0, 1, 1], [], []>} : vector<8x576xbf16>, vector<576x512xbf16>, vector<8x512xf32> -> vector<8x512xf32>
    %4 = vector.broadcast %2 : vector<1x512xf32> to vector<8x512xf32>
    %5 = arith.addf %3, %4 : vector<8x512xf32>
    %cst_5 = arith.constant 0.000000e+00 : f32
    %6 = vector.broadcast %cst_5 : f32 to vector<8x512xf32>
    %7 = arith.cmpf ogt, %5, %6 : vector<8x512xf32>
    %cst_6 = arith.constant 0.00999999977 : f32
    %8 = vector.broadcast %cst_6 : f32 to vector<8x512xf32>
    %9 = arith.mulf %8, %5 : vector<8x512xf32>
    %10 = arith.select %7, %5, %9 : vector<8x512xi1>, vector<8x512xf32>
    %11 = arith.truncf %10 : vector<8x512xf32> to vector<8x512xbf16>
    %c576 = arith.constant 576 : index
    %c0_7 = arith.constant 0 : index
    %12 = vector.load %arg2[%c576, %c0_7] : memref<3008x512xbf16, #tpu.memory_space<vmem>>, vector<512x512xbf16>
    %c1 = arith.constant 1 : index
    %c0_8 = arith.constant 0 : index
    %13 = vector.load %arg3[%c1, %c0_8] : memref<12x512xf32, #tpu.memory_space<vmem>>, vector<1x512xf32>
    %cst_9 = arith.constant dense<0.000000e+00> : vector<8x512xf32>
    %14 = tpu.matmul %11, %12, %cst_9 {dimension_numbers = #tpu.dot_dimension_numbers<[1], [0], [0], [1], [0, 0, 1, 1], [], []>} : vector<8x512xbf16>, vector<512x512xbf16>, vector<8x512xf32> -> vector<8x512xf32>
    %15 = vector.broadcast %13 : vector<1x512xf32> to vector<8x512xf32>
    %16 = arith.addf %14, %15 : vector<8x512xf32>
    %cst_10 = arith.constant 0.000000e+00 : f32
    %17 = vector.broadcast %cst_10 : f32 to vector<8x512xf32>
    %18 = arith.cmpf ogt, %16, %17 : vector<8x512xf32>
    %cst_11 = arith.constant 0.00999999977 : f32
    %19 = vector.broadcast %cst_11 : f32 to vector<8x512xf32>
    %20 = arith.mulf %19, %16 : vector<8x512xf32>
    %21 = arith.select %18, %16, %20 : vector<8x512xi1>, vector<8x512xf32>
    %22 = arith.truncf %21 : vector<8x512xf32> to vector<8x512xbf16>
    %c1088 = arith.constant 1088 : index
    %c0_12 = arith.constant 0 : index
    %23 = vector.load %arg2[%c1088, %c0_12] : memref<3008x512xbf16, #tpu.memory_space<vmem>>, vector<512x512xbf16>
    %c2 = arith.constant 2 : index
    %c0_13 = arith.constant 0 : index
    %24 = vector.load %arg3[%c2, %c0_13] : memref<12x512xf32, #tpu.memory_space<vmem>>, vector<1x512xf32>
    %cst_14 = arith.constant dense<0.000000e+00> : vector<8x512xf32>
    %25 = tpu.matmul %22, %23, %cst_14 {dimension_numbers = #tpu.dot_dimension_numbers<[1], [0], [0], [1], [0, 0, 1, 1], [], []>} : vector<8x512xbf16>, vector<512x512xbf16>, vector<8x512xf32> -> vector<8x512xf32>
    %26 = vector.broadcast %24 : vector<1x512xf32> to vector<8x512xf32>
    %27 = arith.addf %25, %26 : vector<8x512xf32>
    %cst_15 = arith.constant 0.000000e+00 : f32
    %28 = vector.broadcast %cst_15 : f32 to vector<8x512xf32>
    %29 = arith.cmpf ogt, %27, %28 : vector<8x512xf32>
    %cst_16 = arith.constant 0.00999999977 : f32
    %30 = vector.broadcast %cst_16 : f32 to vector<8x512xf32>
    %31 = arith.mulf %30, %27 : vector<8x512xf32>
    %32 = arith.select %29, %27, %31 : vector<8x512xi1>, vector<8x512xf32>
    %33 = arith.truncf %32 : vector<8x512xf32> to vector<8x512xbf16>
    %c1600 = arith.constant 1600 : index
    %c0_17 = arith.constant 0 : index
    %34 = vector.load %arg2[%c1600, %c0_17] : memref<3008x512xbf16, #tpu.memory_space<vmem>>, vector<512x512xbf16>
    %c3 = arith.constant 3 : index
    %c0_18 = arith.constant 0 : index
    %35 = vector.load %arg3[%c3, %c0_18] : memref<12x512xf32, #tpu.memory_space<vmem>>, vector<1x512xf32>
    %cst_19 = arith.constant dense<0.000000e+00> : vector<8x512xf32>
    %36 = tpu.matmul %33, %34, %cst_19 {dimension_numbers = #tpu.dot_dimension_numbers<[1], [0], [0], [1], [0, 0, 1, 1], [], []>} : vector<8x512xbf16>, vector<512x512xbf16>, vector<8x512xf32> -> vector<8x512xf32>
    %37 = vector.broadcast %35 : vector<1x512xf32> to vector<8x512xf32>
    %38 = arith.addf %36, %37 : vector<8x512xf32>
    %cst_20 = arith.constant 0.000000e+00 : f32
    %39 = vector.broadcast %cst_20 : f32 to vector<8x512xf32>
    %40 = arith.cmpf ogt, %38, %39 : vector<8x512xf32>
    %cst_21 = arith.constant 0.00999999977 : f32
    %41 = vector.broadcast %cst_21 : f32 to vector<8x512xf32>
    %42 = arith.mulf %41, %38 : vector<8x512xf32>
    %43 = arith.select %40, %38, %42 : vector<8x512xi1>, vector<8x512xf32>
    %44 = arith.truncf %43 : vector<8x512xf32> to vector<8x512xbf16>
    %c2112 = arith.constant 2112 : index
    %c0_22 = arith.constant 0 : index
    %45 = vector.load %arg2[%c2112, %c0_22] : memref<3008x512xbf16, #tpu.memory_space<vmem>>, vector<512x256xbf16>
    %c4 = arith.constant 4 : index
    %c0_23 = arith.constant 0 : index
    %46 = vector.load %arg3[%c4, %c0_23] : memref<12x512xf32, #tpu.memory_space<vmem>>, vector<1x256xf32>
    %cst_24 = arith.constant dense<0.000000e+00> : vector<8x256xf32>
    %47 = tpu.matmul %44, %45, %cst_24 {dimension_numbers = #tpu.dot_dimension_numbers<[1], [0], [0], [1], [0, 0, 1, 1], [], []>} : vector<8x512xbf16>, vector<512x256xbf16>, vector<8x256xf32> -> vector<8x256xf32>
    %48 = vector.broadcast %46 : vector<1x256xf32> to vector<8x256xf32>
    %49 = arith.addf %47, %48 : vector<8x256xf32>
    %cst_25 = arith.constant 0.000000e+00 : f32
    %50 = vector.broadcast %cst_25 : f32 to vector<8x256xf32>
    %51 = arith.cmpf ogt, %49, %50 : vector<8x256xf32>
    %cst_26 = arith.constant 0.00999999977 : f32
    %52 = vector.broadcast %cst_26 : f32 to vector<8x256xf32>
    %53 = arith.mulf %52, %49 : vector<8x256xf32>
    %54 = arith.select %51, %49, %53 : vector<8x256xi1>, vector<8x256xf32>
    %55 = arith.truncf %54 : vector<8x256xf32> to vector<8x256xbf16>
    %c2112_27 = arith.constant 2112 : index
    %c256 = arith.constant 256 : index
    %56 = vector.load %arg2[%c2112_27, %c256] : memref<3008x512xbf16, #tpu.memory_space<vmem>>, vector<256x256xbf16>
    %c5 = arith.constant 5 : index
    %c0_28 = arith.constant 0 : index
    %57 = vector.load %arg3[%c5, %c0_28] : memref<12x512xf32, #tpu.memory_space<vmem>>, vector<1x256xf32>
    %cst_29 = arith.constant dense<0.000000e+00> : vector<8x256xf32>
    %58 = tpu.matmul %55, %56, %cst_29 {dimension_numbers = #tpu.dot_dimension_numbers<[1], [0], [0], [1], [0, 0, 1, 1], [], []>} : vector<8x256xbf16>, vector<256x256xbf16>, vector<8x256xf32> -> vector<8x256xf32>
    %59 = vector.broadcast %57 : vector<1x256xf32> to vector<8x256xf32>
    %60 = arith.addf %58, %59 : vector<8x256xf32>
    %cst_30 = arith.constant 0.000000e+00 : f32
    %61 = vector.broadcast %cst_30 : f32 to vector<8x256xf32>
    %62 = arith.cmpf ogt, %60, %61 : vector<8x256xf32>
    %cst_31 = arith.constant 0.00999999977 : f32
    %63 = vector.broadcast %cst_31 : f32 to vector<8x256xf32>
    %64 = arith.mulf %63, %60 : vector<8x256xf32>
    %65 = arith.select %62, %60, %64 : vector<8x256xi1>, vector<8x256xf32>
    %66 = arith.truncf %65 : vector<8x256xf32> to vector<8x256xbf16>
    %c2368 = arith.constant 2368 : index
    %c256_32 = arith.constant 256 : index
    %67 = vector.load %arg2[%c2368, %c256_32] : memref<3008x512xbf16, #tpu.memory_space<vmem>>, vector<256x256xbf16>
    %c6 = arith.constant 6 : index
    %c0_33 = arith.constant 0 : index
    %68 = vector.load %arg3[%c6, %c0_33] : memref<12x512xf32, #tpu.memory_space<vmem>>, vector<1x256xf32>
    %cst_34 = arith.constant dense<0.000000e+00> : vector<8x256xf32>
    %69 = tpu.matmul %66, %67, %cst_34 {dimension_numbers = #tpu.dot_dimension_numbers<[1], [0], [0], [1], [0, 0, 1, 1], [], []>} : vector<8x256xbf16>, vector<256x256xbf16>, vector<8x256xf32> -> vector<8x256xf32>
    %70 = vector.broadcast %68 : vector<1x256xf32> to vector<8x256xf32>
    %71 = arith.addf %69, %70 : vector<8x256xf32>
    %cst_35 = arith.constant 0.000000e+00 : f32
    %72 = vector.broadcast %cst_35 : f32 to vector<8x256xf32>
    %73 = arith.cmpf ogt, %71, %72 : vector<8x256xf32>
    %cst_36 = arith.constant 0.00999999977 : f32
    %74 = vector.broadcast %cst_36 : f32 to vector<8x256xf32>
    %75 = arith.mulf %74, %71 : vector<8x256xf32>
    %76 = arith.select %73, %71, %75 : vector<8x256xi1>, vector<8x256xf32>
    %77 = arith.truncf %76 : vector<8x256xf32> to vector<8x256xbf16>
    %c2624 = arith.constant 2624 : index
    %c0_37 = arith.constant 0 : index
    %78 = vector.load %arg2[%c2624, %c0_37] : memref<3008x512xbf16, #tpu.memory_space<vmem>>, vector<256x256xbf16>
    %c7 = arith.constant 7 : index
    %c0_38 = arith.constant 0 : index
    %79 = vector.load %arg3[%c7, %c0_38] : memref<12x512xf32, #tpu.memory_space<vmem>>, vector<1x256xf32>
    %cst_39 = arith.constant dense<0.000000e+00> : vector<8x256xf32>
    %80 = tpu.matmul %77, %78, %cst_39 {dimension_numbers = #tpu.dot_dimension_numbers<[1], [0], [0], [1], [0, 0, 1, 1], [], []>} : vector<8x256xbf16>, vector<256x256xbf16>, vector<8x256xf32> -> vector<8x256xf32>
    %81 = vector.broadcast %79 : vector<1x256xf32> to vector<8x256xf32>
    %82 = arith.addf %80, %81 : vector<8x256xf32>
    %cst_40 = arith.constant 0.000000e+00 : f32
    %83 = vector.broadcast %cst_40 : f32 to vector<8x256xf32>
    %84 = arith.cmpf ogt, %82, %83 : vector<8x256xf32>
    %cst_41 = arith.constant 0.00999999977 : f32
    %85 = vector.broadcast %cst_41 : f32 to vector<8x256xf32>
    %86 = arith.mulf %85, %82 : vector<8x256xf32>
    %87 = arith.select %84, %82, %86 : vector<8x256xi1>, vector<8x256xf32>
    %88 = arith.truncf %87 : vector<8x256xf32> to vector<8x256xbf16>
    %c2624_42 = arith.constant 2624 : index
    %c256_43 = arith.constant 256 : index
    %89 = vector.load %arg2[%c2624_42, %c256_43] : memref<3008x512xbf16, #tpu.memory_space<vmem>>, vector<256x128xbf16>
    %c8 = arith.constant 8 : index
    %c0_44 = arith.constant 0 : index
    %90 = vector.load %arg3[%c8, %c0_44] : memref<12x512xf32, #tpu.memory_space<vmem>>, vector<1x128xf32>
    %cst_45 = arith.constant dense<0.000000e+00> : vector<8x128xf32>
    %91 = tpu.matmul %88, %89, %cst_45 {dimension_numbers = #tpu.dot_dimension_numbers<[1], [0], [0], [1], [0, 0, 1, 1], [], []>} : vector<8x256xbf16>, vector<256x128xbf16>, vector<8x128xf32> -> vector<8x128xf32>
    %92 = vector.broadcast %90 : vector<1x128xf32> to vector<8x128xf32>
    %93 = arith.addf %91, %92 : vector<8x128xf32>
    %cst_46 = arith.constant 0.000000e+00 : f32
    %94 = vector.broadcast %cst_46 : f32 to vector<8x128xf32>
    %95 = arith.cmpf ogt, %93, %94 : vector<8x128xf32>
    %cst_47 = arith.constant 0.00999999977 : f32
    %96 = vector.broadcast %cst_47 : f32 to vector<8x128xf32>
    %97 = arith.mulf %96, %93 : vector<8x128xf32>
    %98 = arith.select %95, %93, %97 : vector<8x128xi1>, vector<8x128xf32>
    %99 = arith.truncf %98 : vector<8x128xf32> to vector<8x128xbf16>
    %c2624_48 = arith.constant 2624 : index
    %c384 = arith.constant 384 : index
    %100 = vector.load %arg2[%c2624_48, %c384] : memref<3008x512xbf16, #tpu.memory_space<vmem>>, vector<128x128xbf16>
    %c9 = arith.constant 9 : index
    %c0_49 = arith.constant 0 : index
    %101 = vector.load %arg3[%c9, %c0_49] : memref<12x512xf32, #tpu.memory_space<vmem>>, vector<1x128xf32>
    %cst_50 = arith.constant dense<0.000000e+00> : vector<8x128xf32>
    %102 = tpu.matmul %99, %100, %cst_50 {dimension_numbers = #tpu.dot_dimension_numbers<[1], [0], [0], [1], [0, 0, 1, 1], [], []>} : vector<8x128xbf16>, vector<128x128xbf16>, vector<8x128xf32> -> vector<8x128xf32>
    %103 = vector.broadcast %101 : vector<1x128xf32> to vector<8x128xf32>
    %104 = arith.addf %102, %103 : vector<8x128xf32>
    %cst_51 = arith.constant 0.000000e+00 : f32
    %105 = vector.broadcast %cst_51 : f32 to vector<8x128xf32>
    %106 = arith.cmpf ogt, %104, %105 : vector<8x128xf32>
    %cst_52 = arith.constant 0.00999999977 : f32
    %107 = vector.broadcast %cst_52 : f32 to vector<8x128xf32>
    %108 = arith.mulf %107, %104 : vector<8x128xf32>
    %109 = arith.select %106, %104, %108 : vector<8x128xi1>, vector<8x128xf32>
    %110 = arith.truncf %109 : vector<8x128xf32> to vector<8x128xbf16>
    %c2752 = arith.constant 2752 : index
    %c384_53 = arith.constant 384 : index
    %111 = vector.load %arg2[%c2752, %c384_53] : memref<3008x512xbf16, #tpu.memory_space<vmem>>, vector<128x128xbf16>
    %c10 = arith.constant 10 : index
    %c0_54 = arith.constant 0 : index
    %112 = vector.load %arg3[%c10, %c0_54] : memref<12x512xf32, #tpu.memory_space<vmem>>, vector<1x128xf32>
    %cst_55 = arith.constant dense<0.000000e+00> : vector<8x128xf32>
    %113 = tpu.matmul %110, %111, %cst_55 {dimension_numbers = #tpu.dot_dimension_numbers<[1], [0], [0], [1], [0, 0, 1, 1], [], []>} : vector<8x128xbf16>, vector<128x128xbf16>, vector<8x128xf32> -> vector<8x128xf32>
    %114 = vector.broadcast %112 : vector<1x128xf32> to vector<8x128xf32>
    %115 = arith.addf %113, %114 : vector<8x128xf32>
    %cst_56 = arith.constant 0.000000e+00 : f32
    %116 = vector.broadcast %cst_56 : f32 to vector<8x128xf32>
    %117 = arith.cmpf ogt, %115, %116 : vector<8x128xf32>
    %cst_57 = arith.constant 0.00999999977 : f32
    %118 = vector.broadcast %cst_57 : f32 to vector<8x128xf32>
    %119 = arith.mulf %118, %115 : vector<8x128xf32>
    %120 = arith.select %117, %115, %119 : vector<8x128xi1>, vector<8x128xf32>
    %121 = arith.truncf %120 : vector<8x128xf32> to vector<8x128xbf16>
    %c2880 = arith.constant 2880 : index
    %c0_58 = arith.constant 0 : index
    %122 = vector.load %arg2[%c2880, %c0_58] : memref<3008x512xbf16, #tpu.memory_space<vmem>>, vector<128x128xbf16>
    %c11 = arith.constant 11 : index
    %c0_59 = arith.constant 0 : index
    %123 = vector.load %arg3[%c11, %c0_59] : memref<12x512xf32, #tpu.memory_space<vmem>>, vector<1x128xf32>
    %cst_60 = arith.constant dense<0.000000e+00> : vector<8x128xf32>
    %124 = tpu.matmul %121, %122, %cst_60 {dimension_numbers = #tpu.dot_dimension_numbers<[1], [0], [0], [1], [0, 0, 1, 1], [], []>} : vector<8x128xbf16>, vector<128x128xbf16>, vector<8x128xf32> -> vector<8x128xf32>
    %125 = vector.broadcast %123 : vector<1x128xf32> to vector<8x128xf32>
    %126 = arith.addf %124, %125 : vector<8x128xf32>
    %c0_61 = arith.constant 0 : index
    %c0_62 = arith.constant 0 : index
    %127 = vector.load %arg4[%c0_61, %c0_62] : memref<8x128xf32, #tpu.memory_space<vmem>>, vector<8x128xf32>
    tpu.vector_store %arg4[%c0_61, %c0_62], %126 {strides = array<i32>} : memref<8x128xf32, #tpu.memory_space<vmem>>, vector<8x128xf32>,
    return
  }
  func.func @transform_0(%arg0: i32) -> (i32, i32) {
    %c0_i32 = arith.constant 0 : i32
    %c0_i32_0 = arith.constant 0 : i32
    return %arg0, %c0_i32 : i32, i32
  }
  func.func @transform_1(%arg0: i32) -> (i32, i32) {
    %c0_i32 = arith.constant 0 : i32
    %c0_i32_0 = arith.constant 0 : i32
    %c0_i32_1 = arith.constant 0 : i32
    return %c0_i32, %c0_i32_0 : i32, i32
  }
  func.func @transform_2(%arg0: i32) -> (i32, i32) {
    %c0_i32 = arith.constant 0 : i32
    %c0_i32_0 = arith.constant 0 : i32
    %c0_i32_1 = arith.constant 0 : i32
    return %c0_i32, %c0_i32_0 : i32, i32
  }
  func.func @transform_3(%arg0: i32) -> (i32, i32) {
    %c0_i32 = arith.constant 0 : i32
    %c0_i32_0 = arith.constant 0 : i32
    return %arg0, %c0_i32 : i32, i32
  }
}

</mosaic_0001>

<llo_original>
// kernel: linear_model_forward.1
$region0: #{linear_model_forward.1}
  #allocation0 [shape = 'u32[]', space=smem, size = 0x4, offset = 0x4, fixed_abs, tag = 'smem constant byte address 0x4 - core index']
  #allocation1 [shape = 'u32[144,128]{1,0:T(1,128)}', space=vmem, size = 0x12000, scoped, tag = 'internal scratch']
  %s0 = inlined_call_operand.vmem [shape: bf16[8,576], index: 0, kind: input, shape index: {}]
  %s1 = inlined_call_operand.hbm [shape: bf16[3008,512], index: 1, kind: input, shape index: {}]
  %s2 = inlined_call_operand.hbm [shape: f32[12,512], index: 2, kind: input, shape index: {}]
  %s3 = inlined_call_operand.vmem [shape: f32[8,128], index: 3, kind: output, shape index: {}]
  %s4 = sld [smem:[#allocation0]]
  $region30: #{linear_model_forward.1} parent=0
    _
  %s6 = ssub.s32 1, %s4
  %s7 = scalar_select 0, %s6, %s4
  $region1: #{linear_model_forward.1} parent=0
    #allocation2 [shape = 'u8[3080192]{0}', space=vmem, size = 0x2f0000, scoped, tag = 'input window, operand 1, single buffered']
    #allocation3 [shape = 's32[1]{0}', space=sflag, size = 0x4, scoped, tag = 'scoped memory for linear_model_forward.1']
    #allocation4 [shape = 'u8[32768]{0}', space=vmem, size = 0x8000, scoped, tag = 'input window, operand 2, single buffered']
    #allocation5 [shape = 's32[1]{0}', space=sflag, size = 0x4, scoped, tag = 'scoped memory for linear_model_forward.1']
    %8 = vsyncpa [#allocation3], 0
    %9 = vsyncpa [#allocation5], 0
    // Predicated region
    $region2: #{linear_model_forward.1} parent=1 // pred_check
      _
    $region3: #{linear_model_forward.1} parent=1 // pred_check_branch
      %11 = sbr.rel (0) target = $region5
    $region4: #{linear_model_forward.1} parent=1 // pred_region
      _
    $region5: #{linear_model_forward.1} parent=1 // pred_fallthru
      _
    // Predicated region
    $region6: #{linear_model_forward.1} parent=1 // pred_check
      _
    $region7: #{linear_model_forward.1} parent=1 // pred_check_branch
      %13 = sbr.rel (0) target = $region9
    $region8: #{linear_model_forward.1} parent=1 // pred_region
      %s15 = ssub.s32 96256, 96256
      %16 = vsyncadd [#allocation3], %s15
      %s17 = sshll.u32 [#allocation2], 4
      %s18 = int_to_ptr.vmem [resolvable:$true] %s17
      %23 = dma.hbm_to_vmem [thread:$0]  %s1, 96256, %s18, [#allocation3], 256, 256, 16
    $region9: #{linear_model_forward.1} parent=1 // pred_fallthru
      _
    // Predicated region
    $region10: #{linear_model_forward.1} parent=1 // pred_check
      _
    $region11: #{linear_model_forward.1} parent=1 // pred_check_branch
      %25 = sbr.rel (0) target = $region13
    $region12: #{linear_model_forward.1} parent=1 // pred_region
      %s27 = ssub.s32 1024, 1024
      %28 = vsyncadd [#allocation5], %s27
      %s29 = sshll.u32 [#allocation4], 4
      %s30 = int_to_ptr.vmem [resolvable:$true] %s29
      %35 = dma.hbm_to_vmem [thread:$0]  %s2, 1024, %s30, [#allocation5], 512, 512, 32
    $region13: #{linear_model_forward.1} parent=1 // pred_fallthru
      _
    // Predicated region
    $region14: #{linear_model_forward.1} parent=1 // pred_check
      _
    $region15: #{linear_model_forward.1} parent=1 // pred_check_branch
      %37 = sbr.rel (0) target = $region17
    $region16: #{linear_model_forward.1} parent=1 // pred_region
      %38 = dma.done [#allocation3], 96256
    $region17: #{linear_model_forward.1} parent=1 // pred_fallthru
      _
    // Predicated region
    $region18: #{linear_model_forward.1} parent=1 // pred_check
      _
    $region19: #{linear_model_forward.1} parent=1 // pred_check_branch
      %40 = sbr.rel (0) target = $region21
    $region20: #{linear_model_forward.1} parent=1 // pred_region
      %41 = dma.done [#allocation5], 1024
    $region21: #{linear_model_forward.1} parent=1 // pred_fallthru
      _
    %v43 = vld [vmem:[%s0] sm:$0xff]
    %v44 = vld [vmem:[%s0 + $0x8] sm:$0xff]
    %v45 = vld [vmem:[%s0 + $0x10] sm:$0xf]
    %v46 = vld [vmem:[#allocation2] sm:$0xff]
    %v47 = vld [vmem:[#allocation2 + $0x8] sm:$0xff]
    %v48 = vld [vmem:[#allocation2 + $0x10] sm:$0xff]
    %v49 = vld [vmem:[#allocation2 + $0x18] sm:$0xff]
    %v50 = vld [vmem:[#allocation2 + $0x20] sm:$0xff]
    %v51 = vld [vmem:[#allocation2 + $0x28] sm:$0xff]
    %v52 = vld [vmem:[#allocation2 + $0x30] sm:$0xff]
    %v53 = vld [vmem:[#allocation2 + $0x38] sm:$0xff]
    %v54 = vld [vmem:[#allocation2 + $0x40] sm:$0xff]
    %v55 = vld [vmem:[#allocation2 + $0x48] sm:$0xff]
    %v56 = vld [vmem:[#allocation2 + $0x50] sm:$0xff]
    %v57 = vld [vmem:[#allocation2 + $0x58] sm:$0xff]
    %v58 = vld [vmem:[#allocation2 + $0x60] sm:$0xff]
    %v59 = vld [vmem:[#allocation2 + $0x68] sm:$0xff]
    %v60 = vld [vmem:[#allocation2 + $0x70] sm:$0xff]
    %v61 = vld [vmem:[#allocation2 + $0x78] sm:$0xff]
    %v62 = vld [vmem:[#allocation2 + $0x80] sm:$0xff]
    %v63 = vld [vmem:[#allocation2 + $0x88] sm:$0xff]
    %v64 = vld [vmem:[#allocation2 + $0x90] sm:$0xff]
    %v65 = vld [vmem:[#allocation2 + $0x98] sm:$0xff]
    %v66 = vld [vmem:[#allocation2 + $0xa0] sm:$0xff]
    %v67 = vld [vmem:[#allocation2 + $0xa8] sm:$0xff]
    %v68 = vld [vmem:[#allocation2 + $0xb0] sm:$0xff]
    %v69 = vld [vmem:[#allocation2 + $0xb8] sm:$0xff]
    %v70 = vld [vmem:[#allocation2 + $0xc0] sm:$0xff]
    %v71 = vld [vmem:[#allocation2 + $0xc8] sm:$0xff]
    %v72 = vld [vmem:[#allocation2 + $0xd0] sm:$0xff]
    %v73 = vld [vmem:[#allocation2 + $0xd8] sm:$0xff]
    %v74 = vld [vmem:[#allocation2 + $0xe0] sm:$0xff]
    %v75 = vld [vmem:[#allocation2 + $0xe8] sm:$0xff]
    %v76 = vld [vmem:[#allocation2 + $0xf0] sm:$0xff]
    %v77 = vld [vmem:[#allocation2 + $0xf8] sm:$0xff]
    %v78 = vld [vmem:[#allocation2 + $0x100] sm:$0xff]
    %v79 = vld [vmem:[#allocation2 + $0x108] sm:$0xff]
    %v80 = vld [vmem:[#allocation2 + $0x110] sm:$0xff]
    %v81 = vld [vmem:[#allocation2 + $0x118] sm:$0xff]
    %v82 = vld [vmem:[#allocation2 + $0x120] sm:$0xff]
    %v83 = vld [vmem:[#allocation2 + $0x128] sm:$0xff]
    %v84 = vld [vmem:[#allocation2 + $0x130] sm:$0xff]
    %v85 = vld [vmem:[#allocation2 + $0x138] sm:$0xff]
    %v86 = vld [vmem:[#allocation2 + $0x140] sm:$0xff]
    %v87 = vld [vmem:[#allocation2 + $0x148] sm:$0xff]
    %v88 = vld [vmem:[#allocation2 + $0x150] sm:$0xff]
    %v89 = vld [vmem:[#allocation2 + $0x158] sm:$0xff]
    %v90 = vld [vmem:[#allocation2 + $0x160] sm:$0xff]
    %v91 = vld [vmem:[#allocation2 + $0x168] sm:$0xff]
    %v92 = vld [vmem:[#allocation2 + $0x170] sm:$0xff]
    %v93 = vld [vmem:[#allocation2 + $0x178] sm:$0xff]
    %v94 = vld [vmem:[#allocation2 + $0x180] sm:$0xff]
    %v95 = vld [vmem:[#allocation2 + $0x188] sm:$0xff]
    %v96 = vld [vmem:[#allocation2 + $0x190] sm:$0xff]
    %v97 = vld [vmem:[#allocation2 + $0x198] sm:$0xff]
    %v98 = vld [vmem:[#allocation2 + $0x1a0] sm:$0xff]
    %v99 = vld [vmem:[#allocation2 + $0x1a8] sm:$0xff]
    %v100 = vld [vmem:[#allocation2 + $0x1b0] sm:$0xff]
    %v101 = vld [vmem:[#allocation2 + $0x1b8] sm:$0xff]
    %v102 = vld [vmem:[#allocation2 + $0x1c0] sm:$0xff]
    %v103 = vld [vmem:[#allocation2 + $0x1c8] sm:$0xff]
    %v104 = vld [vmem:[#allocation2 + $0x1d0] sm:$0xff]
    %v105 = vld [vmem:[#allocation2 + $0x1d8] sm:$0xff]
    %v106 = vld [vmem:[#allocation2 + $0x1e0] sm:$0xff]
    %v107 = vld [vmem:[#allocation2 + $0x1e8] sm:$0xff]
    %v108 = vld [vmem:[#allocation2 + $0x1f0] sm:$0xff]
    %v109 = vld [vmem:[#allocation2 + $0x1f8] sm:$0xff]
    %v110 = vld [vmem:[#allocation2 + $0x200] sm:$0xff]
    %v111 = vld [vmem:[#allocation2 + $0x208] sm:$0xff]
    %v112 = vld [vmem:[#allocation2 + $0x210] sm:$0xff]
    %v113 = vld [vmem:[#allocation2 + $0x218] sm:$0xff]
    %v114 = vld [vmem:[#allocation2 + $0x220] sm:$0xff]
    %v115 = vld [vmem:[#allocation2 + $0x228] sm:$0xff]
    %v116 = vld [vmem:[#allocation2 + $0x230] sm:$0xff]
    %v117 = vld [vmem:[#allocation2 + $0x238] sm:$0xff]
    %v118 = vld [vmem:[#allocation2 + $0x240] sm:$0xff]
    %v119 = vld [vmem:[#allocation2 + $0x248] sm:$0xff]
    %v120 = vld [vmem:[#allocation2 + $0x250] sm:$0xff]
    %v121 = vld [vmem:[#allocation2 + $0x258] sm:$0xff]
    %v122 = vld [vmem:[#allocation2 + $0x260] sm:$0xff]
    %v123 = vld [vmem:[#allocation2 + $0x268] sm:$0xff]
    %v124 = vld [vmem:[#allocation2 + $0x270] sm:$0xff]
    %v125 = vld [vmem:[#allocation2 + $0x278] sm:$0xff]
    %v126 = vld [vmem:[#allocation2 + $0x280] sm:$0xff]
    %v127 = vld [vmem:[#allocation2 + $0x288] sm:$0xff]
    %v128 = vld [vmem:[#allocation2 + $0x290] sm:$0xff]
    %v129 = vld [vmem:[#allocation2 + $0x298] sm:$0xff]
    %v130 = vld [vmem:[#allocation2 + $0x2a0] sm:$0xff]
    %v131 = vld [vmem:[#allocation2 + $0x2a8] sm:$0xff]
    %v132 = vld [vmem:[#allocation2 + $0x2b0] sm:$0xff]
    %v133 = vld [vmem:[#allocation2 + $0x2b8] sm:$0xff]
    %v134 = vld [vmem:[#allocation2 + $0x2c0] sm:$0xff]
    %v135 = vld [vmem:[#allocation2 + $0x2c8] sm:$0xff]
    %v136 = vld [vmem:[#allocation2 + $0x2d0] sm:$0xff]
    %v137 = vld [vmem:[#allocation2 + $0x2d8] sm:$0xff]
    %v138 = vld [vmem:[#allocation2 + $0x2e0] sm:$0xff]
    %v139 = vld [vmem:[#allocation2 + $0x2e8] sm:$0xff]
    %v140 = vld [vmem:[#allocation2 + $0x2f0] sm:$0xff]
    %v141 = vld [vmem:[#allocation2 + $0x2f8] sm:$0xff]
    %v142 = vld [vmem:[#allocation2 + $0x300] sm:$0xff]
    %v143 = vld [vmem:[#allocation2 + $0x308] sm:$0xff]
    %v144 = vld [vmem:[#allocation2 + $0x310] sm:$0xff]
    %v145 = vld [vmem:[#allocation2 + $0x318] sm:$0xff]
    %v146 = vld [vmem:[#allocation2 + $0x320] sm:$0xff]
    %v147 = vld [vmem:[#allocation2 + $0x328] sm:$0xff]
    %v148 = vld [vmem:[#allocation2 + $0x330] sm:$0xff]
    %v149 = vld [vmem:[#allocation2 + $0x338] sm:$0xff]
    %v150 = vld [vmem:[#allocation2 + $0x340] sm:$0xff]
    %v151 = vld [vmem:[#allocation2 + $0x348] sm:$0xff]
    %v152 = vld [vmem:[#allocation2 + $0x350] sm:$0xff]
    %v153 = vld [vmem:[#allocation2 + $0x358] sm:$0xff]
    %v154 = vld [vmem:[#allocation2 + $0x360] sm:$0xff]
    %v155 = vld [vmem:[#allocation2 + $0x368] sm:$0xff]
    %v156 = vld [vmem:[#allocation2 + $0x370] sm:$0xff]
    %v157 = vld [vmem:[#allocation2 + $0x378] sm:$0xff]
    %v158 = vld [vmem:[#allocation2 + $0x380] sm:$0xff]
    %v159 = vld [vmem:[#allocation2 + $0x388] sm:$0xff]
    %v160 = vld [vmem:[#allocation2 + $0x390] sm:$0xff]
    %v161 = vld [vmem:[#allocation2 + $0x398] sm:$0xff]
    %v162 = vld [vmem:[#allocation2 + $0x3a0] sm:$0xff]
    %v163 = vld [vmem:[#allocation2 + $0x3a8] sm:$0xff]
    %v164 = vld [vmem:[#allocation2 + $0x3b0] sm:$0xff]
    %v165 = vld [vmem:[#allocation2 + $0x3b8] sm:$0xff]
    %v166 = vld [vmem:[#allocation2 + $0x3c0] sm:$0xff]
    %v167 = vld [vmem:[#allocation2 + $0x3c8] sm:$0xff]
    %v168 = vld [vmem:[#allocation2 + $0x3d0] sm:$0xff]
    %v169 = vld [vmem:[#allocation2 + $0x3d8] sm:$0xff]
    %v170 = vld [vmem:[#allocation2 + $0x3e0] sm:$0xff]
    %v171 = vld [vmem:[#allocation2 + $0x3e8] sm:$0xff]
    %v172 = vld [vmem:[#allocation2 + $0x3f0] sm:$0xff]
    %v173 = vld [vmem:[#allocation2 + $0x3f8] sm:$0xff]
    %v174 = vld [vmem:[#allocation2 + $0x400] sm:$0xff]
    %v175 = vld [vmem:[#allocation2 + $0x408] sm:$0xff]
    %v176 = vld [vmem:[#allocation2 + $0x410] sm:$0xff]
    %v177 = vld [vmem:[#allocation2 + $0x418] sm:$0xff]
    %v178 = vld [vmem:[#allocation2 + $0x420] sm:$0xff]
    %v179 = vld [vmem:[#allocation2 + $0x428] sm:$0xff]
    %v180 = vld [vmem:[#allocation2 + $0x430] sm:$0xff]
    %v181 = vld [vmem:[#allocation2 + $0x438] sm:$0xff]
    %v182 = vld [vmem:[#allocation2 + $0x440] sm:$0xff]
    %v183 = vld [vmem:[#allocation2 + $0x448] sm:$0xff]
    %v184 = vld [vmem:[#allocation2 + $0x450] sm:$0xff]
    %v185 = vld [vmem:[#allocation2 + $0x458] sm:$0xff]
    %v186 = vld [vmem:[#allocation2 + $0x460] sm:$0xff]
    %v187 = vld [vmem:[#allocation2 + $0x468] sm:$0xff]
    %v188 = vld [vmem:[#allocation2 + $0x470] sm:$0xff]
    %v189 = vld [vmem:[#allocation2 + $0x478] sm:$0xff]
    %v190 = vld [vmem:[#allocation4] ss:$8 sm:$0xf]
    %v192 = vlaneseq
    %v193 = vshrl.u32 %v192, 7
    %v194 = vsub.s32 0, %v193
    %v195 = vrot.slane %v190, %v194
    %v196 = vlaneseq
    %v197 = vshrl.u32 %v196, 7
    %v198 = vsub.s32 1, %v197
    %v199 = vrot.slane %v190, %v198
    %v200 = vlaneseq
    %v201 = vshrl.u32 %v200, 7
    %v202 = vsub.s32 2, %v201
    %v203 = vrot.slane %v190, %v202
    %v204 = vlaneseq
    %v205 = vshrl.u32 %v204, 7
    %v206 = vsub.s32 3, %v205
    %v207 = vrot.slane %v190, %v206
    %v215 = vunpack.c.l.b16 %v43
    %v216 = vunpack.c.h.b16 %v43
    %v217 = vunpack.c.l.b16 %v44
    %v218 = vunpack.c.h.b16 %v44
    %v219 = vunpack.c.l.b16 %v45
    %v220 = vpack.c.b16 %v215, %v215
    %v221 = vpack.c.b16 %v216, %v216
    %v222 = vpack.c.b16 %v217, %v217
    %v223 = vpack.c.b16 %v218, %v218
    %v224 = vpack.c.b16 %v219, %v219
    %v373 = vunpack.c.l.b16 %v46
    %v374 = vunpack.c.h.b16 %v46
    %v375 = vunpack.c.l.b16 %v47
    %v376 = vunpack.c.h.b16 %v47
    %v377 = vunpack.c.l.b16 %v48
    %v378 = vunpack.c.h.b16 %v48
    %v379 = vunpack.c.l.b16 %v49
    %v380 = vunpack.c.h.b16 %v49
    %v381 = vunpack.c.l.b16 %v50
    %v382 = vunpack.c.h.b16 %v50
    %v383 = vunpack.c.l.b16 %v51
    %v384 = vunpack.c.h.b16 %v51
    %v385 = vunpack.c.l.b16 %v52
    %v386 = vunpack.c.h.b16 %v52
    %v387 = vunpack.c.l.b16 %v53
    %v388 = vunpack.c.h.b16 %v53
    %v389 = vunpack.c.l.b16 %v54
    %v390 = vunpack.c.h.b16 %v54
    %v391 = vunpack.c.l.b16 %v55
    %v392 = vunpack.c.h.b16 %v55
    %v393 = vunpack.c.l.b16 %v56
    %v394 = vunpack.c.h.b16 %v56
    %v395 = vunpack.c.l.b16 %v57
    %v396 = vunpack.c.h.b16 %v57
    %v397 = vunpack.c.l.b16 %v58
    %v398 = vunpack.c.h.b16 %v58
    %v399 = vunpack.c.l.b16 %v59
    %v400 = vunpack.c.h.b16 %v59
    %v401 = vunpack.c.l.b16 %v60
    %v402 = vunpack.c.h.b16 %v60
    %v403 = vunpack.c.l.b16 %v61
    %v404 = vunpack.c.h.b16 %v61
    %v405 = vunpack.c.l.b16 %v62
    %v406 = vunpack.c.h.b16 %v62
    %v407 = vunpack.c.l.b16 %v63
    %v408 = vunpack.c.h.b16 %v63
    %v409 = vunpack.c.l.b16 %v64
    %v410 = vunpack.c.h.b16 %v64
    %v411 = vunpack.c.l.b16 %v65
    %v412 = vunpack.c.h.b16 %v65
    %v413 = vunpack.c.l.b16 %v66
    %v414 = vunpack.c.h.b16 %v66
    %v415 = vunpack.c.l.b16 %v67
    %v416 = vunpack.c.h.b16 %v67
    %v417 = vunpack.c.l.b16 %v68
    %v418 = vunpack.c.h.b16 %v68
    %v419 = vunpack.c.l.b16 %v69
    %v420 = vunpack.c.h.b16 %v69
    %v421 = vunpack.c.l.b16 %v70
    %v422 = vunpack.c.h.b16 %v70
    %v423 = vunpack.c.l.b16 %v71
    %v424 = vunpack.c.h.b16 %v71
    %v425 = vunpack.c.l.b16 %v72
    %v426 = vunpack.c.h.b16 %v72
    %v427 = vunpack.c.l.b16 %v73
    %v428 = vunpack.c.h.b16 %v73
    %v429 = vunpack.c.l.b16 %v74
    %v430 = vunpack.c.h.b16 %v74
    %v431 = vunpack.c.l.b16 %v75
    %v432 = vunpack.c.h.b16 %v75
    %v433 = vunpack.c.l.b16 %v76
    %v434 = vunpack.c.h.b16 %v76
    %v435 = vunpack.c.l.b16 %v77
    %v436 = vunpack.c.h.b16 %v77
    %v437 = vunpack.c.l.b16 %v78
    %v438 = vunpack.c.h.b16 %v78
    %v439 = vunpack.c.l.b16 %v79
    %v440 = vunpack.c.h.b16 %v79
    %v441 = vunpack.c.l.b16 %v80
    %v442 = vunpack.c.h.b16 %v80
    %v443 = vunpack.c.l.b16 %v81
    %v444 = vunpack.c.h.b16 %v81
    %v445 = vunpack.c.l.b16 %v82
    %v446 = vunpack.c.h.b16 %v82
    %v447 = vunpack.c.l.b16 %v83
    %v448 = vunpack.c.h.b16 %v83
    %v449 = vunpack.c.l.b16 %v84
    %v450 = vunpack.c.h.b16 %v84
    %v451 = vunpack.c.l.b16 %v85
    %v452 = vunpack.c.h.b16 %v85
    %v453 = vunpack.c.l.b16 %v86
    %v454 = vunpack.c.h.b16 %v86
    %v455 = vunpack.c.l.b16 %v87
    %v456 = vunpack.c.h.b16 %v87
    %v457 = vunpack.c.l.b16 %v88
    %v458 = vunpack.c.h.b16 %v88
    %v459 = vunpack.c.l.b16 %v89
    %v460 = vunpack.c.h.b16 %v89
    %v461 = vunpack.c.l.b16 %v90
    %v462 = vunpack.c.h.b16 %v90
    %v463 = vunpack.c.l.b16 %v91
    %v464 = vunpack.c.h.b16 %v91
    %v465 = vunpack.c.l.b16 %v92
    %v466 = vunpack.c.h.b16 %v92
    %v467 = vunpack.c.l.b16 %v93
    %v468 = vunpack.c.h.b16 %v93
    %v469 = vunpack.c.l.b16 %v94
    %v470 = vunpack.c.h.b16 %v94
    %v471 = vunpack.c.l.b16 %v95
    %v472 = vunpack.c.h.b16 %v95
    %v473 = vunpack.c.l.b16 %v96
    %v474 = vunpack.c.h.b16 %v96
    %v475 = vunpack.c.l.b16 %v97
    %v476 = vunpack.c.h.b16 %v97
    %v477 = vunpack.c.l.b16 %v98
    %v478 = vunpack.c.h.b16 %v98
    %v479 = vunpack.c.l.b16 %v99
    %v480 = vunpack.c.h.b16 %v99
    %v481 = vunpack.c.l.b16 %v100
    %v482 = vunpack.c.h.b16 %v100
    %v483 = vunpack.c.l.b16 %v101
    %v484 = vunpack.c.h.b16 %v101
    %v485 = vunpack.c.l.b16 %v102
    %v486 = vunpack.c.h.b16 %v102
    %v487 = vunpack.c.l.b16 %v103
    %v488 = vunpack.c.h.b16 %v103
    %v489 = vunpack.c.l.b16 %v104
    %v490 = vunpack.c.h.b16 %v104
    %v491 = vunpack.c.l.b16 %v105
    %v492 = vunpack.c.h.b16 %v105
    %v493 = vunpack.c.l.b16 %v106
    %v494 = vunpack.c.h.b16 %v106
    %v495 = vunpack.c.l.b16 %v107
    %v496 = vunpack.c.h.b16 %v107
    %v497 = vunpack.c.l.b16 %v108
    %v498 = vunpack.c.h.b16 %v108
    %v499 = vunpack.c.l.b16 %v109
    %v500 = vunpack.c.h.b16 %v109
    %v501 = vunpack.c.l.b16 %v110
    %v502 = vunpack.c.h.b16 %v110
    %v503 = vunpack.c.l.b16 %v111
    %v504 = vunpack.c.h.b16 %v111
    %v505 = vunpack.c.l.b16 %v112
    %v506 = vunpack.c.h.b16 %v112
    %v507 = vunpack.c.l.b16 %v113
    %v508 = vunpack.c.h.b16 %v113
    %v509 = vunpack.c.l.b16 %v114
    %v510 = vunpack.c.h.b16 %v114
    %v511 = vunpack.c.l.b16 %v115
    %v512 = vunpack.c.h.b16 %v115
    %v513 = vunpack.c.l.b16 %v116
    %v514 = vunpack.c.h.b16 %v116
    %v515 = vunpack.c.l.b16 %v117
    %v516 = vunpack.c.h.b16 %v117
    %v517 = vunpack.c.l.b16 %v118
    %v518 = vunpack.c.h.b16 %v118
    %v519 = vunpack.c.l.b16 %v119
    %v520 = vunpack.c.h.b16 %v119
    %v521 = vunpack.c.l.b16 %v120
    %v522 = vunpack.c.h.b16 %v120
    %v523 = vunpack.c.l.b16 %v121
    %v524 = vunpack.c.h.b16 %v121
    %v525 = vunpack.c.l.b16 %v122
    %v526 = vunpack.c.h.b16 %v122
    %v527 = vunpack.c.l.b16 %v123
    %v528 = vunpack.c.h.b16 %v123
    %v529 = vunpack.c.l.b16 %v124
    %v530 = vunpack.c.h.b16 %v124
    %v531 = vunpack.c.l.b16 %v125
    %v532 = vunpack.c.h.b16 %v125
    %v533 = vunpack.c.l.b16 %v126
    %v534 = vunpack.c.h.b16 %v126
    %v535 = vunpack.c.l.b16 %v127
    %v536 = vunpack.c.h.b16 %v127
    %v537 = vunpack.c.l.b16 %v128
    %v538 = vunpack.c.h.b16 %v128
    %v539 = vunpack.c.l.b16 %v129
    %v540 = vunpack.c.h.b16 %v129
    %v541 = vunpack.c.l.b16 %v130
    %v542 = vunpack.c.h.b16 %v130
    %v543 = vunpack.c.l.b16 %v131
    %v544 = vunpack.c.h.b16 %v131
    %v545 = vunpack.c.l.b16 %v132
    %v546 = vunpack.c.h.b16 %v132
    %v547 = vunpack.c.l.b16 %v133
    %v548 = vunpack.c.h.b16 %v133
    %v549 = vunpack.c.l.b16 %v134
    %v550 = vunpack.c.h.b16 %v134
    %v551 = vunpack.c.l.b16 %v135
    %v552 = vunpack.c.h.b16 %v135
    %v553 = vunpack.c.l.b16 %v136
    %v554 = vunpack.c.h.b16 %v136
    %v555 = vunpack.c.l.b16 %v137
    %v556 = vunpack.c.h.b16 %v137
    %v557 = vunpack.c.l.b16 %v138
    %v558 = vunpack.c.h.b16 %v138
    %v559 = vunpack.c.l.b16 %v139
    %v560 = vunpack.c.h.b16 %v139
    %v561 = vunpack.c.l.b16 %v140
    %v562 = vunpack.c.h.b16 %v140
    %v563 = vunpack.c.l.b16 %v141
    %v564 = vunpack.c.h.b16 %v141
    %v565 = vunpack.c.l.b16 %v142
    %v566 = vunpack.c.h.b16 %v142
    %v567 = vunpack.c.l.b16 %v143
    %v568 = vunpack.c.h.b16 %v143
    %v569 = vunpack.c.l.b16 %v144
    %v570 = vunpack.c.h.b16 %v144
    %v571 = vunpack.c.l.b16 %v145
    %v572 = vunpack.c.h.b16 %v145
    %v573 = vunpack.c.l.b16 %v146
    %v574 = vunpack.c.h.b16 %v146
    %v575 = vunpack.c.l.b16 %v147
    %v576 = vunpack.c.h.b16 %v147
    %v577 = vunpack.c.l.b16 %v148
    %v578 = vunpack.c.h.b16 %v148
    %v579 = vunpack.c.l.b16 %v149
    %v580 = vunpack.c.h.b16 %v149
    %v581 = vunpack.c.l.b16 %v150
    %v582 = vunpack.c.h.b16 %v150
    %v583 = vunpack.c.l.b16 %v151
    %v584 = vunpack.c.h.b16 %v151
    %v585 = vunpack.c.l.b16 %v152
    %v586 = vunpack.c.h.b16 %v152
    %v587 = vunpack.c.l.b16 %v153
    %v588 = vunpack.c.h.b16 %v153
    %v589 = vunpack.c.l.b16 %v154
    %v590 = vunpack.c.h.b16 %v154
    %v591 = vunpack.c.l.b16 %v155
    %v592 = vunpack.c.h.b16 %v155
    %v593 = vunpack.c.l.b16 %v156
    %v594 = vunpack.c.h.b16 %v156
    %v595 = vunpack.c.l.b16 %v157
    %v596 = vunpack.c.h.b16 %v157
    %v597 = vunpack.c.l.b16 %v158
    %v598 = vunpack.c.h.b16 %v158
    %v599 = vunpack.c.l.b16 %v159
    %v600 = vunpack.c.h.b16 %v159
    %v601 = vunpack.c.l.b16 %v160
    %v602 = vunpack.c.h.b16 %v160
    %v603 = vunpack.c.l.b16 %v161
    %v604 = vunpack.c.h.b16 %v161
    %v605 = vunpack.c.l.b16 %v162
    %v606 = vunpack.c.h.b16 %v162
    %v607 = vunpack.c.l.b16 %v163
    %v608 = vunpack.c.h.b16 %v163
    %v609 = vunpack.c.l.b16 %v164
    %v610 = vunpack.c.h.b16 %v164
    %v611 = vunpack.c.l.b16 %v165
    %v612 = vunpack.c.h.b16 %v165
    %v613 = vunpack.c.l.b16 %v166
    %v614 = vunpack.c.h.b16 %v166
    %v615 = vunpack.c.l.b16 %v167
    %v616 = vunpack.c.h.b16 %v167
    %v617 = vunpack.c.l.b16 %v168
    %v618 = vunpack.c.h.b16 %v168
    %v619 = vunpack.c.l.b16 %v169
    %v620 = vunpack.c.h.b16 %v169
    %v621 = vunpack.c.l.b16 %v170
    %v622 = vunpack.c.h.b16 %v170
    %v623 = vunpack.c.l.b16 %v171
    %v624 = vunpack.c.h.b16 %v171
    %v625 = vunpack.c.l.b16 %v172
    %v626 = vunpack.c.h.b16 %v172
    %v627 = vunpack.c.l.b16 %v173
    %v628 = vunpack.c.h.b16 %v173
    %v629 = vunpack.c.l.b16 %v174
    %v630 = vunpack.c.h.b16 %v174
    %v631 = vunpack.c.l.b16 %v175
    %v632 = vunpack.c.h.b16 %v175
    %v633 = vunpack.c.l.b16 %v176
    %v634 = vunpack.c.h.b16 %v176
    %v635 = vunpack.c.l.b16 %v177
    %v636 = vunpack.c.h.b16 %v177
    %v637 = vunpack.c.l.b16 %v178
    %v638 = vunpack.c.h.b16 %v178
    %v639 = vunpack.c.l.b16 %v179
    %v640 = vunpack.c.h.b16 %v179
    %v641 = vunpack.c.l.b16 %v180
    %v642 = vunpack.c.h.b16 %v180
    %v643 = vunpack.c.l.b16 %v181
    %v644 = vunpack.c.h.b16 %v181
    %v645 = vunpack.c.l.b16 %v182
    %v646 = vunpack.c.h.b16 %v182
    %v647 = vunpack.c.l.b16 %v183
    %v648 = vunpack.c.h.b16 %v183
    %v649 = vunpack.c.l.b16 %v184
    %v650 = vunpack.c.h.b16 %v184
    %v651 = vunpack.c.l.b16 %v185
    %v652 = vunpack.c.h.b16 %v185
    %v653 = vunpack.c.l.b16 %v186
    %v654 = vunpack.c.h.b16 %v186
    %v655 = vunpack.c.l.b16 %v187
    %v656 = vunpack.c.h.b16 %v187
    %v657 = vunpack.c.l.b16 %v188
    %v658 = vunpack.c.h.b16 %v188
    %v659 = vunpack.c.l.b16 %v189
    %v660 = vunpack.c.h.b16 %v189
    %v661 = vpack.c.b16 %v377, %v373
    %v662 = vpack.c.b16 %v378, %v374
    %v663 = vpack.c.b16 %v379, %v375
    %v664 = vpack.c.b16 %v380, %v376
    %v665 = vpack.c.b16 %v385, %v381
    %v666 = vpack.c.b16 %v386, %v382
    %v667 = vpack.c.b16 %v387, %v383
    %v668 = vpack.c.b16 %v388, %v384
    %v669 = vpack.c.b16 %v393, %v389
    %v670 = vpack.c.b16 %v394, %v390
    %v671 = vpack.c.b16 %v395, %v391
    %v672 = vpack.c.b16 %v396, %v392
    %v673 = vpack.c.b16 %v401, %v397
    %v674 = vpack.c.b16 %v402, %v398
    %v675 = vpack.c.b16 %v403, %v399
    %v676 = vpack.c.b16 %v404, %v400
    %v677 = vpack.c.b16 %v409, %v405
    %v678 = vpack.c.b16 %v410, %v406
    %v679 = vpack.c.b16 %v411, %v407
    %v680 = vpack.c.b16 %v412, %v408
    %v681 = vpack.c.b16 %v417, %v413
    %v682 = vpack.c.b16 %v418, %v414
    %v683 = vpack.c.b16 %v419, %v415
    %v684 = vpack.c.b16 %v420, %v416
    %v685 = vpack.c.b16 %v425, %v421
    %v686 = vpack.c.b16 %v426, %v422
    %v687 = vpack.c.b16 %v427, %v423
    %v688 = vpack.c.b16 %v428, %v424
    %v689 = vpack.c.b16 %v433, %v429
    %v690 = vpack.c.b16 %v434, %v430
    %v691 = vpack.c.b16 %v435, %v431
    %v692 = vpack.c.b16 %v436, %v432
    %v693 = vpack.c.b16 %v441, %v437
    %v694 = vpack.c.b16 %v442, %v438
    %v695 = vpack.c.b16 %v443, %v439
    %v696 = vpack.c.b16 %v444, %v440
    %v697 = vpack.c.b16 %v449, %v445
    %v698 = vpack.c.b16 %v450, %v446
    %v699 = vpack.c.b16 %v451, %v447
    %v700 = vpack.c.b16 %v452, %v448
    %v701 = vpack.c.b16 %v457, %v453
    %v702 = vpack.c.b16 %v458, %v454
    %v703 = vpack.c.b16 %v459, %v455
    %v704 = vpack.c.b16 %v460, %v456
    %v705 = vpack.c.b16 %v465, %v461
    %v706 = vpack.c.b16 %v466, %v462
    %v707 = vpack.c.b16 %v467, %v463
    %v708 = vpack.c.b16 %v468, %v464
    %v709 = vpack.c.b16 %v473, %v469
    %v710 = vpack.c.b16 %v474, %v470
    %v711 = vpack.c.b16 %v475, %v471
    %v712 = vpack.c.b16 %v476, %v472
    %v713 = vpack.c.b16 %v481, %v477
    %v714 = vpack.c.b16 %v482, %v478
    %v715 = vpack.c.b16 %v483, %v479
    %v716 = vpack.c.b16 %v484, %v480
    %v717 = vpack.c.b16 %v489, %v485
    %v718 = vpack.c.b16 %v490, %v486
    %v719 = vpack.c.b16 %v491, %v487
    %v720 = vpack.c.b16 %v492, %v488
    %v721 = vpack.c.b16 %v497, %v493
    %v722 = vpack.c.b16 %v498, %v494
    %v723 = vpack.c.b16 %v499, %v495
    %v724 = vpack.c.b16 %v500, %v496
    %v725 = vpack.c.b16 %v505, %v501
    %v726 = vpack.c.b16 %v506, %v502
    %v727 = vpack.c.b16 %v507, %v503
    %v728 = vpack.c.b16 %v508, %v504
    %v729 = vpack.c.b16 %v513, %v509
    %v730 = vpack.c.b16 %v514, %v510
    %v731 = vpack.c.b16 %v515, %v511
    %v732 = vpack.c.b16 %v516, %v512
    %v733 = vpack.c.b16 %v521, %v517
    %v734 = vpack.c.b16 %v522, %v518
    %v735 = vpack.c.b16 %v523, %v519
    %v736 = vpack.c.b16 %v524, %v520
    %v737 = vpack.c.b16 %v529, %v525
    %v738 = vpack.c.b16 %v530, %v526
    %v739 = vpack.c.b16 %v531, %v527
    %v740 = vpack.c.b16 %v532, %v528
    %v741 = vpack.c.b16 %v537, %v533
    %v742 = vpack.c.b16 %v538, %v534
    %v743 = vpack.c.b16 %v539, %v535
    %v744 = vpack.c.b16 %v540, %v536
    %v745 = vpack.c.b16 %v545, %v541
    %v746 = vpack.c.b16 %v546, %v542
    %v747 = vpack.c.b16 %v547, %v543
    %v748 = vpack.c.b16 %v548, %v544
    %v749 = vpack.c.b16 %v553, %v549
    %v750 = vpack.c.b16 %v554, %v550
    %v751 = vpack.c.b16 %v555, %v551
    %v752 = vpack.c.b16 %v556, %v552
    %v753 = vpack.c.b16 %v561, %v557
    %v754 = vpack.c.b16 %v562, %v558
    %v755 = vpack.c.b16 %v563, %v559
    %v756 = vpack.c.b16 %v564, %v560
    %v757 = vpack.c.b16 %v569, %v565
    %v758 = vpack.c.b16 %v570, %v566
    %v759 = vpack.c.b16 %v571, %v567
    %v760 = vpack.c.b16 %v572, %v568
    %v761 = vpack.c.b16 %v577, %v573
    %v762 = vpack.c.b16 %v578, %v574
    %v763 = vpack.c.b16 %v579, %v575
    %v764 = vpack.c.b16 %v580, %v576
    %v765 = vpack.c.b16 %v585, %v581
    %v766 = vpack.c.b16 %v586, %v582
    %v767 = vpack.c.b16 %v587, %v583
    %v768 = vpack.c.b16 %v588, %v584
    %v769 = vpack.c.b16 %v593, %v589
    %v770 = vpack.c.b16 %v594, %v590
    %v771 = vpack.c.b16 %v595, %v591
    %v772 = vpack.c.b16 %v596, %v592
    %v773 = vpack.c.b16 %v601, %v597
    %v774 = vpack.c.b16 %v602, %v598
    %v775 = vpack.c.b16 %v603, %v599
    %v776 = vpack.c.b16 %v604, %v600
    %v777 = vpack.c.b16 %v609, %v605
    %v778 = vpack.c.b16 %v610, %v606
    %v779 = vpack.c.b16 %v611, %v607
    %v780 = vpack.c.b16 %v612, %v608
    %v781 = vpack.c.b16 %v617, %v613
    %v782 = vpack.c.b16 %v618, %v614
    %v783 = vpack.c.b16 %v619, %v615
    %v784 = vpack.c.b16 %v620, %v616
    %v785 = vpack.c.b16 %v625, %v621
    %v786 = vpack.c.b16 %v626, %v622
    %v787 = vpack.c.b16 %v627, %v623
    %v788 = vpack.c.b16 %v628, %v624
    %v789 = vpack.c.b16 %v633, %v629
    %v790 = vpack.c.b16 %v634, %v630
    %v791 = vpack.c.b16 %v635, %v631
    %v792 = vpack.c.b16 %v636, %v632
    %v793 = vpack.c.b16 %v641, %v637
    %v794 = vpack.c.b16 %v642, %v638
    %v795 = vpack.c.b16 %v643, %v639
    %v796 = vpack.c.b16 %v644, %v640
    %v797 = vpack.c.b16 %v649, %v645
    %v798 = vpack.c.b16 %v650, %v646
    %v799 = vpack.c.b16 %v651, %v647
    %v800 = vpack.c.b16 %v652, %v648
    %v801 = vpack.c.b16 %v657, %v653
    %v802 = vpack.c.b16 %v658, %v654
    %v803 = vpack.c.b16 %v659, %v655
    %v804 = vpack.c.b16 %v660, %v656
    %vm949 = vcmask 523264
    %v951 = vsel %vm949, %v224, 0
    %953 = vmatprep.subr.bf16.mxu0 %v662
    %954 = vmatpush1.bf16.msra.mxu0 %v661
    %955 = vmatprep.subr.bf16.mxu0 %v666
    %956 = vmatpush1.bf16.msra.mxu0 %v665
    %957 = vmatprep.subr.bf16.mxu0 %v670
    %958 = vmatpush1.bf16.msra.mxu0 %v669
    %959 = vmatprep.subr.bf16.mxu0 %v674
    %960 = vmatpush1.bf16.msra.mxu0 %v673
    %961 = vmatprep.subr.bf16.mxu0 %v678
    %962 = vmatpush1.bf16.msra.mxu0 %v677
    %963 = vmatprep.subr.bf16.mxu0 %v682
    %964 = vmatpush1.bf16.msra.mxu0 %v681
    %965 = vmatprep.subr.bf16.mxu0 %v686
    %966 = vmatpush1.bf16.msra.mxu0 %v685
    %967 = vmatprep.subr.bf16.mxu0 %v690
    %968 = vmatpush1.bf16.msra.mxu0 %v689
    %969 = vmatprep.subr.bf16.mxu0 %v694
    %970 = vmatpush1.bf16.msra.mxu0 %v693
    %971 = vmatprep.subr.bf16.mxu0 %v698
    %972 = vmatpush1.bf16.msra.mxu0 %v697
    %973 = vmatprep.subr.bf16.mxu0 %v702
    %974 = vmatpush1.bf16.msra.mxu0 %v701
    %975 = vmatprep.subr.bf16.mxu0 %v706
    %976 = vmatpush1.bf16.msra.mxu0 %v705
    %977 = vmatprep.subr.bf16.mxu0 %v710
    %978 = vmatpush1.bf16.msra.mxu0 %v709
    %979 = vmatprep.subr.bf16.mxu0 %v714
    %980 = vmatpush1.bf16.msra.mxu0 %v713
    %981 = vmatprep.subr.bf16.mxu0 %v718
    %982 = vmatpush1.bf16.msra.mxu0 %v717
    %983 = vmatprep.subr.bf16.mxu0 %v722
    %984 = vmatpush1.bf16.msra.mxu0 %v721
    %985 = vmatprep.mubr.bf16.mxu0 %v221
    %986 = vmatmul.mubr.bf16.gmra.mrb[0].mxu0 %v220
    %v987 = vpop.f32.mrb[0].mxu0
    %v988 = vadd.f32 %v195, %v987
    %v989 = vpop.f32.mrb[0].mxu0
    %v990 = vadd.f32 %v199, %v989
    %v991 = vpop.f32.mrb[0].mxu0
    %v992 = vpop.f32.mrb[0].mxu0
    %993 = vdwg.mxu0
    %994 = vmatprep.subr.bf16.mxu0 %v726
    %995 = vmatpush1.bf16.msra.mxu0 %v725
    %996 = vmatprep.subr.bf16.mxu0 %v730
    %997 = vmatpush1.bf16.msra.mxu0 %v729
    %998 = vmatprep.subr.bf16.mxu0 %v734
    %999 = vmatpush1.bf16.msra.mxu0 %v733
    %1000 = vmatprep.subr.bf16.mxu0 %v738
    %1001 = vmatpush1.bf16.msra.mxu0 %v737
    %1002 = vmatprep.subr.bf16.mxu0 %v742
    %1003 = vmatpush1.bf16.msra.mxu0 %v741
    %1004 = vmatprep.subr.bf16.mxu0 %v746
    %1005 = vmatpush1.bf16.msra.mxu0 %v745
    %1006 = vmatprep.subr.bf16.mxu0 %v750
    %1007 = vmatpush1.bf16.msra.mxu0 %v749
    %1008 = vmatprep.subr.bf16.mxu0 %v754
    %1009 = vmatpush1.bf16.msra.mxu0 %v753
    %1010 = vmatprep.subr.bf16.mxu0 %v758
    %1011 = vmatpush1.bf16.msra.mxu0 %v757
    %1012 = vmatprep.subr.bf16.mxu0 %v762
    %1013 = vmatpush1.bf16.msra.mxu0 %v761
    %1014 = vmatprep.subr.bf16.mxu0 %v766
    %1015 = vmatpush1.bf16.msra.mxu0 %v765
    %1016 = vmatprep.subr.bf16.mxu0 %v770
    %1017 = vmatpush1.bf16.msra.mxu0 %v769
    %1018 = vmatprep.subr.bf16.mxu0 %v774
    %1019 = vmatpush1.bf16.msra.mxu0 %v773
    %1020 = vmatprep.subr.bf16.mxu0 %v778
    %1021 = vmatpush1.bf16.msra.mxu0 %v777
    %1022 = vmatprep.subr.bf16.mxu0 %v782
    %1023 = vmatpush1.bf16.msra.mxu0 %v781
    %1024 = vmatprep.subr.bf16.mxu0 %v786
    %1025 = vmatpush1.bf16.msra.mxu0 %v785
    %1026 = vmatprep.mubr.bf16.mxu0 %v223
    %1027 = vmatmul.mubr.bf16.gmra.mrb[0].mxu0 %v222
    %v1028 = vpop.f32.mrb[0].mxu0
    %v1029 = vadd.f32 %v988, %v1028
    %v1030 = vpop.f32.mrb[0].mxu0
    %v1031 = vadd.f32 %v990, %v1030
    %v1032 = vpop.f32.mrb[0].mxu0
    %v1033 = vpop.f32.mrb[0].mxu0
    %1034 = vdwg.mxu0
    %1035 = vmatprep.subr.bf16.mxu0 %v790
    %1036 = vmatpush1.bf16.msra.mxu0 %v789
    %1037 = vmatprep.subr.bf16.mxu0 %v794
    %1038 = vmatpush1.bf16.msra.mxu0 %v793
    %1039 = vmatprep.subr.bf16.mxu0 %v798
    %1040 = vmatpush1.bf16.msra.mxu0 %v797
    %1041 = vmatprep.subr.bf16.mxu0 %v802
    %1042 = vmatpush1.bf16.msra.mxu0 %v801
    %1043 = vmatprep.subr.bf16.mxu0 0
    %1044 = vmatpush1.bf16.msra.mxu0 0
    %1045 = vmatprep.subr.bf16.mxu0 0
    %1046 = vmatpush1.bf16.msra.mxu0 0
    %1047 = vmatprep.subr.bf16.mxu0 0
    %1048 = vmatpush1.bf16.msra.mxu0 0
    %1049 = vmatprep.subr.bf16.mxu0 0
    %1050 = vmatpush1.bf16.msra.mxu0 0
    %1051 = vmatprep.subr.bf16.mxu0 0
    %1052 = vmatpush1.bf16.msra.mxu0 0
    %1053 = vmatprep.subr.bf16.mxu0 0
    %1054 = vmatpush1.bf16.msra.mxu0 0
    %1055 = vmatprep.subr.bf16.mxu0 0
    %1056 = vmatpush1.bf16.msra.mxu0 0
    %1057 = vmatprep.subr.bf16.mxu0 0
    %1058 = vmatpush1.bf16.msra.mxu0 0
    %1059 = vmatprep.subr.bf16.mxu0 0
    %1060 = vmatpush1.bf16.msra.mxu0 0
    %1061 = vmatprep.subr.bf16.mxu0 0
    %1062 = vmatpush1.bf16.msra.mxu0 0
    %1063 = vmatprep.subr.bf16.mxu0 0
    %1064 = vmatpush1.bf16.msra.mxu0 0
    %1065 = vmatprep.subr.bf16.mxu0 0
    %1066 = vmatpush1.bf16.msra.mxu0 0
    %1067 = vmatprep.mubr.bf16.mxu0 0
    %1068 = vmatmul.mubr.bf16.gmra.mrb[0].mxu0 %v951
    %v1069 = vpop.f32.mrb[0].mxu0
    %v1070 = vadd.f32 %v1029, %v1069
    %v1071 = vpop.f32.mrb[0].mxu0
    %v1072 = vadd.f32 %v1031, %v1071
    %v1073 = vpop.f32.mrb[0].mxu0
    %v1074 = vpop.f32.mrb[0].mxu0
    %1075 = vdwg.mxu0
    %1076 = vmatprep.subr.bf16.mxu0 %v664
    %1077 = vmatpush1.bf16.msra.mxu0 %v663
    %1078 = vmatprep.subr.bf16.mxu0 %v668
    %1079 = vmatpush1.bf16.msra.mxu0 %v667
    %1080 = vmatprep.subr.bf16.mxu0 %v672
    %1081 = vmatpush1.bf16.msra.mxu0 %v671
    %1082 = vmatprep.subr.bf16.mxu0 %v676
    %1083 = vmatpush1.bf16.msra.mxu0 %v675
    %1084 = vmatprep.subr.bf16.mxu0 %v680
    %1085 = vmatpush1.bf16.msra.mxu0 %v679
    %1086 = vmatprep.subr.bf16.mxu0 %v684
    %1087 = vmatpush1.bf16.msra.mxu0 %v683
    %1088 = vmatprep.subr.bf16.mxu0 %v688
    %1089 = vmatpush1.bf16.msra.mxu0 %v687
    %1090 = vmatprep.subr.bf16.mxu0 %v692
    %1091 = vmatpush1.bf16.msra.mxu0 %v691
    %1092 = vmatprep.subr.bf16.mxu0 %v696
    %1093 = vmatpush1.bf16.msra.mxu0 %v695
    %1094 = vmatprep.subr.bf16.mxu0 %v700
    %1095 = vmatpush1.bf16.msra.mxu0 %v699
    %1096 = vmatprep.subr.bf16.mxu0 %v704
    %1097 = vmatpush1.bf16.msra.mxu0 %v703
    %1098 = vmatprep.subr.bf16.mxu0 %v708
    %1099 = vmatpush1.bf16.msra.mxu0 %v707
    %1100 = vmatprep.subr.bf16.mxu0 %v712
    %1101 = vmatpush1.bf16.msra.mxu0 %v711
    %1102 = vmatprep.subr.bf16.mxu0 %v716
    %1103 = vmatpush1.bf16.msra.mxu0 %v715
    %1104 = vmatprep.subr.bf16.mxu0 %v720
    %1105 = vmatpush1.bf16.msra.mxu0 %v719
    %1106 = vmatprep.subr.bf16.mxu0 %v724
    %1107 = vmatpush1.bf16.msra.mxu0 %v723
    %1108 = vmatprep.mubr.bf16.mxu0 %v221
    %1109 = vmatmul.mubr.bf16.gmra.mrb[0].mxu0 %v220
    %v1110 = vpop.f32.mrb[0].mxu0
    %v1111 = vadd.f32 %v203, %v1110
    %v1112 = vpop.f32.mrb[0].mxu0
    %v1113 = vadd.f32 %v207, %v1112
    %v1114 = vpop.f32.mrb[0].mxu0
    %v1115 = vpop.f32.mrb[0].mxu0
    %1116 = vdwg.mxu0
    %1117 = vmatprep.subr.bf16.mxu0 %v728
    %1118 = vmatpush1.bf16.msra.mxu0 %v727
    %1119 = vmatprep.subr.bf16.mxu0 %v732
    %1120 = vmatpush1.bf16.msra.mxu0 %v731
    %1121 = vmatprep.subr.bf16.mxu0 %v736
    %1122 = vmatpush1.bf16.msra.mxu0 %v735
    %1123 = vmatprep.subr.bf16.mxu0 %v740
    %1124 = vmatpush1.bf16.msra.mxu0 %v739
    %1125 = vmatprep.subr.bf16.mxu0 %v744
    %1126 = vmatpush1.bf16.msra.mxu0 %v743
    %1127 = vmatprep.subr.bf16.mxu0 %v748
    %1128 = vmatpush1.bf16.msra.mxu0 %v747
    %1129 = vmatprep.subr.bf16.mxu0 %v752
    %1130 = vmatpush1.bf16.msra.mxu0 %v751
    %1131 = vmatprep.subr.bf16.mxu0 %v756
    %1132 = vmatpush1.bf16.msra.mxu0 %v755
    %1133 = vmatprep.subr.bf16.mxu0 %v760
    %1134 = vmatpush1.bf16.msra.mxu0 %v759
    %1135 = vmatprep.subr.bf16.mxu0 %v764
    %1136 = vmatpush1.bf16.msra.mxu0 %v763
    %1137 = vmatprep.subr.bf16.mxu0 %v768
    %1138 = vmatpush1.bf16.msra.mxu0 %v767
    %1139 = vmatprep.subr.bf16.mxu0 %v772
    %1140 = vmatpush1.bf16.msra.mxu0 %v771
    %1141 = vmatprep.subr.bf16.mxu0 %v776
    %1142 = vmatpush1.bf16.msra.mxu0 %v775
    %1143 = vmatprep.subr.bf16.mxu0 %v780
    %1144 = vmatpush1.bf16.msra.mxu0 %v779
    %1145 = vmatprep.subr.bf16.mxu0 %v784
    %1146 = vmatpush1.bf16.msra.mxu0 %v783
    %1147 = vmatprep.subr.bf16.mxu0 %v788
    %1148 = vmatpush1.bf16.msra.mxu0 %v787
    %1149 = vmatprep.mubr.bf16.mxu0 %v223
    %1150 = vmatmul.mubr.bf16.gmra.mrb[0].mxu0 %v222
    %v1151 = vpop.f32.mrb[0].mxu0
    %v1152 = vadd.f32 %v1111, %v1151
    %v1153 = vpop.f32.mrb[0].mxu0
    %v1154 = vadd.f32 %v1113, %v1153
    %v1155 = vpop.f32.mrb[0].mxu0
    %v1156 = vpop.f32.mrb[0].mxu0
    %1157 = vdwg.mxu0
    %1158 = vmatprep.subr.bf16.mxu0 %v792
    %1159 = vmatpush1.bf16.msra.mxu0 %v791
    %1160 = vmatprep.subr.bf16.mxu0 %v796
    %1161 = vmatpush1.bf16.msra.mxu0 %v795
    %1162 = vmatprep.subr.bf16.mxu0 %v800
    %1163 = vmatpush1.bf16.msra.mxu0 %v799
    %1164 = vmatprep.subr.bf16.mxu0 %v804
    %1165 = vmatpush1.bf16.msra.mxu0 %v803
    %1166 = vmatprep.subr.bf16.mxu0 0
    %1167 = vmatpush1.bf16.msra.mxu0 0
    %1168 = vmatprep.subr.bf16.mxu0 0
    %1169 = vmatpush1.bf16.msra.mxu0 0
    %1170 = vmatprep.subr.bf16.mxu0 0
    %1171 = vmatpush1.bf16.msra.mxu0 0
    %1172 = vmatprep.subr.bf16.mxu0 0
    %1173 = vmatpush1.bf16.msra.mxu0 0
    %1174 = vmatprep.subr.bf16.mxu0 0
    %1175 = vmatpush1.bf16.msra.mxu0 0
    %1176 = vmatprep.subr.bf16.mxu0 0
    %1177 = vmatpush1.bf16.msra.mxu0 0
    %1178 = vmatprep.subr.bf16.mxu0 0
    %1179 = vmatpush1.bf16.msra.mxu0 0
    %1180 = vmatprep.subr.bf16.mxu0 0
    %1181 = vmatpush1.bf16.msra.mxu0 0
    %1182 = vmatprep.subr.bf16.mxu0 0
    %1183 = vmatpush1.bf16.msra.mxu0 0
    %1184 = vmatprep.subr.bf16.mxu0 0
    %1185 = vmatpush1.bf16.msra.mxu0 0
    %1186 = vmatprep.subr.bf16.mxu0 0
    %1187 = vmatpush1.bf16.msra.mxu0 0
    %1188 = vmatprep.subr.bf16.mxu0 0
    %1189 = vmatpush1.bf16.msra.mxu0 0
    %1190 = vmatprep.mubr.bf16.mxu0 0
    %1191 = vmatmul.mubr.bf16.gmra.mrb[0].mxu0 %v951
    %v1192 = vpop.f32.mrb[0].mxu0
    %v1193 = vadd.f32 %v1152, %v1192
    %v1194 = vpop.f32.mrb[0].mxu0
    %v1195 = vadd.f32 %v1154, %v1194
    %v1196 = vpop.f32.mrb[0].mxu0
    %v1197 = vpop.f32.mrb[0].mxu0
    %1198 = vdwg.mxu0
    %vm1199 = vcmp.gt.f32.partialorder %v1070, 0.0
    %vm1200 = vcmp.gt.f32.partialorder %v1072, 0.0
    %vm1201 = vcmp.gt.f32.partialorder %v1193, 0.0
    %vm1202 = vcmp.gt.f32.partialorder %v1195, 0.0
    %v1203 = vmul.f32 %v1070, 0.01
    %v1204 = vmul.f32 %v1072, 0.01
    %v1205 = vmul.f32 %v1193, 0.01
    %v1206 = vmul.f32 %v1195, 0.01
    %v1207 = vsel %vm1199, %v1070, %v1203
    %v1208 = vsel %vm1200, %v1072, %v1204
    %v1209 = vsel %vm1201, %v1193, %v1205
    %v1210 = vsel %vm1202, %v1195, %v1206
    %v1211 = vpack.c.bf16 %v1207, %v1207
    %v1212 = vpack.c.bf16 %v1208, %v1208
    %v1213 = vpack.c.bf16 %v1209, %v1209
    %v1214 = vpack.c.bf16 %v1210, %v1210
    %v1215 = vld [vmem:[#allocation2 + $0x480] sm:$0xff]
    %v1216 = vld [vmem:[#allocation2 + $0x488] sm:$0xff]
    %v1217 = vld [vmem:[#allocation2 + $0x490] sm:$0xff]
    %v1218 = vld [vmem:[#allocation2 + $0x498] sm:$0xff]
    %v1219 = vld [vmem:[#allocation2 + $0x4a0] sm:$0xff]
    %v1220 = vld [vmem:[#allocation2 + $0x4a8] sm:$0xff]
    %v1221 = vld [vmem:[#allocation2 + $0x4b0] sm:$0xff]
    %v1222 = vld [vmem:[#allocation2 + $0x4b8] sm:$0xff]
    %v1223 = vld [vmem:[#allocation2 + $0x4c0] sm:$0xff]
    %v1224 = vld [vmem:[#allocation2 + $0x4c8] sm:$0xff]
    %v1225 = vld [vmem:[#allocation2 + $0x4d0] sm:$0xff]
    %v1226 = vld [vmem:[#allocation2 + $0x4d8] sm:$0xff]
    %v1227 = vld [vmem:[#allocation2 + $0x4e0] sm:$0xff]
    %v1228 = vld [vmem:[#allocation2 + $0x4e8] sm:$0xff]
    %v1229 = vld [vmem:[#allocation2 + $0x4f0] sm:$0xff]
    %v1230 = vld [vmem:[#allocation2 + $0x4f8] sm:$0xff]
    %v1231 = vld [vmem:[#allocation2 + $0x500] sm:$0xff]
    %v1232 = vld [vmem:[#allocation2 + $0x508] sm:$0xff]
    %v1233 = vld [vmem:[#allocation2 + $0x510] sm:$0xff]
    %v1234 = vld [vmem:[#allocation2 + $0x518] sm:$0xff]
    %v1235 = vld [vmem:[#allocation2 + $0x520] sm:$0xff]
    %v1236 = vld [vmem:[#allocation2 + $0x528] sm:$0xff]
    %v1237 = vld [vmem:[#allocation2 + $0x530] sm:$0xff]
    %v1238 = vld [vmem:[#allocation2 + $0x538] sm:$0xff]
    %v1239 = vld [vmem:[#allocation2 + $0x540] sm:$0xff]
    %v1240 = vld [vmem:[#allocation2 + $0x548] sm:$0xff]
    %v1241 = vld [vmem:[#allocation2 + $0x550] sm:$0xff]
    %v1242 = vld [vmem:[#allocation2 + $0x558] sm:$0xff]
    %v1243 = vld [vmem:[#allocation2 + $0x560] sm:$0xff]
    %v1244 = vld [vmem:[#allocation2 + $0x568] sm:$0xff]
    %v1245 = vld [vmem:[#allocation2 + $0x570] sm:$0xff]
    %v1246 = vld [vmem:[#allocation2 + $0x578] sm:$0xff]
    %v1247 = vld [vmem:[#allocation2 + $0x580] sm:$0xff]
    %v1248 = vld [vmem:[#allocation2 + $0x588] sm:$0xff]
    %v1249 = vld [vmem:[#allocation2 + $0x590] sm:$0xff]
    %v1250 = vld [vmem:[#allocation2 + $0x598] sm:$0xff]
    %v1251 = vld [vmem:[#allocation2 + $0x5a0] sm:$0xff]
    %v1252 = vld [vmem:[#allocation2 + $0x5a8] sm:$0xff]
    %v1253 = vld [vmem:[#allocation2 + $0x5b0] sm:$0xff]
    %v1254 = vld [vmem:[#allocation2 + $0x5b8] sm:$0xff]
    %v1255 = vld [vmem:[#allocation2 + $0x5c0] sm:$0xff]
    %v1256 = vld [vmem:[#allocation2 + $0x5c8] sm:$0xff]
    %v1257 = vld [vmem:[#allocation2 + $0x5d0] sm:$0xff]
    %v1258 = vld [vmem:[#allocation2 + $0x5d8] sm:$0xff]
    %v1259 = vld [vmem:[#allocation2 + $0x5e0] sm:$0xff]
    %v1260 = vld [vmem:[#allocation2 + $0x5e8] sm:$0xff]
    %v1261 = vld [vmem:[#allocation2 + $0x5f0] sm:$0xff]
    %v1262 = vld [vmem:[#allocation2 + $0x5f8] sm:$0xff]
    %v1263 = vld [vmem:[#allocation2 + $0x600] sm:$0xff]
    %v1264 = vld [vmem:[#allocation2 + $0x608] sm:$0xff]
    %v1265 = vld [vmem:[#allocation2 + $0x610] sm:$0xff]
    %v1266 = vld [vmem:[#allocation2 + $0x618] sm:$0xff]
    %v1267 = vld [vmem:[#allocation2 + $0x620] sm:$0xff]
    %v1268 = vld [vmem:[#allocation2 + $0x628] sm:$0xff]
    %v1269 = vld [vmem:[#allocation2 + $0x630] sm:$0xff]
    %v1270 = vld [vmem:[#allocation2 + $0x638] sm:$0xff]
    %v1271 = vld [vmem:[#allocation2 + $0x640] sm:$0xff]
    %v1272 = vld [vmem:[#allocation2 + $0x648] sm:$0xff]
    %v1273 = vld [vmem:[#allocation2 + $0x650] sm:$0xff]
    %v1274 = vld [vmem:[#allocation2 + $0x658] sm:$0xff]
    %v1275 = vld [vmem:[#allocation2 + $0x660] sm:$0xff]
    %v1276 = vld [vmem:[#allocation2 + $0x668] sm:$0xff]
    %v1277 = vld [vmem:[#allocation2 + $0x670] sm:$0xff]
    %v1278 = vld [vmem:[#allocation2 + $0x678] sm:$0xff]
    %v1279 = vld [vmem:[#allocation2 + $0x680] sm:$0xff]
    %v1280 = vld [vmem:[#allocation2 + $0x688] sm:$0xff]
    %v1281 = vld [vmem:[#allocation2 + $0x690] sm:$0xff]
    %v1282 = vld [vmem:[#allocation2 + $0x698] sm:$0xff]
    %v1283 = vld [vmem:[#allocation2 + $0x6a0] sm:$0xff]
    %v1284 = vld [vmem:[#allocation2 + $0x6a8] sm:$0xff]
    %v1285 = vld [vmem:[#allocation2 + $0x6b0] sm:$0xff]
    %v1286 = vld [vmem:[#allocation2 + $0x6b8] sm:$0xff]
    %v1287 = vld [vmem:[#allocation2 + $0x6c0] sm:$0xff]
    %v1288 = vld [vmem:[#allocation2 + $0x6c8] sm:$0xff]
    %v1289 = vld [vmem:[#allocation2 + $0x6d0] sm:$0xff]
    %v1290 = vld [vmem:[#allocation2 + $0x6d8] sm:$0xff]
    %v1291 = vld [vmem:[#allocation2 + $0x6e0] sm:$0xff]
    %v1292 = vld [vmem:[#allocation2 + $0x6e8] sm:$0xff]
    %v1293 = vld [vmem:[#allocation2 + $0x6f0] sm:$0xff]
    %v1294 = vld [vmem:[#allocation2 + $0x6f8] sm:$0xff]
    %v1295 = vld [vmem:[#allocation2 + $0x700] sm:$0xff]
    %v1296 = vld [vmem:[#allocation2 + $0x708] sm:$0xff]
    %v1297 = vld [vmem:[#allocation2 + $0x710] sm:$0xff]
    %v1298 = vld [vmem:[#allocation2 + $0x718] sm:$0xff]
    %v1299 = vld [vmem:[#allocation2 + $0x720] sm:$0xff]
    %v1300 = vld [vmem:[#allocation2 + $0x728] sm:$0xff]
    %v1301 = vld [vmem:[#allocation2 + $0x730] sm:$0xff]
    %v1302 = vld [vmem:[#allocation2 + $0x738] sm:$0xff]
    %v1303 = vld [vmem:[#allocation2 + $0x740] sm:$0xff]
    %v1304 = vld [vmem:[#allocation2 + $0x748] sm:$0xff]
    %v1305 = vld [vmem:[#allocation2 + $0x750] sm:$0xff]
    %v1306 = vld [vmem:[#allocation2 + $0x758] sm:$0xff]
    %v1307 = vld [vmem:[#allocation2 + $0x760] sm:$0xff]
    %v1308 = vld [vmem:[#allocation2 + $0x768] sm:$0xff]
    %v1309 = vld [vmem:[#allocation2 + $0x770] sm:$0xff]
    %v1310 = vld [vmem:[#allocation2 + $0x778] sm:$0xff]
    %v1311 = vld [vmem:[#allocation2 + $0x780] sm:$0xff]
    %v1312 = vld [vmem:[#allocation2 + $0x788] sm:$0xff]
    %v1313 = vld [vmem:[#allocation2 + $0x790] sm:$0xff]
    %v1314 = vld [vmem:[#allocation2 + $0x798] sm:$0xff]
    %v1315 = vld [vmem:[#allocation2 + $0x7a0] sm:$0xff]
    %v1316 = vld [vmem:[#allocation2 + $0x7a8] sm:$0xff]
    %v1317 = vld [vmem:[#allocation2 + $0x7b0] sm:$0xff]
    %v1318 = vld [vmem:[#allocation2 + $0x7b8] sm:$0xff]
    %v1319 = vld [vmem:[#allocation2 + $0x7c0] sm:$0xff]
    %v1320 = vld [vmem:[#allocation2 + $0x7c8] sm:$0xff]
    %v1321 = vld [vmem:[#allocation2 + $0x7d0] sm:$0xff]
    %v1322 = vld [vmem:[#allocation2 + $0x7d8] sm:$0xff]
    %v1323 = vld [vmem:[#allocation2 + $0x7e0] sm:$0xff]
    %v1324 = vld [vmem:[#allocation2 + $0x7e8] sm:$0xff]
    %v1325 = vld [vmem:[#allocation2 + $0x7f0] sm:$0xff]
    %v1326 = vld [vmem:[#allocation2 + $0x7f8] sm:$0xff]
    %v1327 = vld [vmem:[#allocation2 + $0x800] sm:$0xff]
    %v1328 = vld [vmem:[#allocation2 + $0x808] sm:$0xff]
    %v1329 = vld [vmem:[#allocation2 + $0x810] sm:$0xff]
    %v1330 = vld [vmem:[#allocation2 + $0x818] sm:$0xff]
    %v1331 = vld [vmem:[#allocation2 + $0x820] sm:$0xff]
    %v1332 = vld [vmem:[#allocation2 + $0x828] sm:$0xff]
    %v1333 = vld [vmem:[#allocation2 + $0x830] sm:$0xff]
    %v1334 = vld [vmem:[#allocation2 + $0x838] sm:$0xff]
    %v1335 = vld [vmem:[#allocation2 + $0x840] sm:$0xff]
    %v1336 = vld [vmem:[#allocation2 + $0x848] sm:$0xff]
    %v1337 = vld [vmem:[#allocation2 + $0x850] sm:$0xff]
    %v1338 = vld [vmem:[#allocation2 + $0x858] sm:$0xff]
    %v1339 = vld [vmem:[#allocation2 + $0x860] sm:$0xff]
    %v1340 = vld [vmem:[#allocation2 + $0x868] sm:$0xff]
    %v1341 = vld [vmem:[#allocation2 + $0x870] sm:$0xff]
    %v1342 = vld [vmem:[#allocation2 + $0x878] sm:$0xff]
    %s1343 = scalar_lea.vmem [#allocation4], 1
    %v1344 = vld [vmem:[%s1343] ss:$8 sm:$0xf]
    %v1346 = vlaneseq
    %v1347 = vshrl.u32 %v1346, 7
    %v1348 = vsub.s32 0, %v1347
    %v1349 = vrot.slane %v1344, %v1348
    %v1350 = vlaneseq
    %v1351 = vshrl.u32 %v1350, 7
    %v1352 = vsub.s32 1, %v1351
    %v1353 = vrot.slane %v1344, %v1352
    %v1354 = vlaneseq
    %v1355 = vshrl.u32 %v1354, 7
    %v1356 = vsub.s32 2, %v1355
    %v1357 = vrot.slane %v1344, %v1356
    %v1358 = vlaneseq
    %v1359 = vshrl.u32 %v1358, 7
    %v1360 = vsub.s32 3, %v1359
    %v1361 = vrot.slane %v1344, %v1360
    %v1494 = vunpack.c.l.b16 %v1215
    %v1495 = vunpack.c.h.b16 %v1215
    %v1496 = vunpack.c.l.b16 %v1216
    %v1497 = vunpack.c.h.b16 %v1216
    %v1498 = vunpack.c.l.b16 %v1217
    %v1499 = vunpack.c.h.b16 %v1217
    %v1500 = vunpack.c.l.b16 %v1218
    %v1501 = vunpack.c.h.b16 %v1218
    %v1502 = vunpack.c.l.b16 %v1219
    %v1503 = vunpack.c.h.b16 %v1219
    %v1504 = vunpack.c.l.b16 %v1220
    %v1505 = vunpack.c.h.b16 %v1220
    %v1506 = vunpack.c.l.b16 %v1221
    %v1507 = vunpack.c.h.b16 %v1221
    %v1508 = vunpack.c.l.b16 %v1222
    %v1509 = vunpack.c.h.b16 %v1222
    %v1510 = vunpack.c.l.b16 %v1223
    %v1511 = vunpack.c.h.b16 %v1223
    %v1512 = vunpack.c.l.b16 %v1224
    %v1513 = vunpack.c.h.b16 %v1224
    %v1514 = vunpack.c.l.b16 %v1225
    %v1515 = vunpack.c.h.b16 %v1225
    %v1516 = vunpack.c.l.b16 %v1226
    %v1517 = vunpack.c.h.b16 %v1226
    %v1518 = vunpack.c.l.b16 %v1227
    %v1519 = vunpack.c.h.b16 %v1227
    %v1520 = vunpack.c.l.b16 %v1228
    %v1521 = vunpack.c.h.b16 %v1228
    %v1522 = vunpack.c.l.b16 %v1229
    %v1523 = vunpack.c.h.b16 %v1229
    %v1524 = vunpack.c.l.b16 %v1230
    %v1525 = vunpack.c.h.b16 %v1230
    %v1526 = vunpack.c.l.b16 %v1231
    %v1527 = vunpack.c.h.b16 %v1231
    %v1528 = vunpack.c.l.b16 %v1232
    %v1529 = vunpack.c.h.b16 %v1232
    %v1530 = vunpack.c.l.b16 %v1233
    %v1531 = vunpack.c.h.b16 %v1233
    %v1532 = vunpack.c.l.b16 %v1234
    %v1533 = vunpack.c.h.b16 %v1234
    %v1534 = vunpack.c.l.b16 %v1235
    %v1535 = vunpack.c.h.b16 %v1235
    %v1536 = vunpack.c.l.b16 %v1236
    %v1537 = vunpack.c.h.b16 %v1236
    %v1538 = vunpack.c.l.b16 %v1237
    %v1539 = vunpack.c.h.b16 %v1237
    %v1540 = vunpack.c.l.b16 %v1238
    %v1541 = vunpack.c.h.b16 %v1238
    %v1542 = vunpack.c.l.b16 %v1239
    %v1543 = vunpack.c.h.b16 %v1239
    %v1544 = vunpack.c.l.b16 %v1240
    %v1545 = vunpack.c.h.b16 %v1240
    %v1546 = vunpack.c.l.b16 %v1241
    %v1547 = vunpack.c.h.b16 %v1241
    %v1548 = vunpack.c.l.b16 %v1242
    %v1549 = vunpack.c.h.b16 %v1242
    %v1550 = vunpack.c.l.b16 %v1243
    %v1551 = vunpack.c.h.b16 %v1243
    %v1552 = vunpack.c.l.b16 %v1244
    %v1553 = vunpack.c.h.b16 %v1244
    %v1554 = vunpack.c.l.b16 %v1245
    %v1555 = vunpack.c.h.b16 %v1245
    %v1556 = vunpack.c.l.b16 %v1246
    %v1557 = vunpack.c.h.b16 %v1246
    %v1558 = vunpack.c.l.b16 %v1247
    %v1559 = vunpack.c.h.b16 %v1247
    %v1560 = vunpack.c.l.b16 %v1248
    %v1561 = vunpack.c.h.b16 %v1248
    %v1562 = vunpack.c.l.b16 %v1249
    %v1563 = vunpack.c.h.b16 %v1249
    %v1564 = vunpack.c.l.b16 %v1250
    %v1565 = vunpack.c.h.b16 %v1250
    %v1566 = vunpack.c.l.b16 %v1251
    %v1567 = vunpack.c.h.b16 %v1251
    %v1568 = vunpack.c.l.b16 %v1252
    %v1569 = vunpack.c.h.b16 %v1252
    %v1570 = vunpack.c.l.b16 %v1253
    %v1571 = vunpack.c.h.b16 %v1253
    %v1572 = vunpack.c.l.b16 %v1254
    %v1573 = vunpack.c.h.b16 %v1254
    %v1574 = vunpack.c.l.b16 %v1255
    %v1575 = vunpack.c.h.b16 %v1255
    %v1576 = vunpack.c.l.b16 %v1256
    %v1577 = vunpack.c.h.b16 %v1256
    %v1578 = vunpack.c.l.b16 %v1257
    %v1579 = vunpack.c.h.b16 %v1257
    %v1580 = vunpack.c.l.b16 %v1258
    %v1581 = vunpack.c.h.b16 %v1258
    %v1582 = vunpack.c.l.b16 %v1259
    %v1583 = vunpack.c.h.b16 %v1259
    %v1584 = vunpack.c.l.b16 %v1260
    %v1585 = vunpack.c.h.b16 %v1260
    %v1586 = vunpack.c.l.b16 %v1261
    %v1587 = vunpack.c.h.b16 %v1261
    %v1588 = vunpack.c.l.b16 %v1262
    %v1589 = vunpack.c.h.b16 %v1262
    %v1590 = vunpack.c.l.b16 %v1263
    %v1591 = vunpack.c.h.b16 %v1263
    %v1592 = vunpack.c.l.b16 %v1264
    %v1593 = vunpack.c.h.b16 %v1264
    %v1594 = vunpack.c.l.b16 %v1265
    %v1595 = vunpack.c.h.b16 %v1265
    %v1596 = vunpack.c.l.b16 %v1266
    %v1597 = vunpack.c.h.b16 %v1266
    %v1598 = vunpack.c.l.b16 %v1267
    %v1599 = vunpack.c.h.b16 %v1267
    %v1600 = vunpack.c.l.b16 %v1268
    %v1601 = vunpack.c.h.b16 %v1268
    %v1602 = vunpack.c.l.b16 %v1269
    %v1603 = vunpack.c.h.b16 %v1269
    %v1604 = vunpack.c.l.b16 %v1270
    %v1605 = vunpack.c.h.b16 %v1270
    %v1606 = vunpack.c.l.b16 %v1271
    %v1607 = vunpack.c.h.b16 %v1271
    %v1608 = vunpack.c.l.b16 %v1272
    %v1609 = vunpack.c.h.b16 %v1272
    %v1610 = vunpack.c.l.b16 %v1273
    %v1611 = vunpack.c.h.b16 %v1273
    %v1612 = vunpack.c.l.b16 %v1274
    %v1613 = vunpack.c.h.b16 %v1274
    %v1614 = vunpack.c.l.b16 %v1275
    %v1615 = vunpack.c.h.b16 %v1275
    %v1616 = vunpack.c.l.b16 %v1276
    %v1617 = vunpack.c.h.b16 %v1276
    %v1618 = vunpack.c.l.b16 %v1277
    %v1619 = vunpack.c.h.b16 %v1277
    %v1620 = vunpack.c.l.b16 %v1278
    %v1621 = vunpack.c.h.b16 %v1278
    %v1622 = vunpack.c.l.b16 %v1279
    %v1623 = vunpack.c.h.b16 %v1279
    %v1624 = vunpack.c.l.b16 %v1280
    %v1625 = vunpack.c.h.b16 %v1280
    %v1626 = vunpack.c.l.b16 %v1281
    %v1627 = vunpack.c.h.b16 %v1281
    %v1628 = vunpack.c.l.b16 %v1282
    %v1629 = vunpack.c.h.b16 %v1282
    %v1630 = vunpack.c.l.b16 %v1283
    %v1631 = vunpack.c.h.b16 %v1283
    %v1632 = vunpack.c.l.b16 %v1284
    %v1633 = vunpack.c.h.b16 %v1284
    %v1634 = vunpack.c.l.b16 %v1285
    %v1635 = vunpack.c.h.b16 %v1285
    %v1636 = vunpack.c.l.b16 %v1286
    %v1637 = vunpack.c.h.b16 %v1286
    %v1638 = vunpack.c.l.b16 %v1287
    %v1639 = vunpack.c.h.b16 %v1287
    %v1640 = vunpack.c.l.b16 %v1288
    %v1641 = vunpack.c.h.b16 %v1288
    %v1642 = vunpack.c.l.b16 %v1289
    %v1643 = vunpack.c.h.b16 %v1289
    %v1644 = vunpack.c.l.b16 %v1290
    %v1645 = vunpack.c.h.b16 %v1290
    %v1646 = vunpack.c.l.b16 %v1291
    %v1647 = vunpack.c.h.b16 %v1291
    %v1648 = vunpack.c.l.b16 %v1292
    %v1649 = vunpack.c.h.b16 %v1292
    %v1650 = vunpack.c.l.b16 %v1293
    %v1651 = vunpack.c.h.b16 %v1293
    %v1652 = vunpack.c.l.b16 %v1294
    %v1653 = vunpack.c.h.b16 %v1294
    %v1654 = vunpack.c.l.b16 %v1295
    %v1655 = vunpack.c.h.b16 %v1295
    %v1656 = vunpack.c.l.b16 %v1296
    %v1657 = vunpack.c.h.b16 %v1296
    %v1658 = vunpack.c.l.b16 %v1297
    %v1659 = vunpack.c.h.b16 %v1297
    %v1660 = vunpack.c.l.b16 %v1298
    %v1661 = vunpack.c.h.b16 %v1298
    %v1662 = vunpack.c.l.b16 %v1299
    %v1663 = vunpack.c.h.b16 %v1299
    %v1664 = vunpack.c.l.b16 %v1300
    %v1665 = vunpack.c.h.b16 %v1300
    %v1666 = vunpack.c.l.b16 %v1301
    %v1667 = vunpack.c.h.b16 %v1301
    %v1668 = vunpack.c.l.b16 %v1302
    %v1669 = vunpack.c.h.b16 %v1302
    %v1670 = vunpack.c.l.b16 %v1303
    %v1671 = vunpack.c.h.b16 %v1303
    %v1672 = vunpack.c.l.b16 %v1304
    %v1673 = vunpack.c.h.b16 %v1304
    %v1674 = vunpack.c.l.b16 %v1305
    %v1675 = vunpack.c.h.b16 %v1305
    %v1676 = vunpack.c.l.b16 %v1306
    %v1677 = vunpack.c.h.b16 %v1306
    %v1678 = vunpack.c.l.b16 %v1307
    %v1679 = vunpack.c.h.b16 %v1307
    %v1680 = vunpack.c.l.b16 %v1308
    %v1681 = vunpack.c.h.b16 %v1308
    %v1682 = vunpack.c.l.b16 %v1309
    %v1683 = vunpack.c.h.b16 %v1309
    %v1684 = vunpack.c.l.b16 %v1310
    %v1685 = vunpack.c.h.b16 %v1310
    %v1686 = vunpack.c.l.b16 %v1311
    %v1687 = vunpack.c.h.b16 %v1311
    %v1688 = vunpack.c.l.b16 %v1312
    %v1689 = vunpack.c.h.b16 %v1312
    %v1690 = vunpack.c.l.b16 %v1313
    %v1691 = vunpack.c.h.b16 %v1313
    %v1692 = vunpack.c.l.b16 %v1314
    %v1693 = vunpack.c.h.b16 %v1314
    %v1694 = vunpack.c.l.b16 %v1315
    %v1695 = vunpack.c.h.b16 %v1315
    %v1696 = vunpack.c.l.b16 %v1316
    %v1697 = vunpack.c.h.b16 %v1316
    %v1698 = vunpack.c.l.b16 %v1317
    %v1699 = vunpack.c.h.b16 %v1317
    %v1700 = vunpack.c.l.b16 %v1318
    %v1701 = vunpack.c.h.b16 %v1318
    %v1702 = vunpack.c.l.b16 %v1319
    %v1703 = vunpack.c.h.b16 %v1319
    %v1704 = vunpack.c.l.b16 %v1320
    %v1705 = vunpack.c.h.b16 %v1320
    %v1706 = vunpack.c.l.b16 %v1321
    %v1707 = vunpack.c.h.b16 %v1321
    %v1708 = vunpack.c.l.b16 %v1322
    %v1709 = vunpack.c.h.b16 %v1322
    %v1710 = vunpack.c.l.b16 %v1323
    %v1711 = vunpack.c.h.b16 %v1323
    %v1712 = vunpack.c.l.b16 %v1324
    %v1713 = vunpack.c.h.b16 %v1324
    %v1714 = vunpack.c.l.b16 %v1325
    %v1715 = vunpack.c.h.b16 %v1325
    %v1716 = vunpack.c.l.b16 %v1326
    %v1717 = vunpack.c.h.b16 %v1326
    %v1718 = vunpack.c.l.b16 %v1327
    %v1719 = vunpack.c.h.b16 %v1327
    %v1720 = vunpack.c.l.b16 %v1328
    %v1721 = vunpack.c.h.b16 %v1328
    %v1722 = vunpack.c.l.b16 %v1329
    %v1723 = vunpack.c.h.b16 %v1329
    %v1724 = vunpack.c.l.b16 %v1330
    %v1725 = vunpack.c.h.b16 %v1330
    %v1726 = vunpack.c.l.b16 %v1331
    %v1727 = vunpack.c.h.b16 %v1331
    %v1728 = vunpack.c.l.b16 %v1332
    %v1729 = vunpack.c.h.b16 %v1332
    %v1730 = vunpack.c.l.b16 %v1333
    %v1731 = vunpack.c.h.b16 %v1333
    %v1732 = vunpack.c.l.b16 %v1334
    %v1733 = vunpack.c.h.b16 %v1334
    %v1734 = vunpack.c.l.b16 %v1335
    %v1735 = vunpack.c.h.b16 %v1335
    %v1736 = vunpack.c.l.b16 %v1336
    %v1737 = vunpack.c.h.b16 %v1336
    %v1738 = vunpack.c.l.b16 %v1337
    %v1739 = vunpack.c.h.b16 %v1337
    %v1740 = vunpack.c.l.b16 %v1338
    %v1741 = vunpack.c.h.b16 %v1338
    %v1742 = vunpack.c.l.b16 %v1339
    %v1743 = vunpack.c.h.b16 %v1339
    %v1744 = vunpack.c.l.b16 %v1340
    %v1745 = vunpack.c.h.b16 %v1340
    %v1746 = vunpack.c.l.b16 %v1341
    %v1747 = vunpack.c.h.b16 %v1341
    %v1748 = vunpack.c.l.b16 %v1342
    %v1749 = vunpack.c.h.b16 %v1342
    %v1750 = vpack.c.b16 %v1498, %v1494
    %v1751 = vpack.c.b16 %v1499, %v1495
    %v1752 = vpack.c.b16 %v1500, %v1496
    %v1753 = vpack.c.b16 %v1501, %v1497
    %v1754 = vpack.c.b16 %v1506, %v1502
    %v1755 = vpack.c.b16 %v1507, %v1503
    %v1756 = vpack.c.b16 %v1508, %v1504
    %v1757 = vpack.c.b16 %v1509, %v1505
    %v1758 = vpack.c.b16 %v1514, %v1510
    %v1759 = vpack.c.b16 %v1515, %v1511
    %v1760 = vpack.c.b16 %v1516, %v1512
    %v1761 = vpack.c.b16 %v1517, %v1513
    %v1762 = vpack.c.b16 %v1522, %v1518
    %v1763 = vpack.c.b16 %v1523, %v1519
    %v1764 = vpack.c.b16 %v1524, %v1520
    %v1765 = vpack.c.b16 %v1525, %v1521
    %v1766 = vpack.c.b16 %v1530, %v1526
    %v1767 = vpack.c.b16 %v1531, %v1527
    %v1768 = vpack.c.b16 %v1532, %v1528
    %v1769 = vpack.c.b16 %v1533, %v1529
    %v1770 = vpack.c.b16 %v1538, %v1534
    %v1771 = vpack.c.b16 %v1539, %v1535
    %v1772 = vpack.c.b16 %v1540, %v1536
    %v1773 = vpack.c.b16 %v1541, %v1537
    %v1774 = vpack.c.b16 %v1546, %v1542
    %v1775 = vpack.c.b16 %v1547, %v1543
    %v1776 = vpack.c.b16 %v1548, %v1544
    %v1777 = vpack.c.b16 %v1549, %v1545
    %v1778 = vpack.c.b16 %v1554, %v1550
    %v1779 = vpack.c.b16 %v1555, %v1551
    %v1780 = vpack.c.b16 %v1556, %v1552
    %v1781 = vpack.c.b16 %v1557, %v1553
    %v1782 = vpack.c.b16 %v1562, %v1558
    %v1783 = vpack.c.b16 %v1563, %v1559
    %v1784 = vpack.c.b16 %v1564, %v1560
    %v1785 = vpack.c.b16 %v1565, %v1561
    %v1786 = vpack.c.b16 %v1570, %v1566
    %v1787 = vpack.c.b16 %v1571, %v1567
    %v1788 = vpack.c.b16 %v1572, %v1568
    %v1789 = vpack.c.b16 %v1573, %v1569
    %v1790 = vpack.c.b16 %v1578, %v1574
    %v1791 = vpack.c.b16 %v1579, %v1575
    %v1792 = vpack.c.b16 %v1580, %v1576
    %v1793 = vpack.c.b16 %v1581, %v1577
    %v1794 = vpack.c.b16 %v1586, %v1582
    %v1795 = vpack.c.b16 %v1587, %v1583
    %v1796 = vpack.c.b16 %v1588, %v1584
    %v1797 = vpack.c.b16 %v1589, %v1585
    %v1798 = vpack.c.b16 %v1594, %v1590
    %v1799 = vpack.c.b16 %v1595, %v1591
    %v1800 = vpack.c.b16 %v1596, %v1592
    %v1801 = vpack.c.b16 %v1597, %v1593
    %v1802 = vpack.c.b16 %v1602, %v1598
    %v1803 = vpack.c.b16 %v1603, %v1599
    %v1804 = vpack.c.b16 %v1604, %v1600
    %v1805 = vpack.c.b16 %v1605, %v1601
    %v1806 = vpack.c.b16 %v1610, %v1606
    %v1807 = vpack.c.b16 %v1611, %v1607
    %v1808 = vpack.c.b16 %v1612, %v1608
    %v1809 = vpack.c.b16 %v1613, %v1609
    %v1810 = vpack.c.b16 %v1618, %v1614
    %v1811 = vpack.c.b16 %v1619, %v1615
    %v1812 = vpack.c.b16 %v1620, %v1616
    %v1813 = vpack.c.b16 %v1621, %v1617
    %v1814 = vpack.c.b16 %v1626, %v1622
    %v1815 = vpack.c.b16 %v1627, %v1623
    %v1816 = vpack.c.b16 %v1628, %v1624
    %v1817 = vpack.c.b16 %v1629, %v1625
    %v1818 = vpack.c.b16 %v1634, %v1630
    %v1819 = vpack.c.b16 %v1635, %v1631
    %v1820 = vpack.c.b16 %v1636, %v1632
    %v1821 = vpack.c.b16 %v1637, %v1633
    %v1822 = vpack.c.b16 %v1642, %v1638
    %v1823 = vpack.c.b16 %v1643, %v1639
    %v1824 = vpack.c.b16 %v1644, %v1640
    %v1825 = vpack.c.b16 %v1645, %v1641
    %v1826 = vpack.c.b16 %v1650, %v1646
    %v1827 = vpack.c.b16 %v1651, %v1647
    %v1828 = vpack.c.b16 %v1652, %v1648
    %v1829 = vpack.c.b16 %v1653, %v1649
    %v1830 = vpack.c.b16 %v1658, %v1654
    %v1831 = vpack.c.b16 %v1659, %v1655
    %v1832 = vpack.c.b16 %v1660, %v1656
    %v1833 = vpack.c.b16 %v1661, %v1657
    %v1834 = vpack.c.b16 %v1666, %v1662
    %v1835 = vpack.c.b16 %v1667, %v1663
    %v1836 = vpack.c.b16 %v1668, %v1664
    %v1837 = vpack.c.b16 %v1669, %v1665
    %v1838 = vpack.c.b16 %v1674, %v1670
    %v1839 = vpack.c.b16 %v1675, %v1671
    %v1840 = vpack.c.b16 %v1676, %v1672
    %v1841 = vpack.c.b16 %v1677, %v1673
    %v1842 = vpack.c.b16 %v1682, %v1678
    %v1843 = vpack.c.b16 %v1683, %v1679
    %v1844 = vpack.c.b16 %v1684, %v1680
    %v1845 = vpack.c.b16 %v1685, %v1681
    %v1846 = vpack.c.b16 %v1690, %v1686
    %v1847 = vpack.c.b16 %v1691, %v1687
    %v1848 = vpack.c.b16 %v1692, %v1688
    %v1849 = vpack.c.b16 %v1693, %v1689
    %v1850 = vpack.c.b16 %v1698, %v1694
    %v1851 = vpack.c.b16 %v1699, %v1695
    %v1852 = vpack.c.b16 %v1700, %v1696
    %v1853 = vpack.c.b16 %v1701, %v1697
    %v1854 = vpack.c.b16 %v1706, %v1702
    %v1855 = vpack.c.b16 %v1707, %v1703
    %v1856 = vpack.c.b16 %v1708, %v1704
    %v1857 = vpack.c.b16 %v1709, %v1705
    %v1858 = vpack.c.b16 %v1714, %v1710
    %v1859 = vpack.c.b16 %v1715, %v1711
    %v1860 = vpack.c.b16 %v1716, %v1712
    %v1861 = vpack.c.b16 %v1717, %v1713
    %v1862 = vpack.c.b16 %v1722, %v1718
    %v1863 = vpack.c.b16 %v1723, %v1719
    %v1864 = vpack.c.b16 %v1724, %v1720
    %v1865 = vpack.c.b16 %v1725, %v1721
    %v1866 = vpack.c.b16 %v1730, %v1726
    %v1867 = vpack.c.b16 %v1731, %v1727
    %v1868 = vpack.c.b16 %v1732, %v1728
    %v1869 = vpack.c.b16 %v1733, %v1729
    %v1870 = vpack.c.b16 %v1738, %v1734
    %v1871 = vpack.c.b16 %v1739, %v1735
    %v1872 = vpack.c.b16 %v1740, %v1736
    %v1873 = vpack.c.b16 %v1741, %v1737
    %v1874 = vpack.c.b16 %v1746, %v1742
    %v1875 = vpack.c.b16 %v1747, %v1743
    %v1876 = vpack.c.b16 %v1748, %v1744
    %v1877 = vpack.c.b16 %v1749, %v1745
    %2006 = vmatprep.subr.bf16.mxu0 %v1751
    %2007 = vmatpush1.bf16.msra.mxu0 %v1750
    %2008 = vmatprep.subr.bf16.mxu0 %v1755
    %2009 = vmatpush1.bf16.msra.mxu0 %v1754
    %2010 = vmatprep.subr.bf16.mxu0 %v1759
    %2011 = vmatpush1.bf16.msra.mxu0 %v1758
    %2012 = vmatprep.subr.bf16.mxu0 %v1763
    %2013 = vmatpush1.bf16.msra.mxu0 %v1762
    %2014 = vmatprep.subr.bf16.mxu0 %v1767
    %2015 = vmatpush1.bf16.msra.mxu0 %v1766
    %2016 = vmatprep.subr.bf16.mxu0 %v1771
    %2017 = vmatpush1.bf16.msra.mxu0 %v1770
    %2018 = vmatprep.subr.bf16.mxu0 %v1775
    %2019 = vmatpush1.bf16.msra.mxu0 %v1774
    %2020 = vmatprep.subr.bf16.mxu0 %v1779
    %2021 = vmatpush1.bf16.msra.mxu0 %v1778
    %2022 = vmatprep.subr.bf16.mxu0 %v1783
    %2023 = vmatpush1.bf16.msra.mxu0 %v1782
    %2024 = vmatprep.subr.bf16.mxu0 %v1787
    %2025 = vmatpush1.bf16.msra.mxu0 %v1786
    %2026 = vmatprep.subr.bf16.mxu0 %v1791
    %2027 = vmatpush1.bf16.msra.mxu0 %v1790
    %2028 = vmatprep.subr.bf16.mxu0 %v1795
    %2029 = vmatpush1.bf16.msra.mxu0 %v1794
    %2030 = vmatprep.subr.bf16.mxu0 %v1799
    %2031 = vmatpush1.bf16.msra.mxu0 %v1798
    %2032 = vmatprep.subr.bf16.mxu0 %v1803
    %2033 = vmatpush1.bf16.msra.mxu0 %v1802
    %2034 = vmatprep.subr.bf16.mxu0 %v1807
    %2035 = vmatpush1.bf16.msra.mxu0 %v1806
    %2036 = vmatprep.subr.bf16.mxu0 %v1811
    %2037 = vmatpush1.bf16.msra.mxu0 %v1810
    %2038 = vmatprep.mubr.bf16.mxu0 %v1212
    %2039 = vmatmul.mubr.bf16.gmra.mrb[0].mxu0 %v1211
    %v2040 = vpop.f32.mrb[0].mxu0
    %v2041 = vadd.f32 %v1349, %v2040
    %v2042 = vpop.f32.mrb[0].mxu0
    %v2043 = vadd.f32 %v1353, %v2042
    %v2044 = vpop.f32.mrb[0].mxu0
    %v2045 = vpop.f32.mrb[0].mxu0
    %2046 = vdwg.mxu0
    %2047 = vmatprep.subr.bf16.mxu0 %v1815
    %2048 = vmatpush1.bf16.msra.mxu0 %v1814
    %2049 = vmatprep.subr.bf16.mxu0 %v1819
    %2050 = vmatpush1.bf16.msra.mxu0 %v1818
    %2051 = vmatprep.subr.bf16.mxu0 %v1823
    %2052 = vmatpush1.bf16.msra.mxu0 %v1822
    %2053 = vmatprep.subr.bf16.mxu0 %v1827
    %2054 = vmatpush1.bf16.msra.mxu0 %v1826
    %2055 = vmatprep.subr.bf16.mxu0 %v1831
    %2056 = vmatpush1.bf16.msra.mxu0 %v1830
    %2057 = vmatprep.subr.bf16.mxu0 %v1835
    %2058 = vmatpush1.bf16.msra.mxu0 %v1834
    %2059 = vmatprep.subr.bf16.mxu0 %v1839
    %2060 = vmatpush1.bf16.msra.mxu0 %v1838
    %2061 = vmatprep.subr.bf16.mxu0 %v1843
    %2062 = vmatpush1.bf16.msra.mxu0 %v1842
    %2063 = vmatprep.subr.bf16.mxu0 %v1847
    %2064 = vmatpush1.bf16.msra.mxu0 %v1846
    %2065 = vmatprep.subr.bf16.mxu0 %v1851
    %2066 = vmatpush1.bf16.msra.mxu0 %v1850
    %2067 = vmatprep.subr.bf16.mxu0 %v1855
    %2068 = vmatpush1.bf16.msra.mxu0 %v1854
    %2069 = vmatprep.subr.bf16.mxu0 %v1859
    %2070 = vmatpush1.bf16.msra.mxu0 %v1858
    %2071 = vmatprep.subr.bf16.mxu0 %v1863
    %2072 = vmatpush1.bf16.msra.mxu0 %v1862
    %2073 = vmatprep.subr.bf16.mxu0 %v1867
    %2074 = vmatpush1.bf16.msra.mxu0 %v1866
    %2075 = vmatprep.subr.bf16.mxu0 %v1871
    %2076 = vmatpush1.bf16.msra.mxu0 %v1870
    %2077 = vmatprep.subr.bf16.mxu0 %v1875
    %2078 = vmatpush1.bf16.msra.mxu0 %v1874
    %2079 = vmatprep.mubr.bf16.mxu0 %v1214
    %2080 = vmatmul.mubr.bf16.gmra.mrb[0].mxu0 %v1213
    %v2081 = vpop.f32.mrb[0].mxu0
    %v2082 = vadd.f32 %v2041, %v2081
    %v2083 = vpop.f32.mrb[0].mxu0
    %v2084 = vadd.f32 %v2043, %v2083
    %v2085 = vpop.f32.mrb[0].mxu0
    %v2086 = vpop.f32.mrb[0].mxu0
    %2087 = vdwg.mxu0
    %2088 = vmatprep.subr.bf16.mxu0 %v1753
    %2089 = vmatpush1.bf16.msra.mxu0 %v1752
    %2090 = vmatprep.subr.bf16.mxu0 %v1757
    %2091 = vmatpush1.bf16.msra.mxu0 %v1756
    %2092 = vmatprep.subr.bf16.mxu0 %v1761
    %2093 = vmatpush1.bf16.msra.mxu0 %v1760
    %2094 = vmatprep.subr.bf16.mxu0 %v1765
    %2095 = vmatpush1.bf16.msra.mxu0 %v1764
    %2096 = vmatprep.subr.bf16.mxu0 %v1769
    %2097 = vmatpush1.bf16.msra.mxu0 %v1768
    %2098 = vmatprep.subr.bf16.mxu0 %v1773
    %2099 = vmatpush1.bf16.msra.mxu0 %v1772
    %2100 = vmatprep.subr.bf16.mxu0 %v1777
    %2101 = vmatpush1.bf16.msra.mxu0 %v1776
    %2102 = vmatprep.subr.bf16.mxu0 %v1781
    %2103 = vmatpush1.bf16.msra.mxu0 %v1780
    %2104 = vmatprep.subr.bf16.mxu0 %v1785
    %2105 = vmatpush1.bf16.msra.mxu0 %v1784
    %2106 = vmatprep.subr.bf16.mxu0 %v1789
    %2107 = vmatpush1.bf16.msra.mxu0 %v1788
    %2108 = vmatprep.subr.bf16.mxu0 %v1793
    %2109 = vmatpush1.bf16.msra.mxu0 %v1792
    %2110 = vmatprep.subr.bf16.mxu0 %v1797
    %2111 = vmatpush1.bf16.msra.mxu0 %v1796
    %2112 = vmatprep.subr.bf16.mxu0 %v1801
    %2113 = vmatpush1.bf16.msra.mxu0 %v1800
    %2114 = vmatprep.subr.bf16.mxu0 %v1805
    %2115 = vmatpush1.bf16.msra.mxu0 %v1804
    %2116 = vmatprep.subr.bf16.mxu0 %v1809
    %2117 = vmatpush1.bf16.msra.mxu0 %v1808
    %2118 = vmatprep.subr.bf16.mxu0 %v1813
    %2119 = vmatpush1.bf16.msra.mxu0 %v1812
    %2120 = vmatprep.mubr.bf16.mxu0 %v1212
    %2121 = vmatmul.mubr.bf16.gmra.mrb[0].mxu0 %v1211
    %v2122 = vpop.f32.mrb[0].mxu0
    %v2123 = vadd.f32 %v1357, %v2122
    %v2124 = vpop.f32.mrb[0].mxu0
    %v2125 = vadd.f32 %v1361, %v2124
    %v2126 = vpop.f32.mrb[0].mxu0
    %v2127 = vpop.f32.mrb[0].mxu0
    %2128 = vdwg.mxu0
    %2129 = vmatprep.subr.bf16.mxu0 %v1817
    %2130 = vmatpush1.bf16.msra.mxu0 %v1816
    %2131 = vmatprep.subr.bf16.mxu0 %v1821
    %2132 = vmatpush1.bf16.msra.mxu0 %v1820
    %2133 = vmatprep.subr.bf16.mxu0 %v1825
    %2134 = vmatpush1.bf16.msra.mxu0 %v1824
    %2135 = vmatprep.subr.bf16.mxu0 %v1829
    %2136 = vmatpush1.bf16.msra.mxu0 %v1828
    %2137 = vmatprep.subr.bf16.mxu0 %v1833
    %2138 = vmatpush1.bf16.msra.mxu0 %v1832
    %2139 = vmatprep.subr.bf16.mxu0 %v1837
    %2140 = vmatpush1.bf16.msra.mxu0 %v1836
    %2141 = vmatprep.subr.bf16.mxu0 %v1841
    %2142 = vmatpush1.bf16.msra.mxu0 %v1840
    %2143 = vmatprep.subr.bf16.mxu0 %v1845
    %2144 = vmatpush1.bf16.msra.mxu0 %v1844
    %2145 = vmatprep.subr.bf16.mxu0 %v1849
    %2146 = vmatpush1.bf16.msra.mxu0 %v1848
    %2147 = vmatprep.subr.bf16.mxu0 %v1853
    %2148 = vmatpush1.bf16.msra.mxu0 %v1852
    %2149 = vmatprep.subr.bf16.mxu0 %v1857
    %2150 = vmatpush1.bf16.msra.mxu0 %v1856
    %2151 = vmatprep.subr.bf16.mxu0 %v1861
    %2152 = vmatpush1.bf16.msra.mxu0 %v1860
    %2153 = vmatprep.subr.bf16.mxu0 %v1865
    %2154 = vmatpush1.bf16.msra.mxu0 %v1864
    %2155 = vmatprep.subr.bf16.mxu0 %v1869
    %2156 = vmatpush1.bf16.msra.mxu0 %v1868
    %2157 = vmatprep.subr.bf16.mxu0 %v1873
    %2158 = vmatpush1.bf16.msra.mxu0 %v1872
    %2159 = vmatprep.subr.bf16.mxu0 %v1877
    %2160 = vmatpush1.bf16.msra.mxu0 %v1876
    %2161 = vmatprep.mubr.bf16.mxu0 %v1214
    %2162 = vmatmul.mubr.bf16.gmra.mrb[0].mxu0 %v1213
    %v2163 = vpop.f32.mrb[0].mxu0
    %v2164 = vadd.f32 %v2123, %v2163
    %v2165 = vpop.f32.mrb[0].mxu0
    %v2166 = vadd.f32 %v2125, %v2165
    %v2167 = vpop.f32.mrb[0].mxu0
    %v2168 = vpop.f32.mrb[0].mxu0
    %2169 = vdwg.mxu0
    %vm2170 = vcmp.gt.f32.partialorder %v2082, 0.0
    %vm2171 = vcmp.gt.f32.partialorder %v2084, 0.0
    %vm2172 = vcmp.gt.f32.partialorder %v2164, 0.0
    %vm2173 = vcmp.gt.f32.partialorder %v2166, 0.0
    %v2174 = vmul.f32 %v2082, 0.01
    %v2175 = vmul.f32 %v2084, 0.01
    %v2176 = vmul.f32 %v2164, 0.01
    %v2177 = vmul.f32 %v2166, 0.01
    %v2178 = vsel %vm2170, %v2082, %v2174
    %v2179 = vsel %vm2171, %v2084, %v2175
    %v2180 = vsel %vm2172, %v2164, %v2176
    %v2181 = vsel %vm2173, %v2166, %v2177
    %v2182 = vpack.c.bf16 %v2178, %v2178
    %v2183 = vpack.c.bf16 %v2179, %v2179
    %v2184 = vpack.c.bf16 %v2180, %v2180
    %v2185 = vpack.c.bf16 %v2181, %v2181
    %v2186 = vld [vmem:[#allocation2 + $0x880] sm:$0xff]
    %v2187 = vld [vmem:[#allocation2 + $0x888] sm:$0xff]
    %v2188 = vld [vmem:[#allocation2 + $0x890] sm:$0xff]
    %v2189 = vld [vmem:[#allocation2 + $0x898] sm:$0xff]
    %v2190 = vld [vmem:[#allocation2 + $0x8a0] sm:$0xff]
    %v2191 = vld [vmem:[#allocation2 + $0x8a8] sm:$0xff]
    %v2192 = vld [vmem:[#allocation2 + $0x8b0] sm:$0xff]
    %v2193 = vld [vmem:[#allocation2 + $0x8b8] sm:$0xff]
    %v2194 = vld [vmem:[#allocation2 + $0x8c0] sm:$0xff]
    %v2195 = vld [vmem:[#allocation2 + $0x8c8] sm:$0xff]
    %v2196 = vld [vmem:[#allocation2 + $0x8d0] sm:$0xff]
    %v2197 = vld [vmem:[#allocation2 + $0x8d8] sm:$0xff]
    %v2198 = vld [vmem:[#allocation2 + $0x8e0] sm:$0xff]
    %v2199 = vld [vmem:[#allocation2 + $0x8e8] sm:$0xff]
    %v2200 = vld [vmem:[#allocation2 + $0x8f0] sm:$0xff]
    %v2201 = vld [vmem:[#allocation2 + $0x8f8] sm:$0xff]
    %v2202 = vld [vmem:[#allocation2 + $0x900] sm:$0xff]
    %v2203 = vld [vmem:[#allocation2 + $0x908] sm:$0xff]
    %v2204 = vld [vmem:[#allocation2 + $0x910] sm:$0xff]
    %v2205 = vld [vmem:[#allocation2 + $0x918] sm:$0xff]
    %v2206 = vld [vmem:[#allocation2 + $0x920] sm:$0xff]
    %v2207 = vld [vmem:[#allocation2 + $0x928] sm:$0xff]
    %v2208 = vld [vmem:[#allocation2 + $0x930] sm:$0xff]
    %v2209 = vld [vmem:[#allocation2 + $0x938] sm:$0xff]
    %v2210 = vld [vmem:[#allocation2 + $0x940] sm:$0xff]
    %v2211 = vld [vmem:[#allocation2 + $0x948] sm:$0xff]
    %v2212 = vld [vmem:[#allocation2 + $0x950] sm:$0xff]
    %v2213 = vld [vmem:[#allocation2 + $0x958] sm:$0xff]
    %v2214 = vld [vmem:[#allocation2 + $0x960] sm:$0xff]
    %v2215 = vld [vmem:[#allocation2 + $0x968] sm:$0xff]
    %v2216 = vld [vmem:[#allocation2 + $0x970] sm:$0xff]
    %v2217 = vld [vmem:[#allocation2 + $0x978] sm:$0xff]
    %v2218 = vld [vmem:[#allocation2 + $0x980] sm:$0xff]
    %v2219 = vld [vmem:[#allocation2 + $0x988] sm:$0xff]
    %v2220 = vld [vmem:[#allocation2 + $0x990] sm:$0xff]
    %v2221 = vld [vmem:[#allocation2 + $0x998] sm:$0xff]
    %v2222 = vld [vmem:[#allocation2 + $0x9a0] sm:$0xff]
    %v2223 = vld [vmem:[#allocation2 + $0x9a8] sm:$0xff]
    %v2224 = vld [vmem:[#allocation2 + $0x9b0] sm:$0xff]
    %v2225 = vld [vmem:[#allocation2 + $0x9b8] sm:$0xff]
    %v2226 = vld [vmem:[#allocation2 + $0x9c0] sm:$0xff]
    %v2227 = vld [vmem:[#allocation2 + $0x9c8] sm:$0xff]
    %v2228 = vld [vmem:[#allocation2 + $0x9d0] sm:$0xff]
    %v2229 = vld [vmem:[#allocation2 + $0x9d8] sm:$0xff]
    %v2230 = vld [vmem:[#allocation2 + $0x9e0] sm:$0xff]
    %v2231 = vld [vmem:[#allocation2 + $0x9e8] sm:$0xff]
    %v2232 = vld [vmem:[#allocation2 + $0x9f0] sm:$0xff]
    %v2233 = vld [vmem:[#allocation2 + $0x9f8] sm:$0xff]
    %v2234 = vld [vmem:[#allocation2 + $0xa00] sm:$0xff]
    %v2235 = vld [vmem:[#allocation2 + $0xa08] sm:$0xff]
    %v2236 = vld [vmem:[#allocation2 + $0xa10] sm:$0xff]
    %v2237 = vld [vmem:[#allocation2 + $0xa18] sm:$0xff]
    %v2238 = vld [vmem:[#allocation2 + $0xa20] sm:$0xff]
    %v2239 = vld [vmem:[#allocation2 + $0xa28] sm:$0xff]
    %v2240 = vld [vmem:[#allocation2 + $0xa30] sm:$0xff]
    %v2241 = vld [vmem:[#allocation2 + $0xa38] sm:$0xff]
    %v2242 = vld [vmem:[#allocation2 + $0xa40] sm:$0xff]
    %v2243 = vld [vmem:[#allocation2 + $0xa48] sm:$0xff]
    %v2244 = vld [vmem:[#allocation2 + $0xa50] sm:$0xff]
    %v2245 = vld [vmem:[#allocation2 + $0xa58] sm:$0xff]
    %v2246 = vld [vmem:[#allocation2 + $0xa60] sm:$0xff]
    %v2247 = vld [vmem:[#allocation2 + $0xa68] sm:$0xff]
    %v2248 = vld [vmem:[#allocation2 + $0xa70] sm:$0xff]
    %v2249 = vld [vmem:[#allocation2 + $0xa78] sm:$0xff]
    %v2250 = vld [vmem:[#allocation2 + $0xa80] sm:$0xff]
    %v2251 = vld [vmem:[#allocation2 + $0xa88] sm:$0xff]
    %v2252 = vld [vmem:[#allocation2 + $0xa90] sm:$0xff]
    %v2253 = vld [vmem:[#allocation2 + $0xa98] sm:$0xff]
    %v2254 = vld [vmem:[#allocation2 + $0xaa0] sm:$0xff]
    %v2255 = vld [vmem:[#allocation2 + $0xaa8] sm:$0xff]
    %v2256 = vld [vmem:[#allocation2 + $0xab0] sm:$0xff]
    %v2257 = vld [vmem:[#allocation2 + $0xab8] sm:$0xff]
    %v2258 = vld [vmem:[#allocation2 + $0xac0] sm:$0xff]
    %v2259 = vld [vmem:[#allocation2 + $0xac8] sm:$0xff]
    %v2260 = vld [vmem:[#allocation2 + $0xad0] sm:$0xff]
    %v2261 = vld [vmem:[#allocation2 + $0xad8] sm:$0xff]
    %v2262 = vld [vmem:[#allocation2 + $0xae0] sm:$0xff]
    %v2263 = vld [vmem:[#allocation2 + $0xae8] sm:$0xff]
    %v2264 = vld [vmem:[#allocation2 + $0xaf0] sm:$0xff]
    %v2265 = vld [vmem:[#allocation2 + $0xaf8] sm:$0xff]
    %v2266 = vld [vmem:[#allocation2 + $0xb00] sm:$0xff]
    %v2267 = vld [vmem:[#allocation2 + $0xb08] sm:$0xff]
    %v2268 = vld [vmem:[#allocation2 + $0xb10] sm:$0xff]
    %v2269 = vld [vmem:[#allocation2 + $0xb18] sm:$0xff]
    %v2270 = vld [vmem:[#allocation2 + $0xb20] sm:$0xff]
    %v2271 = vld [vmem:[#allocation2 + $0xb28] sm:$0xff]
    %v2272 = vld [vmem:[#allocation2 + $0xb30] sm:$0xff]
    %v2273 = vld [vmem:[#allocation2 + $0xb38] sm:$0xff]
    %v2274 = vld [vmem:[#allocation2 + $0xb40] sm:$0xff]
    %v2275 = vld [vmem:[#allocation2 + $0xb48] sm:$0xff]
    %v2276 = vld [vmem:[#allocation2 + $0xb50] sm:$0xff]
    %v2277 = vld [vmem:[#allocation2 + $0xb58] sm:$0xff]
    %v2278 = vld [vmem:[#allocation2 + $0xb60] sm:$0xff]
    %v2279 = vld [vmem:[#allocation2 + $0xb68] sm:$0xff]
    %v2280 = vld [vmem:[#allocation2 + $0xb70] sm:$0xff]
    %v2281 = vld [vmem:[#allocation2 + $0xb78] sm:$0xff]
    %v2282 = vld [vmem:[#allocation2 + $0xb80] sm:$0xff]
    %v2283 = vld [vmem:[#allocation2 + $0xb88] sm:$0xff]
    %v2284 = vld [vmem:[#allocation2 + $0xb90] sm:$0xff]
    %v2285 = vld [vmem:[#allocation2 + $0xb98] sm:$0xff]
    %v2286 = vld [vmem:[#allocation2 + $0xba0] sm:$0xff]
    %v2287 = vld [vmem:[#allocation2 + $0xba8] sm:$0xff]
    %v2288 = vld [vmem:[#allocation2 + $0xbb0] sm:$0xff]
    %v2289 = vld [vmem:[#allocation2 + $0xbb8] sm:$0xff]
    %v2290 = vld [vmem:[#allocation2 + $0xbc0] sm:$0xff]
    %v2291 = vld [vmem:[#allocation2 + $0xbc8] sm:$0xff]
    %v2292 = vld [vmem:[#allocation2 + $0xbd0] sm:$0xff]
    %v2293 = vld [vmem:[#allocation2 + $0xbd8] sm:$0xff]
    %v2294 = vld [vmem:[#allocation2 + $0xbe0] sm:$0xff]
    %v2295 = vld [vmem:[#allocation2 + $0xbe8] sm:$0xff]
    %v2296 = vld [vmem:[#allocation2 + $0xbf0] sm:$0xff]
    %v2297 = vld [vmem:[#allocation2 + $0xbf8] sm:$0xff]
    %v2298 = vld [vmem:[#allocation2 + $0xc00] sm:$0xff]
    %v2299 = vld [vmem:[#allocation2 + $0xc08] sm:$0xff]
    %v2300 = vld [vmem:[#allocation2 + $0xc10] sm:$0xff]
    %v2301 = vld [vmem:[#allocation2 + $0xc18] sm:$0xff]
    %v2302 = vld [vmem:[#allocation2 + $0xc20] sm:$0xff]
    %v2303 = vld [vmem:[#allocation2 + $0xc28] sm:$0xff]
    %v2304 = vld [vmem:[#allocation2 + $0xc30] sm:$0xff]
    %v2305 = vld [vmem:[#allocation2 + $0xc38] sm:$0xff]
    %v2306 = vld [vmem:[#allocation2 + $0xc40] sm:$0xff]
    %v2307 = vld [vmem:[#allocation2 + $0xc48] sm:$0xff]
    %v2308 = vld [vmem:[#allocation2 + $0xc50] sm:$0xff]
    %v2309 = vld [vmem:[#allocation2 + $0xc58] sm:$0xff]
    %v2310 = vld [vmem:[#allocation2 + $0xc60] sm:$0xff]
    %v2311 = vld [vmem:[#allocation2 + $0xc68] sm:$0xff]
    %v2312 = vld [vmem:[#allocation2 + $0xc70] sm:$0xff]
    %v2313 = vld [vmem:[#allocation2 + $0xc78] sm:$0xff]
    %s2314 = scalar_lea.vmem [#allocation4], 2
    %v2315 = vld [vmem:[%s2314] ss:$8 sm:$0xf]
    %v2317 = vlaneseq
    %v2318 = vshrl.u32 %v2317, 7
    %v2319 = vsub.s32 0, %v2318
    %v2320 = vrot.slane %v2315, %v2319
    %v2321 = vlaneseq
    %v2322 = vshrl.u32 %v2321, 7
    %v2323 = vsub.s32 1, %v2322
    %v2324 = vrot.slane %v2315, %v2323
    %v2325 = vlaneseq
    %v2326 = vshrl.u32 %v2325, 7
    %v2327 = vsub.s32 2, %v2326
    %v2328 = vrot.slane %v2315, %v2327
    %v2329 = vlaneseq
    %v2330 = vshrl.u32 %v2329, 7
    %v2331 = vsub.s32 3, %v2330
    %v2332 = vrot.slane %v2315, %v2331
    %v2465 = vunpack.c.l.b16 %v2186
    %v2466 = vunpack.c.h.b16 %v2186
    %v2467 = vunpack.c.l.b16 %v2187
    %v2468 = vunpack.c.h.b16 %v2187
    %v2469 = vunpack.c.l.b16 %v2188
    %v2470 = vunpack.c.h.b16 %v2188
    %v2471 = vunpack.c.l.b16 %v2189
    %v2472 = vunpack.c.h.b16 %v2189
    %v2473 = vunpack.c.l.b16 %v2190
    %v2474 = vunpack.c.h.b16 %v2190
    %v2475 = vunpack.c.l.b16 %v2191
    %v2476 = vunpack.c.h.b16 %v2191
    %v2477 = vunpack.c.l.b16 %v2192
    %v2478 = vunpack.c.h.b16 %v2192
    %v2479 = vunpack.c.l.b16 %v2193
    %v2480 = vunpack.c.h.b16 %v2193
    %v2481 = vunpack.c.l.b16 %v2194
    %v2482 = vunpack.c.h.b16 %v2194
    %v2483 = vunpack.c.l.b16 %v2195
    %v2484 = vunpack.c.h.b16 %v2195
    %v2485 = vunpack.c.l.b16 %v2196
    %v2486 = vunpack.c.h.b16 %v2196
    %v2487 = vunpack.c.l.b16 %v2197
    %v2488 = vunpack.c.h.b16 %v2197
    %v2489 = vunpack.c.l.b16 %v2198
    %v2490 = vunpack.c.h.b16 %v2198
    %v2491 = vunpack.c.l.b16 %v2199
    %v2492 = vunpack.c.h.b16 %v2199
    %v2493 = vunpack.c.l.b16 %v2200
    %v2494 = vunpack.c.h.b16 %v2200
    %v2495 = vunpack.c.l.b16 %v2201
    %v2496 = vunpack.c.h.b16 %v2201
    %v2497 = vunpack.c.l.b16 %v2202
    %v2498 = vunpack.c.h.b16 %v2202
    %v2499 = vunpack.c.l.b16 %v2203
    %v2500 = vunpack.c.h.b16 %v2203
    %v2501 = vunpack.c.l.b16 %v2204
    %v2502 = vunpack.c.h.b16 %v2204
    %v2503 = vunpack.c.l.b16 %v2205
    %v2504 = vunpack.c.h.b16 %v2205
    %v2505 = vunpack.c.l.b16 %v2206
    %v2506 = vunpack.c.h.b16 %v2206
    %v2507 = vunpack.c.l.b16 %v2207
    %v2508 = vunpack.c.h.b16 %v2207
    %v2509 = vunpack.c.l.b16 %v2208
    %v2510 = vunpack.c.h.b16 %v2208
    %v2511 = vunpack.c.l.b16 %v2209
    %v2512 = vunpack.c.h.b16 %v2209
    %v2513 = vunpack.c.l.b16 %v2210
    %v2514 = vunpack.c.h.b16 %v2210
    %v2515 = vunpack.c.l.b16 %v2211
    %v2516 = vunpack.c.h.b16 %v2211
    %v2517 = vunpack.c.l.b16 %v2212
    %v2518 = vunpack.c.h.b16 %v2212
    %v2519 = vunpack.c.l.b16 %v2213
    %v2520 = vunpack.c.h.b16 %v2213
    %v2521 = vunpack.c.l.b16 %v2214
    %v2522 = vunpack.c.h.b16 %v2214
    %v2523 = vunpack.c.l.b16 %v2215
    %v2524 = vunpack.c.h.b16 %v2215
    %v2525 = vunpack.c.l.b16 %v2216
    %v2526 = vunpack.c.h.b16 %v2216
    %v2527 = vunpack.c.l.b16 %v2217
    %v2528 = vunpack.c.h.b16 %v2217
    %v2529 = vunpack.c.l.b16 %v2218
    %v2530 = vunpack.c.h.b16 %v2218
    %v2531 = vunpack.c.l.b16 %v2219
    %v2532 = vunpack.c.h.b16 %v2219
    %v2533 = vunpack.c.l.b16 %v2220
    %v2534 = vunpack.c.h.b16 %v2220
    %v2535 = vunpack.c.l.b16 %v2221
    %v2536 = vunpack.c.h.b16 %v2221
    %v2537 = vunpack.c.l.b16 %v2222
    %v2538 = vunpack.c.h.b16 %v2222
    %v2539 = vunpack.c.l.b16 %v2223
    %v2540 = vunpack.c.h.b16 %v2223
    %v2541 = vunpack.c.l.b16 %v2224
    %v2542 = vunpack.c.h.b16 %v2224
    %v2543 = vunpack.c.l.b16 %v2225
    %v2544 = vunpack.c.h.b16 %v2225
    %v2545 = vunpack.c.l.b16 %v2226
    %v2546 = vunpack.c.h.b16 %v2226
    %v2547 = vunpack.c.l.b16 %v2227
    %v2548 = vunpack.c.h.b16 %v2227
    %v2549 = vunpack.c.l.b16 %v2228
    %v2550 = vunpack.c.h.b16 %v2228
    %v2551 = vunpack.c.l.b16 %v2229
    %v2552 = vunpack.c.h.b16 %v2229
    %v2553 = vunpack.c.l.b16 %v2230
    %v2554 = vunpack.c.h.b16 %v2230
    %v2555 = vunpack.c.l.b16 %v2231
    %v2556 = vunpack.c.h.b16 %v2231
    %v2557 = vunpack.c.l.b16 %v2232
    %v2558 = vunpack.c.h.b16 %v2232
    %v2559 = vunpack.c.l.b16 %v2233
    %v2560 = vunpack.c.h.b16 %v2233
    %v2561 = vunpack.c.l.b16 %v2234
    %v2562 = vunpack.c.h.b16 %v2234
    %v2563 = vunpack.c.l.b16 %v2235
    %v2564 = vunpack.c.h.b16 %v2235
    %v2565 = vunpack.c.l.b16 %v2236
    %v2566 = vunpack.c.h.b16 %v2236
    %v2567 = vunpack.c.l.b16 %v2237
    %v2568 = vunpack.c.h.b16 %v2237
    %v2569 = vunpack.c.l.b16 %v2238
    %v2570 = vunpack.c.h.b16 %v2238
    %v2571 = vunpack.c.l.b16 %v2239
    %v2572 = vunpack.c.h.b16 %v2239
    %v2573 = vunpack.c.l.b16 %v2240
    %v2574 = vunpack.c.h.b16 %v2240
    %v2575 = vunpack.c.l.b16 %v2241
    %v2576 = vunpack.c.h.b16 %v2241
    %v2577 = vunpack.c.l.b16 %v2242
    %v2578 = vunpack.c.h.b16 %v2242
    %v2579 = vunpack.c.l.b16 %v2243
    %v2580 = vunpack.c.h.b16 %v2243
    %v2581 = vunpack.c.l.b16 %v2244
    %v2582 = vunpack.c.h.b16 %v2244
    %v2583 = vunpack.c.l.b16 %v2245
    %v2584 = vunpack.c.h.b16 %v2245
    %v2585 = vunpack.c.l.b16 %v2246
    %v2586 = vunpack.c.h.b16 %v2246
    %v2587 = vunpack.c.l.b16 %v2247
    %v2588 = vunpack.c.h.b16 %v2247
    %v2589 = vunpack.c.l.b16 %v2248
    %v2590 = vunpack.c.h.b16 %v2248
    %v2591 = vunpack.c.l.b16 %v2249
    %v2592 = vunpack.c.h.b16 %v2249
    %v2593 = vunpack.c.l.b16 %v2250
    %v2594 = vunpack.c.h.b16 %v2250
    %v2595 = vunpack.c.l.b16 %v2251
    %v2596 = vunpack.c.h.b16 %v2251
    %v2597 = vunpack.c.l.b16 %v2252
    %v2598 = vunpack.c.h.b16 %v2252
    %v2599 = vunpack.c.l.b16 %v2253
    %v2600 = vunpack.c.h.b16 %v2253
    %v2601 = vunpack.c.l.b16 %v2254
    %v2602 = vunpack.c.h.b16 %v2254
    %v2603 = vunpack.c.l.b16 %v2255
    %v2604 = vunpack.c.h.b16 %v2255
    %v2605 = vunpack.c.l.b16 %v2256
    %v2606 = vunpack.c.h.b16 %v2256
    %v2607 = vunpack.c.l.b16 %v2257
    %v2608 = vunpack.c.h.b16 %v2257
    %v2609 = vunpack.c.l.b16 %v2258
    %v2610 = vunpack.c.h.b16 %v2258
    %v2611 = vunpack.c.l.b16 %v2259
    %v2612 = vunpack.c.h.b16 %v2259
    %v2613 = vunpack.c.l.b16 %v2260
    %v2614 = vunpack.c.h.b16 %v2260
    %v2615 = vunpack.c.l.b16 %v2261
    %v2616 = vunpack.c.h.b16 %v2261
    %v2617 = vunpack.c.l.b16 %v2262
    %v2618 = vunpack.c.h.b16 %v2262
    %v2619 = vunpack.c.l.b16 %v2263
    %v2620 = vunpack.c.h.b16 %v2263
    %v2621 = vunpack.c.l.b16 %v2264
    %v2622 = vunpack.c.h.b16 %v2264
    %v2623 = vunpack.c.l.b16 %v2265
    %v2624 = vunpack.c.h.b16 %v2265
    %v2625 = vunpack.c.l.b16 %v2266
    %v2626 = vunpack.c.h.b16 %v2266
    %v2627 = vunpack.c.l.b16 %v2267
    %v2628 = vunpack.c.h.b16 %v2267
    %v2629 = vunpack.c.l.b16 %v2268
    %v2630 = vunpack.c.h.b16 %v2268
    %v2631 = vunpack.c.l.b16 %v2269
    %v2632 = vunpack.c.h.b16 %v2269
    %v2633 = vunpack.c.l.b16 %v2270
    %v2634 = vunpack.c.h.b16 %v2270
    %v2635 = vunpack.c.l.b16 %v2271
    %v2636 = vunpack.c.h.b16 %v2271
    %v2637 = vunpack.c.l.b16 %v2272
    %v2638 = vunpack.c.h.b16 %v2272
    %v2639 = vunpack.c.l.b16 %v2273
    %v2640 = vunpack.c.h.b16 %v2273
    %v2641 = vunpack.c.l.b16 %v2274
    %v2642 = vunpack.c.h.b16 %v2274
    %v2643 = vunpack.c.l.b16 %v2275
    %v2644 = vunpack.c.h.b16 %v2275
    %v2645 = vunpack.c.l.b16 %v2276
    %v2646 = vunpack.c.h.b16 %v2276
    %v2647 = vunpack.c.l.b16 %v2277
    %v2648 = vunpack.c.h.b16 %v2277
    %v2649 = vunpack.c.l.b16 %v2278
    %v2650 = vunpack.c.h.b16 %v2278
    %v2651 = vunpack.c.l.b16 %v2279
    %v2652 = vunpack.c.h.b16 %v2279
    %v2653 = vunpack.c.l.b16 %v2280
    %v2654 = vunpack.c.h.b16 %v2280
    %v2655 = vunpack.c.l.b16 %v2281
    %v2656 = vunpack.c.h.b16 %v2281
    %v2657 = vunpack.c.l.b16 %v2282
    %v2658 = vunpack.c.h.b16 %v2282
    %v2659 = vunpack.c.l.b16 %v2283
    %v2660 = vunpack.c.h.b16 %v2283
    %v2661 = vunpack.c.l.b16 %v2284
    %v2662 = vunpack.c.h.b16 %v2284
    %v2663 = vunpack.c.l.b16 %v2285
    %v2664 = vunpack.c.h.b16 %v2285
    %v2665 = vunpack.c.l.b16 %v2286
    %v2666 = vunpack.c.h.b16 %v2286
    %v2667 = vunpack.c.l.b16 %v2287
    %v2668 = vunpack.c.h.b16 %v2287
    %v2669 = vunpack.c.l.b16 %v2288
    %v2670 = vunpack.c.h.b16 %v2288
    %v2671 = vunpack.c.l.b16 %v2289
    %v2672 = vunpack.c.h.b16 %v2289
    %v2673 = vunpack.c.l.b16 %v2290
    %v2674 = vunpack.c.h.b16 %v2290
    %v2675 = vunpack.c.l.b16 %v2291
    %v2676 = vunpack.c.h.b16 %v2291
    %v2677 = vunpack.c.l.b16 %v2292
    %v2678 = vunpack.c.h.b16 %v2292
    %v2679 = vunpack.c.l.b16 %v2293
    %v2680 = vunpack.c.h.b16 %v2293
    %v2681 = vunpack.c.l.b16 %v2294
    %v2682 = vunpack.c.h.b16 %v2294
    %v2683 = vunpack.c.l.b16 %v2295
    %v2684 = vunpack.c.h.b16 %v2295
    %v2685 = vunpack.c.l.b16 %v2296
    %v2686 = vunpack.c.h.b16 %v2296
    %v2687 = vunpack.c.l.b16 %v2297
    %v2688 = vunpack.c.h.b16 %v2297
    %v2689 = vunpack.c.l.b16 %v2298
    %v2690 = vunpack.c.h.b16 %v2298
    %v2691 = vunpack.c.l.b16 %v2299
    %v2692 = vunpack.c.h.b16 %v2299
    %v2693 = vunpack.c.l.b16 %v2300
    %v2694 = vunpack.c.h.b16 %v2300
    %v2695 = vunpack.c.l.b16 %v2301
    %v2696 = vunpack.c.h.b16 %v2301
    %v2697 = vunpack.c.l.b16 %v2302
    %v2698 = vunpack.c.h.b16 %v2302
    %v2699 = vunpack.c.l.b16 %v2303
    %v2700 = vunpack.c.h.b16 %v2303
    %v2701 = vunpack.c.l.b16 %v2304
    %v2702 = vunpack.c.h.b16 %v2304
    %v2703 = vunpack.c.l.b16 %v2305
    %v2704 = vunpack.c.h.b16 %v2305
    %v2705 = vunpack.c.l.b16 %v2306
    %v2706 = vunpack.c.h.b16 %v2306
    %v2707 = vunpack.c.l.b16 %v2307
    %v2708 = vunpack.c.h.b16 %v2307
    %v2709 = vunpack.c.l.b16 %v2308
    %v2710 = vunpack.c.h.b16 %v2308
    %v2711 = vunpack.c.l.b16 %v2309
    %v2712 = vunpack.c.h.b16 %v2309
    %v2713 = vunpack.c.l.b16 %v2310
    %v2714 = vunpack.c.h.b16 %v2310
    %v2715 = vunpack.c.l.b16 %v2311
    %v2716 = vunpack.c.h.b16 %v2311
    %v2717 = vunpack.c.l.b16 %v2312
    %v2718 = vunpack.c.h.b16 %v2312
    %v2719 = vunpack.c.l.b16 %v2313
    %v2720 = vunpack.c.h.b16 %v2313
    %v2721 = vpack.c.b16 %v2469, %v2465
    %v2722 = vpack.c.b16 %v2470, %v2466
    %v2723 = vpack.c.b16 %v2471, %v2467
    %v2724 = vpack.c.b16 %v2472, %v2468
    %v2725 = vpack.c.b16 %v2477, %v2473
    %v2726 = vpack.c.b16 %v2478, %v2474
    %v2727 = vpack.c.b16 %v2479, %v2475
    %v2728 = vpack.c.b16 %v2480, %v2476
    %v2729 = vpack.c.b16 %v2485, %v2481
    %v2730 = vpack.c.b16 %v2486, %v2482
    %v2731 = vpack.c.b16 %v2487, %v2483
    %v2732 = vpack.c.b16 %v2488, %v2484
    %v2733 = vpack.c.b16 %v2493, %v2489
    %v2734 = vpack.c.b16 %v2494, %v2490
    %v2735 = vpack.c.b16 %v2495, %v2491
    %v2736 = vpack.c.b16 %v2496, %v2492
    %v2737 = vpack.c.b16 %v2501, %v2497
    %v2738 = vpack.c.b16 %v2502, %v2498
    %v2739 = vpack.c.b16 %v2503, %v2499
    %v2740 = vpack.c.b16 %v2504, %v2500
    %v2741 = vpack.c.b16 %v2509, %v2505
    %v2742 = vpack.c.b16 %v2510, %v2506
    %v2743 = vpack.c.b16 %v2511, %v2507
    %v2744 = vpack.c.b16 %v2512, %v2508
    %v2745 = vpack.c.b16 %v2517, %v2513
    %v2746 = vpack.c.b16 %v2518, %v2514
    %v2747 = vpack.c.b16 %v2519, %v2515
    %v2748 = vpack.c.b16 %v2520, %v2516
    %v2749 = vpack.c.b16 %v2525, %v2521
    %v2750 = vpack.c.b16 %v2526, %v2522
    %v2751 = vpack.c.b16 %v2527, %v2523
    %v2752 = vpack.c.b16 %v2528, %v2524
    %v2753 = vpack.c.b16 %v2533, %v2529
    %v2754 = vpack.c.b16 %v2534, %v2530
    %v2755 = vpack.c.b16 %v2535, %v2531
    %v2756 = vpack.c.b16 %v2536, %v2532
    %v2757 = vpack.c.b16 %v2541, %v2537
    %v2758 = vpack.c.b16 %v2542, %v2538
    %v2759 = vpack.c.b16 %v2543, %v2539
    %v2760 = vpack.c.b16 %v2544, %v2540
    %v2761 = vpack.c.b16 %v2549, %v2545
    %v2762 = vpack.c.b16 %v2550, %v2546
    %v2763 = vpack.c.b16 %v2551, %v2547
    %v2764 = vpack.c.b16 %v2552, %v2548
    %v2765 = vpack.c.b16 %v2557, %v2553
    %v2766 = vpack.c.b16 %v2558, %v2554
    %v2767 = vpack.c.b16 %v2559, %v2555
    %v2768 = vpack.c.b16 %v2560, %v2556
    %v2769 = vpack.c.b16 %v2565, %v2561
    %v2770 = vpack.c.b16 %v2566, %v2562
    %v2771 = vpack.c.b16 %v2567, %v2563
    %v2772 = vpack.c.b16 %v2568, %v2564
    %v2773 = vpack.c.b16 %v2573, %v2569
    %v2774 = vpack.c.b16 %v2574, %v2570
    %v2775 = vpack.c.b16 %v2575, %v2571
    %v2776 = vpack.c.b16 %v2576, %v2572
    %v2777 = vpack.c.b16 %v2581, %v2577
    %v2778 = vpack.c.b16 %v2582, %v2578
    %v2779 = vpack.c.b16 %v2583, %v2579
    %v2780 = vpack.c.b16 %v2584, %v2580
    %v2781 = vpack.c.b16 %v2589, %v2585
    %v2782 = vpack.c.b16 %v2590, %v2586
    %v2783 = vpack.c.b16 %v2591, %v2587
    %v2784 = vpack.c.b16 %v2592, %v2588
    %v2785 = vpack.c.b16 %v2597, %v2593
    %v2786 = vpack.c.b16 %v2598, %v2594
    %v2787 = vpack.c.b16 %v2599, %v2595
    %v2788 = vpack.c.b16 %v2600, %v2596
    %v2789 = vpack.c.b16 %v2605, %v2601
    %v2790 = vpack.c.b16 %v2606, %v2602
    %v2791 = vpack.c.b16 %v2607, %v2603
    %v2792 = vpack.c.b16 %v2608, %v2604
    %v2793 = vpack.c.b16 %v2613, %v2609
    %v2794 = vpack.c.b16 %v2614, %v2610
    %v2795 = vpack.c.b16 %v2615, %v2611
    %v2796 = vpack.c.b16 %v2616, %v2612
    %v2797 = vpack.c.b16 %v2621, %v2617
    %v2798 = vpack.c.b16 %v2622, %v2618
    %v2799 = vpack.c.b16 %v2623, %v2619
    %v2800 = vpack.c.b16 %v2624, %v2620
    %v2801 = vpack.c.b16 %v2629, %v2625
    %v2802 = vpack.c.b16 %v2630, %v2626
    %v2803 = vpack.c.b16 %v2631, %v2627
    %v2804 = vpack.c.b16 %v2632, %v2628
    %v2805 = vpack.c.b16 %v2637, %v2633
    %v2806 = vpack.c.b16 %v2638, %v2634
    %v2807 = vpack.c.b16 %v2639, %v2635
    %v2808 = vpack.c.b16 %v2640, %v2636
    %v2809 = vpack.c.b16 %v2645, %v2641
    %v2810 = vpack.c.b16 %v2646, %v2642
    %v2811 = vpack.c.b16 %v2647, %v2643
    %v2812 = vpack.c.b16 %v2648, %v2644
    %v2813 = vpack.c.b16 %v2653, %v2649
    %v2814 = vpack.c.b16 %v2654, %v2650
    %v2815 = vpack.c.b16 %v2655, %v2651
    %v2816 = vpack.c.b16 %v2656, %v2652
    %v2817 = vpack.c.b16 %v2661, %v2657
    %v2818 = vpack.c.b16 %v2662, %v2658
    %v2819 = vpack.c.b16 %v2663, %v2659
    %v2820 = vpack.c.b16 %v2664, %v2660
    %v2821 = vpack.c.b16 %v2669, %v2665
    %v2822 = vpack.c.b16 %v2670, %v2666
    %v2823 = vpack.c.b16 %v2671, %v2667
    %v2824 = vpack.c.b16 %v2672, %v2668
    %v2825 = vpack.c.b16 %v2677, %v2673
    %v2826 = vpack.c.b16 %v2678, %v2674
    %v2827 = vpack.c.b16 %v2679, %v2675
    %v2828 = vpack.c.b16 %v2680, %v2676
    %v2829 = vpack.c.b16 %v2685, %v2681
    %v2830 = vpack.c.b16 %v2686, %v2682
    %v2831 = vpack.c.b16 %v2687, %v2683
    %v2832 = vpack.c.b16 %v2688, %v2684
    %v2833 = vpack.c.b16 %v2693, %v2689
    %v2834 = vpack.c.b16 %v2694, %v2690
    %v2835 = vpack.c.b16 %v2695, %v2691
    %v2836 = vpack.c.b16 %v2696, %v2692
    %v2837 = vpack.c.b16 %v2701, %v2697
    %v2838 = vpack.c.b16 %v2702, %v2698
    %v2839 = vpack.c.b16 %v2703, %v2699
    %v2840 = vpack.c.b16 %v2704, %v2700
    %v2841 = vpack.c.b16 %v2709, %v2705
    %v2842 = vpack.c.b16 %v2710, %v2706
    %v2843 = vpack.c.b16 %v2711, %v2707
    %v2844 = vpack.c.b16 %v2712, %v2708
    %v2845 = vpack.c.b16 %v2717, %v2713
    %v2846 = vpack.c.b16 %v2718, %v2714
    %v2847 = vpack.c.b16 %v2719, %v2715
    %v2848 = vpack.c.b16 %v2720, %v2716
    %2977 = vmatprep.subr.bf16.mxu0 %v2722
    %2978 = vmatpush1.bf16.msra.mxu0 %v2721
    %2979 = vmatprep.subr.bf16.mxu0 %v2726
    %2980 = vmatpush1.bf16.msra.mxu0 %v2725
    %2981 = vmatprep.subr.bf16.mxu0 %v2730
    %2982 = vmatpush1.bf16.msra.mxu0 %v2729
    %2983 = vmatprep.subr.bf16.mxu0 %v2734
    %2984 = vmatpush1.bf16.msra.mxu0 %v2733
    %2985 = vmatprep.subr.bf16.mxu0 %v2738
    %2986 = vmatpush1.bf16.msra.mxu0 %v2737
    %2987 = vmatprep.subr.bf16.mxu0 %v2742
    %2988 = vmatpush1.bf16.msra.mxu0 %v2741
    %2989 = vmatprep.subr.bf16.mxu0 %v2746
    %2990 = vmatpush1.bf16.msra.mxu0 %v2745
    %2991 = vmatprep.subr.bf16.mxu0 %v2750
    %2992 = vmatpush1.bf16.msra.mxu0 %v2749
    %2993 = vmatprep.subr.bf16.mxu0 %v2754
    %2994 = vmatpush1.bf16.msra.mxu0 %v2753
    %2995 = vmatprep.subr.bf16.mxu0 %v2758
    %2996 = vmatpush1.bf16.msra.mxu0 %v2757
    %2997 = vmatprep.subr.bf16.mxu0 %v2762
    %2998 = vmatpush1.bf16.msra.mxu0 %v2761
    %2999 = vmatprep.subr.bf16.mxu0 %v2766
    %3000 = vmatpush1.bf16.msra.mxu0 %v2765
    %3001 = vmatprep.subr.bf16.mxu0 %v2770
    %3002 = vmatpush1.bf16.msra.mxu0 %v2769
    %3003 = vmatprep.subr.bf16.mxu0 %v2774
    %3004 = vmatpush1.bf16.msra.mxu0 %v2773
    %3005 = vmatprep.subr.bf16.mxu0 %v2778
    %3006 = vmatpush1.bf16.msra.mxu0 %v2777
    %3007 = vmatprep.subr.bf16.mxu0 %v2782
    %3008 = vmatpush1.bf16.msra.mxu0 %v2781
    %3009 = vmatprep.mubr.bf16.mxu0 %v2183
    %3010 = vmatmul.mubr.bf16.gmra.mrb[0].mxu0 %v2182
    %v3011 = vpop.f32.mrb[0].mxu0
    %v3012 = vadd.f32 %v2320, %v3011
    %v3013 = vpop.f32.mrb[0].mxu0
    %v3014 = vadd.f32 %v2324, %v3013
    %v3015 = vpop.f32.mrb[0].mxu0
    %v3016 = vpop.f32.mrb[0].mxu0
    %3017 = vdwg.mxu0
    %3018 = vmatprep.subr.bf16.mxu0 %v2786
    %3019 = vmatpush1.bf16.msra.mxu0 %v2785
    %3020 = vmatprep.subr.bf16.mxu0 %v2790
    %3021 = vmatpush1.bf16.msra.mxu0 %v2789
    %3022 = vmatprep.subr.bf16.mxu0 %v2794
    %3023 = vmatpush1.bf16.msra.mxu0 %v2793
    %3024 = vmatprep.subr.bf16.mxu0 %v2798
    %3025 = vmatpush1.bf16.msra.mxu0 %v2797
    %3026 = vmatprep.subr.bf16.mxu0 %v2802
    %3027 = vmatpush1.bf16.msra.mxu0 %v2801
    %3028 = vmatprep.subr.bf16.mxu0 %v2806
    %3029 = vmatpush1.bf16.msra.mxu0 %v2805
    %3030 = vmatprep.subr.bf16.mxu0 %v2810
    %3031 = vmatpush1.bf16.msra.mxu0 %v2809
    %3032 = vmatprep.subr.bf16.mxu0 %v2814
    %3033 = vmatpush1.bf16.msra.mxu0 %v2813
    %3034 = vmatprep.subr.bf16.mxu0 %v2818
    %3035 = vmatpush1.bf16.msra.mxu0 %v2817
    %3036 = vmatprep.subr.bf16.mxu0 %v2822
    %3037 = vmatpush1.bf16.msra.mxu0 %v2821
    %3038 = vmatprep.subr.bf16.mxu0 %v2826
    %3039 = vmatpush1.bf16.msra.mxu0 %v2825
    %3040 = vmatprep.subr.bf16.mxu0 %v2830
    %3041 = vmatpush1.bf16.msra.mxu0 %v2829
    %3042 = vmatprep.subr.bf16.mxu0 %v2834
    %3043 = vmatpush1.bf16.msra.mxu0 %v2833
    %3044 = vmatprep.subr.bf16.mxu0 %v2838
    %3045 = vmatpush1.bf16.msra.mxu0 %v2837
    %3046 = vmatprep.subr.bf16.mxu0 %v2842
    %3047 = vmatpush1.bf16.msra.mxu0 %v2841
    %3048 = vmatprep.subr.bf16.mxu0 %v2846
    %3049 = vmatpush1.bf16.msra.mxu0 %v2845
    %3050 = vmatprep.mubr.bf16.mxu0 %v2185
    %3051 = vmatmul.mubr.bf16.gmra.mrb[0].mxu0 %v2184
    %v3052 = vpop.f32.mrb[0].mxu0
    %v3053 = vadd.f32 %v3012, %v3052
    %v3054 = vpop.f32.mrb[0].mxu0
    %v3055 = vadd.f32 %v3014, %v3054
    %v3056 = vpop.f32.mrb[0].mxu0
    %v3057 = vpop.f32.mrb[0].mxu0
    %3058 = vdwg.mxu0
    %3059 = vmatprep.subr.bf16.mxu0 %v2724
    %3060 = vmatpush1.bf16.msra.mxu0 %v2723
    %3061 = vmatprep.subr.bf16.mxu0 %v2728
    %3062 = vmatpush1.bf16.msra.mxu0 %v2727
    %3063 = vmatprep.subr.bf16.mxu0 %v2732
    %3064 = vmatpush1.bf16.msra.mxu0 %v2731
    %3065 = vmatprep.subr.bf16.mxu0 %v2736
    %3066 = vmatpush1.bf16.msra.mxu0 %v2735
    %3067 = vmatprep.subr.bf16.mxu0 %v2740
    %3068 = vmatpush1.bf16.msra.mxu0 %v2739
    %3069 = vmatprep.subr.bf16.mxu0 %v2744
    %3070 = vmatpush1.bf16.msra.mxu0 %v2743
    %3071 = vmatprep.subr.bf16.mxu0 %v2748
    %3072 = vmatpush1.bf16.msra.mxu0 %v2747
    %3073 = vmatprep.subr.bf16.mxu0 %v2752
    %3074 = vmatpush1.bf16.msra.mxu0 %v2751
    %3075 = vmatprep.subr.bf16.mxu0 %v2756
    %3076 = vmatpush1.bf16.msra.mxu0 %v2755
    %3077 = vmatprep.subr.bf16.mxu0 %v2760
    %3078 = vmatpush1.bf16.msra.mxu0 %v2759
    %3079 = vmatprep.subr.bf16.mxu0 %v2764
    %3080 = vmatpush1.bf16.msra.mxu0 %v2763
    %3081 = vmatprep.subr.bf16.mxu0 %v2768
    %3082 = vmatpush1.bf16.msra.mxu0 %v2767
    %3083 = vmatprep.subr.bf16.mxu0 %v2772
    %3084 = vmatpush1.bf16.msra.mxu0 %v2771
    %3085 = vmatprep.subr.bf16.mxu0 %v2776
    %3086 = vmatpush1.bf16.msra.mxu0 %v2775
    %3087 = vmatprep.subr.bf16.mxu0 %v2780
    %3088 = vmatpush1.bf16.msra.mxu0 %v2779
    %3089 = vmatprep.subr.bf16.mxu0 %v2784
    %3090 = vmatpush1.bf16.msra.mxu0 %v2783
    %3091 = vmatprep.mubr.bf16.mxu0 %v2183
    %3092 = vmatmul.mubr.bf16.gmra.mrb[0].mxu0 %v2182
    %v3093 = vpop.f32.mrb[0].mxu0
    %v3094 = vadd.f32 %v2328, %v3093
    %v3095 = vpop.f32.mrb[0].mxu0
    %v3096 = vadd.f32 %v2332, %v3095
    %v3097 = vpop.f32.mrb[0].mxu0
    %v3098 = vpop.f32.mrb[0].mxu0
    %3099 = vdwg.mxu0
    %3100 = vmatprep.subr.bf16.mxu0 %v2788
    %3101 = vmatpush1.bf16.msra.mxu0 %v2787
    %3102 = vmatprep.subr.bf16.mxu0 %v2792
    %3103 = vmatpush1.bf16.msra.mxu0 %v2791
    %3104 = vmatprep.subr.bf16.mxu0 %v2796
    %3105 = vmatpush1.bf16.msra.mxu0 %v2795
    %3106 = vmatprep.subr.bf16.mxu0 %v2800
    %3107 = vmatpush1.bf16.msra.mxu0 %v2799
    %3108 = vmatprep.subr.bf16.mxu0 %v2804
    %3109 = vmatpush1.bf16.msra.mxu0 %v2803
    %3110 = vmatprep.subr.bf16.mxu0 %v2808
    %3111 = vmatpush1.bf16.msra.mxu0 %v2807
    %3112 = vmatprep.subr.bf16.mxu0 %v2812
    %3113 = vmatpush1.bf16.msra.mxu0 %v2811
    %3114 = vmatprep.subr.bf16.mxu0 %v2816
    %3115 = vmatpush1.bf16.msra.mxu0 %v2815
    %3116 = vmatprep.subr.bf16.mxu0 %v2820
    %3117 = vmatpush1.bf16.msra.mxu0 %v2819
    %3118 = vmatprep.subr.bf16.mxu0 %v2824
    %3119 = vmatpush1.bf16.msra.mxu0 %v2823
    %3120 = vmatprep.subr.bf16.mxu0 %v2828
    %3121 = vmatpush1.bf16.msra.mxu0 %v2827
    %3122 = vmatprep.subr.bf16.mxu0 %v2832
    %3123 = vmatpush1.bf16.msra.mxu0 %v2831
    %3124 = vmatprep.subr.bf16.mxu0 %v2836
    %3125 = vmatpush1.bf16.msra.mxu0 %v2835
    %3126 = vmatprep.subr.bf16.mxu0 %v2840
    %3127 = vmatpush1.bf16.msra.mxu0 %v2839
    %3128 = vmatprep.subr.bf16.mxu0 %v2844
    %3129 = vmatpush1.bf16.msra.mxu0 %v2843
    %3130 = vmatprep.subr.bf16.mxu0 %v2848
    %3131 = vmatpush1.bf16.msra.mxu0 %v2847
    %3132 = vmatprep.mubr.bf16.mxu0 %v2185
    %3133 = vmatmul.mubr.bf16.gmra.mrb[0].mxu0 %v2184
    %v3134 = vpop.f32.mrb[0].mxu0
    %v3135 = vadd.f32 %v3094, %v3134
    %v3136 = vpop.f32.mrb[0].mxu0
    %v3137 = vadd.f32 %v3096, %v3136
    %v3138 = vpop.f32.mrb[0].mxu0
    %v3139 = vpop.f32.mrb[0].mxu0
    %3140 = vdwg.mxu0
    %vm3141 = vcmp.gt.f32.partialorder %v3053, 0.0
    %vm3142 = vcmp.gt.f32.partialorder %v3055, 0.0
    %vm3143 = vcmp.gt.f32.partialorder %v3135, 0.0
    %vm3144 = vcmp.gt.f32.partialorder %v3137, 0.0
    %v3145 = vmul.f32 %v3053, 0.01
    %v3146 = vmul.f32 %v3055, 0.01
    %v3147 = vmul.f32 %v3135, 0.01
    %v3148 = vmul.f32 %v3137, 0.01
    %v3149 = vsel %vm3141, %v3053, %v3145
    %v3150 = vsel %vm3142, %v3055, %v3146
    %v3151 = vsel %vm3143, %v3135, %v3147
    %v3152 = vsel %vm3144, %v3137, %v3148
    %v3153 = vpack.c.bf16 %v3149, %v3149
    %v3154 = vpack.c.bf16 %v3150, %v3150
    %v3155 = vpack.c.bf16 %v3151, %v3151
    %v3156 = vpack.c.bf16 %v3152, %v3152
    %v3157 = vld [vmem:[#allocation2 + $0xc80] sm:$0xff]
    %v3158 = vld [vmem:[#allocation2 + $0xc88] sm:$0xff]
    %v3159 = vld [vmem:[#allocation2 + $0xc90] sm:$0xff]
    %v3160 = vld [vmem:[#allocation2 + $0xc98] sm:$0xff]
    %v3161 = vld [vmem:[#allocation2 + $0xca0] sm:$0xff]
    %v3162 = vld [vmem:[#allocation2 + $0xca8] sm:$0xff]
    %v3163 = vld [vmem:[#allocation2 + $0xcb0] sm:$0xff]
    %v3164 = vld [vmem:[#allocation2 + $0xcb8] sm:$0xff]
    %v3165 = vld [vmem:[#allocation2 + $0xcc0] sm:$0xff]
    %v3166 = vld [vmem:[#allocation2 + $0xcc8] sm:$0xff]
    %v3167 = vld [vmem:[#allocation2 + $0xcd0] sm:$0xff]
    %v3168 = vld [vmem:[#allocation2 + $0xcd8] sm:$0xff]
    %v3169 = vld [vmem:[#allocation2 + $0xce0] sm:$0xff]
    %v3170 = vld [vmem:[#allocation2 + $0xce8] sm:$0xff]
    %v3171 = vld [vmem:[#allocation2 + $0xcf0] sm:$0xff]
    %v3172 = vld [vmem:[#allocation2 + $0xcf8] sm:$0xff]
    %v3173 = vld [vmem:[#allocation2 + $0xd00] sm:$0xff]
    %v3174 = vld [vmem:[#allocation2 + $0xd08] sm:$0xff]
    %v3175 = vld [vmem:[#allocation2 + $0xd10] sm:$0xff]
    %v3176 = vld [vmem:[#allocation2 + $0xd18] sm:$0xff]
    %v3177 = vld [vmem:[#allocation2 + $0xd20] sm:$0xff]
    %v3178 = vld [vmem:[#allocation2 + $0xd28] sm:$0xff]
    %v3179 = vld [vmem:[#allocation2 + $0xd30] sm:$0xff]
    %v3180 = vld [vmem:[#allocation2 + $0xd38] sm:$0xff]
    %v3181 = vld [vmem:[#allocation2 + $0xd40] sm:$0xff]
    %v3182 = vld [vmem:[#allocation2 + $0xd48] sm:$0xff]
    %v3183 = vld [vmem:[#allocation2 + $0xd50] sm:$0xff]
    %v3184 = vld [vmem:[#allocation2 + $0xd58] sm:$0xff]
    %v3185 = vld [vmem:[#allocation2 + $0xd60] sm:$0xff]
    %v3186 = vld [vmem:[#allocation2 + $0xd68] sm:$0xff]
    %v3187 = vld [vmem:[#allocation2 + $0xd70] sm:$0xff]
    %v3188 = vld [vmem:[#allocation2 + $0xd78] sm:$0xff]
    %v3189 = vld [vmem:[#allocation2 + $0xd80] sm:$0xff]
    %v3190 = vld [vmem:[#allocation2 + $0xd88] sm:$0xff]
    %v3191 = vld [vmem:[#allocation2 + $0xd90] sm:$0xff]
    %v3192 = vld [vmem:[#allocation2 + $0xd98] sm:$0xff]
    %v3193 = vld [vmem:[#allocation2 + $0xda0] sm:$0xff]
    %v3194 = vld [vmem:[#allocation2 + $0xda8] sm:$0xff]
    %v3195 = vld [vmem:[#allocation2 + $0xdb0] sm:$0xff]
    %v3196 = vld [vmem:[#allocation2 + $0xdb8] sm:$0xff]
    %v3197 = vld [vmem:[#allocation2 + $0xdc0] sm:$0xff]
    %v3198 = vld [vmem:[#allocation2 + $0xdc8] sm:$0xff]
    %v3199 = vld [vmem:[#allocation2 + $0xdd0] sm:$0xff]
    %v3200 = vld [vmem:[#allocation2 + $0xdd8] sm:$0xff]
    %v3201 = vld [vmem:[#allocation2 + $0xde0] sm:$0xff]
    %v3202 = vld [vmem:[#allocation2 + $0xde8] sm:$0xff]
    %v3203 = vld [vmem:[#allocation2 + $0xdf0] sm:$0xff]
    %v3204 = vld [vmem:[#allocation2 + $0xdf8] sm:$0xff]
    %v3205 = vld [vmem:[#allocation2 + $0xe00] sm:$0xff]
    %v3206 = vld [vmem:[#allocation2 + $0xe08] sm:$0xff]
    %v3207 = vld [vmem:[#allocation2 + $0xe10] sm:$0xff]
    %v3208 = vld [vmem:[#allocation2 + $0xe18] sm:$0xff]
    %v3209 = vld [vmem:[#allocation2 + $0xe20] sm:$0xff]
    %v3210 = vld [vmem:[#allocation2 + $0xe28] sm:$0xff]
    %v3211 = vld [vmem:[#allocation2 + $0xe30] sm:$0xff]
    %v3212 = vld [vmem:[#allocation2 + $0xe38] sm:$0xff]
    %v3213 = vld [vmem:[#allocation2 + $0xe40] sm:$0xff]
    %v3214 = vld [vmem:[#allocation2 + $0xe48] sm:$0xff]
    %v3215 = vld [vmem:[#allocation2 + $0xe50] sm:$0xff]
    %v3216 = vld [vmem:[#allocation2 + $0xe58] sm:$0xff]
    %v3217 = vld [vmem:[#allocation2 + $0xe60] sm:$0xff]
    %v3218 = vld [vmem:[#allocation2 + $0xe68] sm:$0xff]
    %v3219 = vld [vmem:[#allocation2 + $0xe70] sm:$0xff]
    %v3220 = vld [vmem:[#allocation2 + $0xe78] sm:$0xff]
    %v3221 = vld [vmem:[#allocation2 + $0xe80] sm:$0xff]
    %v3222 = vld [vmem:[#allocation2 + $0xe88] sm:$0xff]
    %v3223 = vld [vmem:[#allocation2 + $0xe90] sm:$0xff]
    %v3224 = vld [vmem:[#allocation2 + $0xe98] sm:$0xff]
    %v3225 = vld [vmem:[#allocation2 + $0xea0] sm:$0xff]
    %v3226 = vld [vmem:[#allocation2 + $0xea8] sm:$0xff]
    %v3227 = vld [vmem:[#allocation2 + $0xeb0] sm:$0xff]
    %v3228 = vld [vmem:[#allocation2 + $0xeb8] sm:$0xff]
    %v3229 = vld [vmem:[#allocation2 + $0xec0] sm:$0xff]
    %v3230 = vld [vmem:[#allocation2 + $0xec8] sm:$0xff]
    %v3231 = vld [vmem:[#allocation2 + $0xed0] sm:$0xff]
    %v3232 = vld [vmem:[#allocation2 + $0xed8] sm:$0xff]
    %v3233 = vld [vmem:[#allocation2 + $0xee0] sm:$0xff]
    %v3234 = vld [vmem:[#allocation2 + $0xee8] sm:$0xff]
    %v3235 = vld [vmem:[#allocation2 + $0xef0] sm:$0xff]
    %v3236 = vld [vmem:[#allocation2 + $0xef8] sm:$0xff]
    %v3237 = vld [vmem:[#allocation2 + $0xf00] sm:$0xff]
    %v3238 = vld [vmem:[#allocation2 + $0xf08] sm:$0xff]
    %v3239 = vld [vmem:[#allocation2 + $0xf10] sm:$0xff]
    %v3240 = vld [vmem:[#allocation2 + $0xf18] sm:$0xff]
    %v3241 = vld [vmem:[#allocation2 + $0xf20] sm:$0xff]
    %v3242 = vld [vmem:[#allocation2 + $0xf28] sm:$0xff]
    %v3243 = vld [vmem:[#allocation2 + $0xf30] sm:$0xff]
    %v3244 = vld [vmem:[#allocation2 + $0xf38] sm:$0xff]
    %v3245 = vld [vmem:[#allocation2 + $0xf40] sm:$0xff]
    %v3246 = vld [vmem:[#allocation2 + $0xf48] sm:$0xff]
    %v3247 = vld [vmem:[#allocation2 + $0xf50] sm:$0xff]
    %v3248 = vld [vmem:[#allocation2 + $0xf58] sm:$0xff]
    %v3249 = vld [vmem:[#allocation2 + $0xf60] sm:$0xff]
    %v3250 = vld [vmem:[#allocation2 + $0xf68] sm:$0xff]
    %v3251 = vld [vmem:[#allocation2 + $0xf70] sm:$0xff]
    %v3252 = vld [vmem:[#allocation2 + $0xf78] sm:$0xff]
    %v3253 = vld [vmem:[#allocation2 + $0xf80] sm:$0xff]
    %v3254 = vld [vmem:[#allocation2 + $0xf88] sm:$0xff]
    %v3255 = vld [vmem:[#allocation2 + $0xf90] sm:$0xff]
    %v3256 = vld [vmem:[#allocation2 + $0xf98] sm:$0xff]
    %v3257 = vld [vmem:[#allocation2 + $0xfa0] sm:$0xff]
    %v3258 = vld [vmem:[#allocation2 + $0xfa8] sm:$0xff]
    %v3259 = vld [vmem:[#allocation2 + $0xfb0] sm:$0xff]
    %v3260 = vld [vmem:[#allocation2 + $0xfb8] sm:$0xff]
    %v3261 = vld [vmem:[#allocation2 + $0xfc0] sm:$0xff]
    %v3262 = vld [vmem:[#allocation2 + $0xfc8] sm:$0xff]
    %v3263 = vld [vmem:[#allocation2 + $0xfd0] sm:$0xff]
    %v3264 = vld [vmem:[#allocation2 + $0xfd8] sm:$0xff]
    %v3265 = vld [vmem:[#allocation2 + $0xfe0] sm:$0xff]
    %v3266 = vld [vmem:[#allocation2 + $0xfe8] sm:$0xff]
    %v3267 = vld [vmem:[#allocation2 + $0xff0] sm:$0xff]
    %v3268 = vld [vmem:[#allocation2 + $0xff8] sm:$0xff]
    %v3269 = vld [vmem:[#allocation2 + $0x1000] sm:$0xff]
    %v3270 = vld [vmem:[#allocation2 + $0x1008] sm:$0xff]
    %v3271 = vld [vmem:[#allocation2 + $0x1010] sm:$0xff]
    %v3272 = vld [vmem:[#allocation2 + $0x1018] sm:$0xff]
    %v3273 = vld [vmem:[#allocation2 + $0x1020] sm:$0xff]
    %v3274 = vld [vmem:[#allocation2 + $0x1028] sm:$0xff]
    %v3275 = vld [vmem:[#allocation2 + $0x1030] sm:$0xff]
    %v3276 = vld [vmem:[#allocation2 + $0x1038] sm:$0xff]
    %v3277 = vld [vmem:[#allocation2 + $0x1040] sm:$0xff]
    %v3278 = vld [vmem:[#allocation2 + $0x1048] sm:$0xff]
    %v3279 = vld [vmem:[#allocation2 + $0x1050] sm:$0xff]
    %v3280 = vld [vmem:[#allocation2 + $0x1058] sm:$0xff]
    %v3281 = vld [vmem:[#allocation2 + $0x1060] sm:$0xff]
    %v3282 = vld [vmem:[#allocation2 + $0x1068] sm:$0xff]
    %v3283 = vld [vmem:[#allocation2 + $0x1070] sm:$0xff]
    %v3284 = vld [vmem:[#allocation2 + $0x1078] sm:$0xff]
    %s3285 = scalar_lea.vmem [#allocation4], 3
    %v3286 = vld [vmem:[%s3285] ss:$8 sm:$0xf]
    %v3288 = vlaneseq
    %v3289 = vshrl.u32 %v3288, 7
    %v3290 = vsub.s32 0, %v3289
    %v3291 = vrot.slane %v3286, %v3290
    %v3292 = vlaneseq
    %v3293 = vshrl.u32 %v3292, 7
    %v3294 = vsub.s32 1, %v3293
    %v3295 = vrot.slane %v3286, %v3294
    %v3296 = vlaneseq
    %v3297 = vshrl.u32 %v3296, 7
    %v3298 = vsub.s32 2, %v3297
    %v3299 = vrot.slane %v3286, %v3298
    %v3300 = vlaneseq
    %v3301 = vshrl.u32 %v3300, 7
    %v3302 = vsub.s32 3, %v3301
    %v3303 = vrot.slane %v3286, %v3302
    %v3436 = vunpack.c.l.b16 %v3157
    %v3437 = vunpack.c.h.b16 %v3157
    %v3438 = vunpack.c.l.b16 %v3158
    %v3439 = vunpack.c.h.b16 %v3158
    %v3440 = vunpack.c.l.b16 %v3159
    %v3441 = vunpack.c.h.b16 %v3159
    %v3442 = vunpack.c.l.b16 %v3160
    %v3443 = vunpack.c.h.b16 %v3160
    %v3444 = vunpack.c.l.b16 %v3161
    %v3445 = vunpack.c.h.b16 %v3161
    %v3446 = vunpack.c.l.b16 %v3162
    %v3447 = vunpack.c.h.b16 %v3162
    %v3448 = vunpack.c.l.b16 %v3163
    %v3449 = vunpack.c.h.b16 %v3163
    %v3450 = vunpack.c.l.b16 %v3164
    %v3451 = vunpack.c.h.b16 %v3164
    %v3452 = vunpack.c.l.b16 %v3165
    %v3453 = vunpack.c.h.b16 %v3165
    %v3454 = vunpack.c.l.b16 %v3166
    %v3455 = vunpack.c.h.b16 %v3166
    %v3456 = vunpack.c.l.b16 %v3167
    %v3457 = vunpack.c.h.b16 %v3167
    %v3458 = vunpack.c.l.b16 %v3168
    %v3459 = vunpack.c.h.b16 %v3168
    %v3460 = vunpack.c.l.b16 %v3169
    %v3461 = vunpack.c.h.b16 %v3169
    %v3462 = vunpack.c.l.b16 %v3170
    %v3463 = vunpack.c.h.b16 %v3170
    %v3464 = vunpack.c.l.b16 %v3171
    %v3465 = vunpack.c.h.b16 %v3171
    %v3466 = vunpack.c.l.b16 %v3172
    %v3467 = vunpack.c.h.b16 %v3172
    %v3468 = vunpack.c.l.b16 %v3173
    %v3469 = vunpack.c.h.b16 %v3173
    %v3470 = vunpack.c.l.b16 %v3174
    %v3471 = vunpack.c.h.b16 %v3174
    %v3472 = vunpack.c.l.b16 %v3175
    %v3473 = vunpack.c.h.b16 %v3175
    %v3474 = vunpack.c.l.b16 %v3176
    %v3475 = vunpack.c.h.b16 %v3176
    %v3476 = vunpack.c.l.b16 %v3177
    %v3477 = vunpack.c.h.b16 %v3177
    %v3478 = vunpack.c.l.b16 %v3178
    %v3479 = vunpack.c.h.b16 %v3178
    %v3480 = vunpack.c.l.b16 %v3179
    %v3481 = vunpack.c.h.b16 %v3179
    %v3482 = vunpack.c.l.b16 %v3180
    %v3483 = vunpack.c.h.b16 %v3180
    %v3484 = vunpack.c.l.b16 %v3181
    %v3485 = vunpack.c.h.b16 %v3181
    %v3486 = vunpack.c.l.b16 %v3182
    %v3487 = vunpack.c.h.b16 %v3182
    %v3488 = vunpack.c.l.b16 %v3183
    %v3489 = vunpack.c.h.b16 %v3183
    %v3490 = vunpack.c.l.b16 %v3184
    %v3491 = vunpack.c.h.b16 %v3184
    %v3492 = vunpack.c.l.b16 %v3185
    %v3493 = vunpack.c.h.b16 %v3185
    %v3494 = vunpack.c.l.b16 %v3186
    %v3495 = vunpack.c.h.b16 %v3186
    %v3496 = vunpack.c.l.b16 %v3187
    %v3497 = vunpack.c.h.b16 %v3187
    %v3498 = vunpack.c.l.b16 %v3188
    %v3499 = vunpack.c.h.b16 %v3188
    %v3500 = vunpack.c.l.b16 %v3189
    %v3501 = vunpack.c.h.b16 %v3189
    %v3502 = vunpack.c.l.b16 %v3190
    %v3503 = vunpack.c.h.b16 %v3190
    %v3504 = vunpack.c.l.b16 %v3191
    %v3505 = vunpack.c.h.b16 %v3191
    %v3506 = vunpack.c.l.b16 %v3192
    %v3507 = vunpack.c.h.b16 %v3192
    %v3508 = vunpack.c.l.b16 %v3193
    %v3509 = vunpack.c.h.b16 %v3193
    %v3510 = vunpack.c.l.b16 %v3194
    %v3511 = vunpack.c.h.b16 %v3194
    %v3512 = vunpack.c.l.b16 %v3195
    %v3513 = vunpack.c.h.b16 %v3195
    %v3514 = vunpack.c.l.b16 %v3196
    %v3515 = vunpack.c.h.b16 %v3196
    %v3516 = vunpack.c.l.b16 %v3197
    %v3517 = vunpack.c.h.b16 %v3197
    %v3518 = vunpack.c.l.b16 %v3198
    %v3519 = vunpack.c.h.b16 %v3198
    %v3520 = vunpack.c.l.b16 %v3199
    %v3521 = vunpack.c.h.b16 %v3199
    %v3522 = vunpack.c.l.b16 %v3200
    %v3523 = vunpack.c.h.b16 %v3200
    %v3524 = vunpack.c.l.b16 %v3201
    %v3525 = vunpack.c.h.b16 %v3201
    %v3526 = vunpack.c.l.b16 %v3202
    %v3527 = vunpack.c.h.b16 %v3202
    %v3528 = vunpack.c.l.b16 %v3203
    %v3529 = vunpack.c.h.b16 %v3203
    %v3530 = vunpack.c.l.b16 %v3204
    %v3531 = vunpack.c.h.b16 %v3204
    %v3532 = vunpack.c.l.b16 %v3205
    %v3533 = vunpack.c.h.b16 %v3205
    %v3534 = vunpack.c.l.b16 %v3206
    %v3535 = vunpack.c.h.b16 %v3206
    %v3536 = vunpack.c.l.b16 %v3207
    %v3537 = vunpack.c.h.b16 %v3207
    %v3538 = vunpack.c.l.b16 %v3208
    %v3539 = vunpack.c.h.b16 %v3208
    %v3540 = vunpack.c.l.b16 %v3209
    %v3541 = vunpack.c.h.b16 %v3209
    %v3542 = vunpack.c.l.b16 %v3210
    %v3543 = vunpack.c.h.b16 %v3210
    %v3544 = vunpack.c.l.b16 %v3211
    %v3545 = vunpack.c.h.b16 %v3211
    %v3546 = vunpack.c.l.b16 %v3212
    %v3547 = vunpack.c.h.b16 %v3212
    %v3548 = vunpack.c.l.b16 %v3213
    %v3549 = vunpack.c.h.b16 %v3213
    %v3550 = vunpack.c.l.b16 %v3214
    %v3551 = vunpack.c.h.b16 %v3214
    %v3552 = vunpack.c.l.b16 %v3215
    %v3553 = vunpack.c.h.b16 %v3215
    %v3554 = vunpack.c.l.b16 %v3216
    %v3555 = vunpack.c.h.b16 %v3216
    %v3556 = vunpack.c.l.b16 %v3217
    %v3557 = vunpack.c.h.b16 %v3217
    %v3558 = vunpack.c.l.b16 %v3218
    %v3559 = vunpack.c.h.b16 %v3218
    %v3560 = vunpack.c.l.b16 %v3219
    %v3561 = vunpack.c.h.b16 %v3219
    %v3562 = vunpack.c.l.b16 %v3220
    %v3563 = vunpack.c.h.b16 %v3220
    %v3564 = vunpack.c.l.b16 %v3221
    %v3565 = vunpack.c.h.b16 %v3221
    %v3566 = vunpack.c.l.b16 %v3222
    %v3567 = vunpack.c.h.b16 %v3222
    %v3568 = vunpack.c.l.b16 %v3223
    %v3569 = vunpack.c.h.b16 %v3223
    %v3570 = vunpack.c.l.b16 %v3224
    %v3571 = vunpack.c.h.b16 %v3224
    %v3572 = vunpack.c.l.b16 %v3225
    %v3573 = vunpack.c.h.b16 %v3225
    %v3574 = vunpack.c.l.b16 %v3226
    %v3575 = vunpack.c.h.b16 %v3226
    %v3576 = vunpack.c.l.b16 %v3227
    %v3577 = vunpack.c.h.b16 %v3227
    %v3578 = vunpack.c.l.b16 %v3228
    %v3579 = vunpack.c.h.b16 %v3228
    %v3580 = vunpack.c.l.b16 %v3229
    %v3581 = vunpack.c.h.b16 %v3229
    %v3582 = vunpack.c.l.b16 %v3230
    %v3583 = vunpack.c.h.b16 %v3230
    %v3584 = vunpack.c.l.b16 %v3231
    %v3585 = vunpack.c.h.b16 %v3231
    %v3586 = vunpack.c.l.b16 %v3232
    %v3587 = vunpack.c.h.b16 %v3232
    %v3588 = vunpack.c.l.b16 %v3233
    %v3589 = vunpack.c.h.b16 %v3233
    %v3590 = vunpack.c.l.b16 %v3234
    %v3591 = vunpack.c.h.b16 %v3234
    %v3592 = vunpack.c.l.b16 %v3235
    %v3593 = vunpack.c.h.b16 %v3235
    %v3594 = vunpack.c.l.b16 %v3236
    %v3595 = vunpack.c.h.b16 %v3236
    %v3596 = vunpack.c.l.b16 %v3237
    %v3597 = vunpack.c.h.b16 %v3237
    %v3598 = vunpack.c.l.b16 %v3238
    %v3599 = vunpack.c.h.b16 %v3238
    %v3600 = vunpack.c.l.b16 %v3239
    %v3601 = vunpack.c.h.b16 %v3239
    %v3602 = vunpack.c.l.b16 %v3240
    %v3603 = vunpack.c.h.b16 %v3240
    %v3604 = vunpack.c.l.b16 %v3241
    %v3605 = vunpack.c.h.b16 %v3241
    %v3606 = vunpack.c.l.b16 %v3242
    %v3607 = vunpack.c.h.b16 %v3242
    %v3608 = vunpack.c.l.b16 %v3243
    %v3609 = vunpack.c.h.b16 %v3243
    %v3610 = vunpack.c.l.b16 %v3244
    %v3611 = vunpack.c.h.b16 %v3244
    %v3612 = vunpack.c.l.b16 %v3245
    %v3613 = vunpack.c.h.b16 %v3245
    %v3614 = vunpack.c.l.b16 %v3246
    %v3615 = vunpack.c.h.b16 %v3246
    %v3616 = vunpack.c.l.b16 %v3247
    %v3617 = vunpack.c.h.b16 %v3247
    %v3618 = vunpack.c.l.b16 %v3248
    %v3619 = vunpack.c.h.b16 %v3248
    %v3620 = vunpack.c.l.b16 %v3249
    %v3621 = vunpack.c.h.b16 %v3249
    %v3622 = vunpack.c.l.b16 %v3250
    %v3623 = vunpack.c.h.b16 %v3250
    %v3624 = vunpack.c.l.b16 %v3251
    %v3625 = vunpack.c.h.b16 %v3251
    %v3626 = vunpack.c.l.b16 %v3252
    %v3627 = vunpack.c.h.b16 %v3252
    %v3628 = vunpack.c.l.b16 %v3253
    %v3629 = vunpack.c.h.b16 %v3253
    %v3630 = vunpack.c.l.b16 %v3254
    %v3631 = vunpack.c.h.b16 %v3254
    %v3632 = vunpack.c.l.b16 %v3255
    %v3633 = vunpack.c.h.b16 %v3255
    %v3634 = vunpack.c.l.b16 %v3256
    %v3635 = vunpack.c.h.b16 %v3256
    %v3636 = vunpack.c.l.b16 %v3257
    %v3637 = vunpack.c.h.b16 %v3257
    %v3638 = vunpack.c.l.b16 %v3258
    %v3639 = vunpack.c.h.b16 %v3258
    %v3640 = vunpack.c.l.b16 %v3259
    %v3641 = vunpack.c.h.b16 %v3259
    %v3642 = vunpack.c.l.b16 %v3260
    %v3643 = vunpack.c.h.b16 %v3260
    %v3644 = vunpack.c.l.b16 %v3261
    %v3645 = vunpack.c.h.b16 %v3261
    %v3646 = vunpack.c.l.b16 %v3262
    %v3647 = vunpack.c.h.b16 %v3262
    %v3648 = vunpack.c.l.b16 %v3263
    %v3649 = vunpack.c.h.b16 %v3263
    %v3650 = vunpack.c.l.b16 %v3264
    %v3651 = vunpack.c.h.b16 %v3264
    %v3652 = vunpack.c.l.b16 %v3265
    %v3653 = vunpack.c.h.b16 %v3265
    %v3654 = vunpack.c.l.b16 %v3266
    %v3655 = vunpack.c.h.b16 %v3266
    %v3656 = vunpack.c.l.b16 %v3267
    %v3657 = vunpack.c.h.b16 %v3267
    %v3658 = vunpack.c.l.b16 %v3268
    %v3659 = vunpack.c.h.b16 %v3268
    %v3660 = vunpack.c.l.b16 %v3269
    %v3661 = vunpack.c.h.b16 %v3269
    %v3662 = vunpack.c.l.b16 %v3270
    %v3663 = vunpack.c.h.b16 %v3270
    %v3664 = vunpack.c.l.b16 %v3271
    %v3665 = vunpack.c.h.b16 %v3271
    %v3666 = vunpack.c.l.b16 %v3272
    %v3667 = vunpack.c.h.b16 %v3272
    %v3668 = vunpack.c.l.b16 %v3273
    %v3669 = vunpack.c.h.b16 %v3273
    %v3670 = vunpack.c.l.b16 %v3274
    %v3671 = vunpack.c.h.b16 %v3274
    %v3672 = vunpack.c.l.b16 %v3275
    %v3673 = vunpack.c.h.b16 %v3275
    %v3674 = vunpack.c.l.b16 %v3276
    %v3675 = vunpack.c.h.b16 %v3276
    %v3676 = vunpack.c.l.b16 %v3277
    %v3677 = vunpack.c.h.b16 %v3277
    %v3678 = vunpack.c.l.b16 %v3278
    %v3679 = vunpack.c.h.b16 %v3278
    %v3680 = vunpack.c.l.b16 %v3279
    %v3681 = vunpack.c.h.b16 %v3279
    %v3682 = vunpack.c.l.b16 %v3280
    %v3683 = vunpack.c.h.b16 %v3280
    %v3684 = vunpack.c.l.b16 %v3281
    %v3685 = vunpack.c.h.b16 %v3281
    %v3686 = vunpack.c.l.b16 %v3282
    %v3687 = vunpack.c.h.b16 %v3282
    %v3688 = vunpack.c.l.b16 %v3283
    %v3689 = vunpack.c.h.b16 %v3283
    %v3690 = vunpack.c.l.b16 %v3284
    %v3691 = vunpack.c.h.b16 %v3284
    %v3692 = vpack.c.b16 %v3440, %v3436
    %v3693 = vpack.c.b16 %v3441, %v3437
    %v3694 = vpack.c.b16 %v3442, %v3438
    %v3695 = vpack.c.b16 %v3443, %v3439
    %v3696 = vpack.c.b16 %v3448, %v3444
    %v3697 = vpack.c.b16 %v3449, %v3445
    %v3698 = vpack.c.b16 %v3450, %v3446
    %v3699 = vpack.c.b16 %v3451, %v3447
    %v3700 = vpack.c.b16 %v3456, %v3452
    %v3701 = vpack.c.b16 %v3457, %v3453
    %v3702 = vpack.c.b16 %v3458, %v3454
    %v3703 = vpack.c.b16 %v3459, %v3455
    %v3704 = vpack.c.b16 %v3464, %v3460
    %v3705 = vpack.c.b16 %v3465, %v3461
    %v3706 = vpack.c.b16 %v3466, %v3462
    %v3707 = vpack.c.b16 %v3467, %v3463
    %v3708 = vpack.c.b16 %v3472, %v3468
    %v3709 = vpack.c.b16 %v3473, %v3469
    %v3710 = vpack.c.b16 %v3474, %v3470
    %v3711 = vpack.c.b16 %v3475, %v3471
    %v3712 = vpack.c.b16 %v3480, %v3476
    %v3713 = vpack.c.b16 %v3481, %v3477
    %v3714 = vpack.c.b16 %v3482, %v3478
    %v3715 = vpack.c.b16 %v3483, %v3479
    %v3716 = vpack.c.b16 %v3488, %v3484
    %v3717 = vpack.c.b16 %v3489, %v3485
    %v3718 = vpack.c.b16 %v3490, %v3486
    %v3719 = vpack.c.b16 %v3491, %v3487
    %v3720 = vpack.c.b16 %v3496, %v3492
    %v3721 = vpack.c.b16 %v3497, %v3493
    %v3722 = vpack.c.b16 %v3498, %v3494
    %v3723 = vpack.c.b16 %v3499, %v3495
    %v3724 = vpack.c.b16 %v3504, %v3500
    %v3725 = vpack.c.b16 %v3505, %v3501
    %v3726 = vpack.c.b16 %v3506, %v3502
    %v3727 = vpack.c.b16 %v3507, %v3503
    %v3728 = vpack.c.b16 %v3512, %v3508
    %v3729 = vpack.c.b16 %v3513, %v3509
    %v3730 = vpack.c.b16 %v3514, %v3510
    %v3731 = vpack.c.b16 %v3515, %v3511
    %v3732 = vpack.c.b16 %v3520, %v3516
    %v3733 = vpack.c.b16 %v3521, %v3517
    %v3734 = vpack.c.b16 %v3522, %v3518
    %v3735 = vpack.c.b16 %v3523, %v3519
    %v3736 = vpack.c.b16 %v3528, %v3524
    %v3737 = vpack.c.b16 %v3529, %v3525
    %v3738 = vpack.c.b16 %v3530, %v3526
    %v3739 = vpack.c.b16 %v3531, %v3527
    %v3740 = vpack.c.b16 %v3536, %v3532
    %v3741 = vpack.c.b16 %v3537, %v3533
    %v3742 = vpack.c.b16 %v3538, %v3534
    %v3743 = vpack.c.b16 %v3539, %v3535
    %v3744 = vpack.c.b16 %v3544, %v3540
    %v3745 = vpack.c.b16 %v3545, %v3541
    %v3746 = vpack.c.b16 %v3546, %v3542
    %v3747 = vpack.c.b16 %v3547, %v3543
    %v3748 = vpack.c.b16 %v3552, %v3548
    %v3749 = vpack.c.b16 %v3553, %v3549
    %v3750 = vpack.c.b16 %v3554, %v3550
    %v3751 = vpack.c.b16 %v3555, %v3551
    %v3752 = vpack.c.b16 %v3560, %v3556
    %v3753 = vpack.c.b16 %v3561, %v3557
    %v3754 = vpack.c.b16 %v3562, %v3558
    %v3755 = vpack.c.b16 %v3563, %v3559
    %v3756 = vpack.c.b16 %v3568, %v3564
    %v3757 = vpack.c.b16 %v3569, %v3565
    %v3758 = vpack.c.b16 %v3570, %v3566
    %v3759 = vpack.c.b16 %v3571, %v3567
    %v3760 = vpack.c.b16 %v3576, %v3572
    %v3761 = vpack.c.b16 %v3577, %v3573
    %v3762 = vpack.c.b16 %v3578, %v3574
    %v3763 = vpack.c.b16 %v3579, %v3575
    %v3764 = vpack.c.b16 %v3584, %v3580
    %v3765 = vpack.c.b16 %v3585, %v3581
    %v3766 = vpack.c.b16 %v3586, %v3582
    %v3767 = vpack.c.b16 %v3587, %v3583
    %v3768 = vpack.c.b16 %v3592, %v3588
    %v3769 = vpack.c.b16 %v3593, %v3589
    %v3770 = vpack.c.b16 %v3594, %v3590
    %v3771 = vpack.c.b16 %v3595, %v3591
    %v3772 = vpack.c.b16 %v3600, %v3596
    %v3773 = vpack.c.b16 %v3601, %v3597
    %v3774 = vpack.c.b16 %v3602, %v3598
    %v3775 = vpack.c.b16 %v3603, %v3599
    %v3776 = vpack.c.b16 %v3608, %v3604
    %v3777 = vpack.c.b16 %v3609, %v3605
    %v3778 = vpack.c.b16 %v3610, %v3606
    %v3779 = vpack.c.b16 %v3611, %v3607
    %v3780 = vpack.c.b16 %v3616, %v3612
    %v3781 = vpack.c.b16 %v3617, %v3613
    %v3782 = vpack.c.b16 %v3618, %v3614
    %v3783 = vpack.c.b16 %v3619, %v3615
    %v3784 = vpack.c.b16 %v3624, %v3620
    %v3785 = vpack.c.b16 %v3625, %v3621
    %v3786 = vpack.c.b16 %v3626, %v3622
    %v3787 = vpack.c.b16 %v3627, %v3623
    %v3788 = vpack.c.b16 %v3632, %v3628
    %v3789 = vpack.c.b16 %v3633, %v3629
    %v3790 = vpack.c.b16 %v3634, %v3630
    %v3791 = vpack.c.b16 %v3635, %v3631
    %v3792 = vpack.c.b16 %v3640, %v3636
    %v3793 = vpack.c.b16 %v3641, %v3637
    %v3794 = vpack.c.b16 %v3642, %v3638
    %v3795 = vpack.c.b16 %v3643, %v3639
    %v3796 = vpack.c.b16 %v3648, %v3644
    %v3797 = vpack.c.b16 %v3649, %v3645
    %v3798 = vpack.c.b16 %v3650, %v3646
    %v3799 = vpack.c.b16 %v3651, %v3647
    %v3800 = vpack.c.b16 %v3656, %v3652
    %v3801 = vpack.c.b16 %v3657, %v3653
    %v3802 = vpack.c.b16 %v3658, %v3654
    %v3803 = vpack.c.b16 %v3659, %v3655
    %v3804 = vpack.c.b16 %v3664, %v3660
    %v3805 = vpack.c.b16 %v3665, %v3661
    %v3806 = vpack.c.b16 %v3666, %v3662
    %v3807 = vpack.c.b16 %v3667, %v3663
    %v3808 = vpack.c.b16 %v3672, %v3668
    %v3809 = vpack.c.b16 %v3673, %v3669
    %v3810 = vpack.c.b16 %v3674, %v3670
    %v3811 = vpack.c.b16 %v3675, %v3671
    %v3812 = vpack.c.b16 %v3680, %v3676
    %v3813 = vpack.c.b16 %v3681, %v3677
    %v3814 = vpack.c.b16 %v3682, %v3678
    %v3815 = vpack.c.b16 %v3683, %v3679
    %v3816 = vpack.c.b16 %v3688, %v3684
    %v3817 = vpack.c.b16 %v3689, %v3685
    %v3818 = vpack.c.b16 %v3690, %v3686
    %v3819 = vpack.c.b16 %v3691, %v3687
    %3948 = vmatprep.subr.bf16.mxu0 %v3693
    %3949 = vmatpush1.bf16.msra.mxu0 %v3692
    %3950 = vmatprep.subr.bf16.mxu0 %v3697
    %3951 = vmatpush1.bf16.msra.mxu0 %v3696
    %3952 = vmatprep.subr.bf16.mxu0 %v3701
    %3953 = vmatpush1.bf16.msra.mxu0 %v3700
    %3954 = vmatprep.subr.bf16.mxu0 %v3705
    %3955 = vmatpush1.bf16.msra.mxu0 %v3704
    %3956 = vmatprep.subr.bf16.mxu0 %v3709
    %3957 = vmatpush1.bf16.msra.mxu0 %v3708
    %3958 = vmatprep.subr.bf16.mxu0 %v3713
    %3959 = vmatpush1.bf16.msra.mxu0 %v3712
    %3960 = vmatprep.subr.bf16.mxu0 %v3717
    %3961 = vmatpush1.bf16.msra.mxu0 %v3716
    %3962 = vmatprep.subr.bf16.mxu0 %v3721
    %3963 = vmatpush1.bf16.msra.mxu0 %v3720
    %3964 = vmatprep.subr.bf16.mxu0 %v3725
    %3965 = vmatpush1.bf16.msra.mxu0 %v3724
    %3966 = vmatprep.subr.bf16.mxu0 %v3729
    %3967 = vmatpush1.bf16.msra.mxu0 %v3728
    %3968 = vmatprep.subr.bf16.mxu0 %v3733
    %3969 = vmatpush1.bf16.msra.mxu0 %v3732
    %3970 = vmatprep.subr.bf16.mxu0 %v3737
    %3971 = vmatpush1.bf16.msra.mxu0 %v3736
    %3972 = vmatprep.subr.bf16.mxu0 %v3741
    %3973 = vmatpush1.bf16.msra.mxu0 %v3740
    %3974 = vmatprep.subr.bf16.mxu0 %v3745
    %3975 = vmatpush1.bf16.msra.mxu0 %v3744
    %3976 = vmatprep.subr.bf16.mxu0 %v3749
    %3977 = vmatpush1.bf16.msra.mxu0 %v3748
    %3978 = vmatprep.subr.bf16.mxu0 %v3753
    %3979 = vmatpush1.bf16.msra.mxu0 %v3752
    %3980 = vmatprep.mubr.bf16.mxu0 %v3154
    %3981 = vmatmul.mubr.bf16.gmra.mrb[0].mxu0 %v3153
    %v3982 = vpop.f32.mrb[0].mxu0
    %v3983 = vadd.f32 %v3291, %v3982
    %v3984 = vpop.f32.mrb[0].mxu0
    %v3985 = vadd.f32 %v3295, %v3984
    %v3986 = vpop.f32.mrb[0].mxu0
    %v3987 = vpop.f32.mrb[0].mxu0
    %3988 = vdwg.mxu0
    %3989 = vmatprep.subr.bf16.mxu0 %v3757
    %3990 = vmatpush1.bf16.msra.mxu0 %v3756
    %3991 = vmatprep.subr.bf16.mxu0 %v3761
    %3992 = vmatpush1.bf16.msra.mxu0 %v3760
    %3993 = vmatprep.subr.bf16.mxu0 %v3765
    %3994 = vmatpush1.bf16.msra.mxu0 %v3764
    %3995 = vmatprep.subr.bf16.mxu0 %v3769
    %3996 = vmatpush1.bf16.msra.mxu0 %v3768
    %3997 = vmatprep.subr.bf16.mxu0 %v3773
    %3998 = vmatpush1.bf16.msra.mxu0 %v3772
    %3999 = vmatprep.subr.bf16.mxu0 %v3777
    %4000 = vmatpush1.bf16.msra.mxu0 %v3776
    %4001 = vmatprep.subr.bf16.mxu0 %v3781
    %4002 = vmatpush1.bf16.msra.mxu0 %v3780
    %4003 = vmatprep.subr.bf16.mxu0 %v3785
    %4004 = vmatpush1.bf16.msra.mxu0 %v3784
    %4005 = vmatprep.subr.bf16.mxu0 %v3789
    %4006 = vmatpush1.bf16.msra.mxu0 %v3788
    %4007 = vmatprep.subr.bf16.mxu0 %v3793
    %4008 = vmatpush1.bf16.msra.mxu0 %v3792
    %4009 = vmatprep.subr.bf16.mxu0 %v3797
    %4010 = vmatpush1.bf16.msra.mxu0 %v3796
    %4011 = vmatprep.subr.bf16.mxu0 %v3801
    %4012 = vmatpush1.bf16.msra.mxu0 %v3800
    %4013 = vmatprep.subr.bf16.mxu0 %v3805
    %4014 = vmatpush1.bf16.msra.mxu0 %v3804
    %4015 = vmatprep.subr.bf16.mxu0 %v3809
    %4016 = vmatpush1.bf16.msra.mxu0 %v3808
    %4017 = vmatprep.subr.bf16.mxu0 %v3813
    %4018 = vmatpush1.bf16.msra.mxu0 %v3812
    %4019 = vmatprep.subr.bf16.mxu0 %v3817
    %4020 = vmatpush1.bf16.msra.mxu0 %v3816
    %4021 = vmatprep.mubr.bf16.mxu0 %v3156
    %4022 = vmatmul.mubr.bf16.gmra.mrb[0].mxu0 %v3155
    %v4023 = vpop.f32.mrb[0].mxu0
    %v4024 = vadd.f32 %v3983, %v4023
    %v4025 = vpop.f32.mrb[0].mxu0
    %v4026 = vadd.f32 %v3985, %v4025
    %v4027 = vpop.f32.mrb[0].mxu0
    %v4028 = vpop.f32.mrb[0].mxu0
    %4029 = vdwg.mxu0
    %4030 = vmatprep.subr.bf16.mxu0 %v3695
    %4031 = vmatpush1.bf16.msra.mxu0 %v3694
    %4032 = vmatprep.subr.bf16.mxu0 %v3699
    %4033 = vmatpush1.bf16.msra.mxu0 %v3698
    %4034 = vmatprep.subr.bf16.mxu0 %v3703
    %4035 = vmatpush1.bf16.msra.mxu0 %v3702
    %4036 = vmatprep.subr.bf16.mxu0 %v3707
    %4037 = vmatpush1.bf16.msra.mxu0 %v3706
    %4038 = vmatprep.subr.bf16.mxu0 %v3711
    %4039 = vmatpush1.bf16.msra.mxu0 %v3710
    %4040 = vmatprep.subr.bf16.mxu0 %v3715
    %4041 = vmatpush1.bf16.msra.mxu0 %v3714
    %4042 = vmatprep.subr.bf16.mxu0 %v3719
    %4043 = vmatpush1.bf16.msra.mxu0 %v3718
    %4044 = vmatprep.subr.bf16.mxu0 %v3723
    %4045 = vmatpush1.bf16.msra.mxu0 %v3722
    %4046 = vmatprep.subr.bf16.mxu0 %v3727
    %4047 = vmatpush1.bf16.msra.mxu0 %v3726
    %4048 = vmatprep.subr.bf16.mxu0 %v3731
    %4049 = vmatpush1.bf16.msra.mxu0 %v3730
    %4050 = vmatprep.subr.bf16.mxu0 %v3735
    %4051 = vmatpush1.bf16.msra.mxu0 %v3734
    %4052 = vmatprep.subr.bf16.mxu0 %v3739
    %4053 = vmatpush1.bf16.msra.mxu0 %v3738
    %4054 = vmatprep.subr.bf16.mxu0 %v3743
    %4055 = vmatpush1.bf16.msra.mxu0 %v3742
    %4056 = vmatprep.subr.bf16.mxu0 %v3747
    %4057 = vmatpush1.bf16.msra.mxu0 %v3746
    %4058 = vmatprep.subr.bf16.mxu0 %v3751
    %4059 = vmatpush1.bf16.msra.mxu0 %v3750
    %4060 = vmatprep.subr.bf16.mxu0 %v3755
    %4061 = vmatpush1.bf16.msra.mxu0 %v3754
    %4062 = vmatprep.mubr.bf16.mxu0 %v3154
    %4063 = vmatmul.mubr.bf16.gmra.mrb[0].mxu0 %v3153
    %v4064 = vpop.f32.mrb[0].mxu0
    %v4065 = vadd.f32 %v3299, %v4064
    %v4066 = vpop.f32.mrb[0].mxu0
    %v4067 = vadd.f32 %v3303, %v4066
    %v4068 = vpop.f32.mrb[0].mxu0
    %v4069 = vpop.f32.mrb[0].mxu0
    %4070 = vdwg.mxu0
    %4071 = vmatprep.subr.bf16.mxu0 %v3759
    %4072 = vmatpush1.bf16.msra.mxu0 %v3758
    %4073 = vmatprep.subr.bf16.mxu0 %v3763
    %4074 = vmatpush1.bf16.msra.mxu0 %v3762
    %4075 = vmatprep.subr.bf16.mxu0 %v3767
    %4076 = vmatpush1.bf16.msra.mxu0 %v3766
    %4077 = vmatprep.subr.bf16.mxu0 %v3771
    %4078 = vmatpush1.bf16.msra.mxu0 %v3770
    %4079 = vmatprep.subr.bf16.mxu0 %v3775
    %4080 = vmatpush1.bf16.msra.mxu0 %v3774
    %4081 = vmatprep.subr.bf16.mxu0 %v3779
    %4082 = vmatpush1.bf16.msra.mxu0 %v3778
    %4083 = vmatprep.subr.bf16.mxu0 %v3783
    %4084 = vmatpush1.bf16.msra.mxu0 %v3782
    %4085 = vmatprep.subr.bf16.mxu0 %v3787
    %4086 = vmatpush1.bf16.msra.mxu0 %v3786
    %4087 = vmatprep.subr.bf16.mxu0 %v3791
    %4088 = vmatpush1.bf16.msra.mxu0 %v3790
    %4089 = vmatprep.subr.bf16.mxu0 %v3795
    %4090 = vmatpush1.bf16.msra.mxu0 %v3794
    %4091 = vmatprep.subr.bf16.mxu0 %v3799
    %4092 = vmatpush1.bf16.msra.mxu0 %v3798
    %4093 = vmatprep.subr.bf16.mxu0 %v3803
    %4094 = vmatpush1.bf16.msra.mxu0 %v3802
    %4095 = vmatprep.subr.bf16.mxu0 %v3807
    %4096 = vmatpush1.bf16.msra.mxu0 %v3806
    %4097 = vmatprep.subr.bf16.mxu0 %v3811
    %4098 = vmatpush1.bf16.msra.mxu0 %v3810
    %4099 = vmatprep.subr.bf16.mxu0 %v3815
    %4100 = vmatpush1.bf16.msra.mxu0 %v3814
    %4101 = vmatprep.subr.bf16.mxu0 %v3819
    %4102 = vmatpush1.bf16.msra.mxu0 %v3818
    %4103 = vmatprep.mubr.bf16.mxu0 %v3156
    %4104 = vmatmul.mubr.bf16.gmra.mrb[0].mxu0 %v3155
    %v4105 = vpop.f32.mrb[0].mxu0
    %v4106 = vadd.f32 %v4065, %v4105
    %v4107 = vpop.f32.mrb[0].mxu0
    %v4108 = vadd.f32 %v4067, %v4107
    %v4109 = vpop.f32.mrb[0].mxu0
    %v4110 = vpop.f32.mrb[0].mxu0
    %4111 = vdwg.mxu0
    %vm4112 = vcmp.gt.f32.partialorder %v4024, 0.0
    %vm4113 = vcmp.gt.f32.partialorder %v4026, 0.0
    %vm4114 = vcmp.gt.f32.partialorder %v4106, 0.0
    %vm4115 = vcmp.gt.f32.partialorder %v4108, 0.0
    %v4116 = vmul.f32 %v4024, 0.01
    %v4117 = vmul.f32 %v4026, 0.01
    %v4118 = vmul.f32 %v4106, 0.01
    %v4119 = vmul.f32 %v4108, 0.01
    %v4120 = vsel %vm4112, %v4024, %v4116
    %v4121 = vsel %vm4113, %v4026, %v4117
    %v4122 = vsel %vm4114, %v4106, %v4118
    %v4123 = vsel %vm4115, %v4108, %v4119
    %v4124 = vpack.c.bf16 %v4120, %v4120
    %v4125 = vpack.c.bf16 %v4121, %v4121
    %v4126 = vpack.c.bf16 %v4122, %v4122
    %v4127 = vpack.c.bf16 %v4123, %v4123
    %v4128 = vld [vmem:[#allocation2 + $0x1080] sm:$0xff]
    %v4129 = vld [vmem:[#allocation2 + $0x1090] sm:$0xff]
    %v4130 = vld [vmem:[#allocation2 + $0x10a0] sm:$0xff]
    %v4131 = vld [vmem:[#allocation2 + $0x10b0] sm:$0xff]
    %v4132 = vld [vmem:[#allocation2 + $0x10c0] sm:$0xff]
    %v4133 = vld [vmem:[#allocation2 + $0x10d0] sm:$0xff]
    %v4134 = vld [vmem:[#allocation2 + $0x10e0] sm:$0xff]
    %v4135 = vld [vmem:[#allocation2 + $0x10f0] sm:$0xff]
    %v4136 = vld [vmem:[#allocation2 + $0x1100] sm:$0xff]
    %v4137 = vld [vmem:[#allocation2 + $0x1110] sm:$0xff]
    %v4138 = vld [vmem:[#allocation2 + $0x1120] sm:$0xff]
    %v4139 = vld [vmem:[#allocation2 + $0x1130] sm:$0xff]
    %v4140 = vld [vmem:[#allocation2 + $0x1140] sm:$0xff]
    %v4141 = vld [vmem:[#allocation2 + $0x1150] sm:$0xff]
    %v4142 = vld [vmem:[#allocation2 + $0x1160] sm:$0xff]
    %v4143 = vld [vmem:[#allocation2 + $0x1170] sm:$0xff]
    %v4144 = vld [vmem:[#allocation2 + $0x1180] sm:$0xff]
    %v4145 = vld [vmem:[#allocation2 + $0x1190] sm:$0xff]
    %v4146 = vld [vmem:[#allocation2 + $0x11a0] sm:$0xff]
    %v4147 = vld [vmem:[#allocation2 + $0x11b0] sm:$0xff]
    %v4148 = vld [vmem:[#allocation2 + $0x11c0] sm:$0xff]
    %v4149 = vld [vmem:[#allocation2 + $0x11d0] sm:$0xff]
    %v4150 = vld [vmem:[#allocation2 + $0x11e0] sm:$0xff]
    %v4151 = vld [vmem:[#allocation2 + $0x11f0] sm:$0xff]
    %v4152 = vld [vmem:[#allocation2 + $0x1200] sm:$0xff]
    %v4153 = vld [vmem:[#allocation2 + $0x1210] sm:$0xff]
    %v4154 = vld [vmem:[#allocation2 + $0x1220] sm:$0xff]
    %v4155 = vld [vmem:[#allocation2 + $0x1230] sm:$0xff]
    %v4156 = vld [vmem:[#allocation2 + $0x1240] sm:$0xff]
    %v4157 = vld [vmem:[#allocation2 + $0x1250] sm:$0xff]
    %v4158 = vld [vmem:[#allocation2 + $0x1260] sm:$0xff]
    %v4159 = vld [vmem:[#allocation2 + $0x1270] sm:$0xff]
    %v4160 = vld [vmem:[#allocation2 + $0x1280] sm:$0xff]
    %v4161 = vld [vmem:[#allocation2 + $0x1290] sm:$0xff]
    %v4162 = vld [vmem:[#allocation2 + $0x12a0] sm:$0xff]
    %v4163 = vld [vmem:[#allocation2 + $0x12b0] sm:$0xff]
    %v4164 = vld [vmem:[#allocation2 + $0x12c0] sm:$0xff]
    %v4165 = vld [vmem:[#allocation2 + $0x12d0] sm:$0xff]
    %v4166 = vld [vmem:[#allocation2 + $0x12e0] sm:$0xff]
    %v4167 = vld [vmem:[#allocation2 + $0x12f0] sm:$0xff]
    %v4168 = vld [vmem:[#allocation2 + $0x1300] sm:$0xff]
    %v4169 = vld [vmem:[#allocation2 + $0x1310] sm:$0xff]
    %v4170 = vld [vmem:[#allocation2 + $0x1320] sm:$0xff]
    %v4171 = vld [vmem:[#allocation2 + $0x1330] sm:$0xff]
    %v4172 = vld [vmem:[#allocation2 + $0x1340] sm:$0xff]
    %v4173 = vld [vmem:[#allocation2 + $0x1350] sm:$0xff]
    %v4174 = vld [vmem:[#allocation2 + $0x1360] sm:$0xff]
    %v4175 = vld [vmem:[#allocation2 + $0x1370] sm:$0xff]
    %v4176 = vld [vmem:[#allocation2 + $0x1380] sm:$0xff]
    %v4177 = vld [vmem:[#allocation2 + $0x1390] sm:$0xff]
    %v4178 = vld [vmem:[#allocation2 + $0x13a0] sm:$0xff]
    %v4179 = vld [vmem:[#allocation2 + $0x13b0] sm:$0xff]
    %v4180 = vld [vmem:[#allocation2 + $0x13c0] sm:$0xff]
    %v4181 = vld [vmem:[#allocation2 + $0x13d0] sm:$0xff]
    %v4182 = vld [vmem:[#allocation2 + $0x13e0] sm:$0xff]
    %v4183 = vld [vmem:[#allocation2 + $0x13f0] sm:$0xff]
    %v4184 = vld [vmem:[#allocation2 + $0x1400] sm:$0xff]
    %v4185 = vld [vmem:[#allocation2 + $0x1410] sm:$0xff]
    %v4186 = vld [vmem:[#allocation2 + $0x1420] sm:$0xff]
    %v4187 = vld [vmem:[#allocation2 + $0x1430] sm:$0xff]
    %v4188 = vld [vmem:[#allocation2 + $0x1440] sm:$0xff]
    %v4189 = vld [vmem:[#allocation2 + $0x1450] sm:$0xff]
    %v4190 = vld [vmem:[#allocation2 + $0x1460] sm:$0xff]
    %v4191 = vld [vmem:[#allocation2 + $0x1470] sm:$0xff]
    %s4192 = scalar_lea.vmem [#allocation4], 4
    %v4193 = vld [vmem:[%s4192] ss:$8 sm:$0x3]
    %v4195 = vlaneseq
    %v4196 = vshrl.u32 %v4195, 7
    %v4197 = vsub.s32 0, %v4196
    %v4198 = vrot.slane %v4193, %v4197
    %v4199 = vlaneseq
    %v4200 = vshrl.u32 %v4199, 7
    %v4201 = vsub.s32 1, %v4200
    %v4202 = vrot.slane %v4193, %v4201
    %v4269 = vunpack.c.l.b16 %v4128
    %v4270 = vunpack.c.h.b16 %v4128
    %v4271 = vunpack.c.l.b16 %v4129
    %v4272 = vunpack.c.h.b16 %v4129
    %v4273 = vunpack.c.l.b16 %v4130
    %v4274 = vunpack.c.h.b16 %v4130
    %v4275 = vunpack.c.l.b16 %v4131
    %v4276 = vunpack.c.h.b16 %v4131
    %v4277 = vunpack.c.l.b16 %v4132
    %v4278 = vunpack.c.h.b16 %v4132
    %v4279 = vunpack.c.l.b16 %v4133
    %v4280 = vunpack.c.h.b16 %v4133
    %v4281 = vunpack.c.l.b16 %v4134
    %v4282 = vunpack.c.h.b16 %v4134
    %v4283 = vunpack.c.l.b16 %v4135
    %v4284 = vunpack.c.h.b16 %v4135
    %v4285 = vunpack.c.l.b16 %v4136
    %v4286 = vunpack.c.h.b16 %v4136
    %v4287 = vunpack.c.l.b16 %v4137
    %v4288 = vunpack.c.h.b16 %v4137
    %v4289 = vunpack.c.l.b16 %v4138
    %v4290 = vunpack.c.h.b16 %v4138
    %v4291 = vunpack.c.l.b16 %v4139
    %v4292 = vunpack.c.h.b16 %v4139
    %v4293 = vunpack.c.l.b16 %v4140
    %v4294 = vunpack.c.h.b16 %v4140
    %v4295 = vunpack.c.l.b16 %v4141
    %v4296 = vunpack.c.h.b16 %v4141
    %v4297 = vunpack.c.l.b16 %v4142
    %v4298 = vunpack.c.h.b16 %v4142
    %v4299 = vunpack.c.l.b16 %v4143
    %v4300 = vunpack.c.h.b16 %v4143
    %v4301 = vunpack.c.l.b16 %v4144
    %v4302 = vunpack.c.h.b16 %v4144
    %v4303 = vunpack.c.l.b16 %v4145
    %v4304 = vunpack.c.h.b16 %v4145
    %v4305 = vunpack.c.l.b16 %v4146
    %v4306 = vunpack.c.h.b16 %v4146
    %v4307 = vunpack.c.l.b16 %v4147
    %v4308 = vunpack.c.h.b16 %v4147
    %v4309 = vunpack.c.l.b16 %v4148
    %v4310 = vunpack.c.h.b16 %v4148
    %v4311 = vunpack.c.l.b16 %v4149
    %v4312 = vunpack.c.h.b16 %v4149
    %v4313 = vunpack.c.l.b16 %v4150
    %v4314 = vunpack.c.h.b16 %v4150
    %v4315 = vunpack.c.l.b16 %v4151
    %v4316 = vunpack.c.h.b16 %v4151
    %v4317 = vunpack.c.l.b16 %v4152
    %v4318 = vunpack.c.h.b16 %v4152
    %v4319 = vunpack.c.l.b16 %v4153
    %v4320 = vunpack.c.h.b16 %v4153
    %v4321 = vunpack.c.l.b16 %v4154
    %v4322 = vunpack.c.h.b16 %v4154
    %v4323 = vunpack.c.l.b16 %v4155
    %v4324 = vunpack.c.h.b16 %v4155
    %v4325 = vunpack.c.l.b16 %v4156
    %v4326 = vunpack.c.h.b16 %v4156
    %v4327 = vunpack.c.l.b16 %v4157
    %v4328 = vunpack.c.h.b16 %v4157
    %v4329 = vunpack.c.l.b16 %v4158
    %v4330 = vunpack.c.h.b16 %v4158
    %v4331 = vunpack.c.l.b16 %v4159
    %v4332 = vunpack.c.h.b16 %v4159
    %v4333 = vunpack.c.l.b16 %v4160
    %v4334 = vunpack.c.h.b16 %v4160
    %v4335 = vunpack.c.l.b16 %v4161
    %v4336 = vunpack.c.h.b16 %v4161
    %v4337 = vunpack.c.l.b16 %v4162
    %v4338 = vunpack.c.h.b16 %v4162
    %v4339 = vunpack.c.l.b16 %v4163
    %v4340 = vunpack.c.h.b16 %v4163
    %v4341 = vunpack.c.l.b16 %v4164
    %v4342 = vunpack.c.h.b16 %v4164
    %v4343 = vunpack.c.l.b16 %v4165
    %v4344 = vunpack.c.h.b16 %v4165
    %v4345 = vunpack.c.l.b16 %v4166
    %v4346 = vunpack.c.h.b16 %v4166
    %v4347 = vunpack.c.l.b16 %v4167
    %v4348 = vunpack.c.h.b16 %v4167
    %v4349 = vunpack.c.l.b16 %v4168
    %v4350 = vunpack.c.h.b16 %v4168
    %v4351 = vunpack.c.l.b16 %v4169
    %v4352 = vunpack.c.h.b16 %v4169
    %v4353 = vunpack.c.l.b16 %v4170
    %v4354 = vunpack.c.h.b16 %v4170
    %v4355 = vunpack.c.l.b16 %v4171
    %v4356 = vunpack.c.h.b16 %v4171
    %v4357 = vunpack.c.l.b16 %v4172
    %v4358 = vunpack.c.h.b16 %v4172
    %v4359 = vunpack.c.l.b16 %v4173
    %v4360 = vunpack.c.h.b16 %v4173
    %v4361 = vunpack.c.l.b16 %v4174
    %v4362 = vunpack.c.h.b16 %v4174
    %v4363 = vunpack.c.l.b16 %v4175
    %v4364 = vunpack.c.h.b16 %v4175
    %v4365 = vunpack.c.l.b16 %v4176
    %v4366 = vunpack.c.h.b16 %v4176
    %v4367 = vunpack.c.l.b16 %v4177
    %v4368 = vunpack.c.h.b16 %v4177
    %v4369 = vunpack.c.l.b16 %v4178
    %v4370 = vunpack.c.h.b16 %v4178
    %v4371 = vunpack.c.l.b16 %v4179
    %v4372 = vunpack.c.h.b16 %v4179
    %v4373 = vunpack.c.l.b16 %v4180
    %v4374 = vunpack.c.h.b16 %v4180
    %v4375 = vunpack.c.l.b16 %v4181
    %v4376 = vunpack.c.h.b16 %v4181
    %v4377 = vunpack.c.l.b16 %v4182
    %v4378 = vunpack.c.h.b16 %v4182
    %v4379 = vunpack.c.l.b16 %v4183
    %v4380 = vunpack.c.h.b16 %v4183
    %v4381 = vunpack.c.l.b16 %v4184
    %v4382 = vunpack.c.h.b16 %v4184
    %v4383 = vunpack.c.l.b16 %v4185
    %v4384 = vunpack.c.h.b16 %v4185
    %v4385 = vunpack.c.l.b16 %v4186
    %v4386 = vunpack.c.h.b16 %v4186
    %v4387 = vunpack.c.l.b16 %v4187
    %v4388 = vunpack.c.h.b16 %v4187
    %v4389 = vunpack.c.l.b16 %v4188
    %v4390 = vunpack.c.h.b16 %v4188
    %v4391 = vunpack.c.l.b16 %v4189
    %v4392 = vunpack.c.h.b16 %v4189
    %v4393 = vunpack.c.l.b16 %v4190
    %v4394 = vunpack.c.h.b16 %v4190
    %v4395 = vunpack.c.l.b16 %v4191
    %v4396 = vunpack.c.h.b16 %v4191
    %v4397 = vpack.c.b16 %v4271, %v4269
    %v4398 = vpack.c.b16 %v4272, %v4270
    %v4399 = vpack.c.b16 %v4275, %v4273
    %v4400 = vpack.c.b16 %v4276, %v4274
    %v4401 = vpack.c.b16 %v4279, %v4277
    %v4402 = vpack.c.b16 %v4280, %v4278
    %v4403 = vpack.c.b16 %v4283, %v4281
    %v4404 = vpack.c.b16 %v4284, %v4282
    %v4405 = vpack.c.b16 %v4287, %v4285
    %v4406 = vpack.c.b16 %v4288, %v4286
    %v4407 = vpack.c.b16 %v4291, %v4289
    %v4408 = vpack.c.b16 %v4292, %v4290
    %v4409 = vpack.c.b16 %v4295, %v4293
    %v4410 = vpack.c.b16 %v4296, %v4294
    %v4411 = vpack.c.b16 %v4299, %v4297
    %v4412 = vpack.c.b16 %v4300, %v4298
    %v4413 = vpack.c.b16 %v4303, %v4301
    %v4414 = vpack.c.b16 %v4304, %v4302
    %v4415 = vpack.c.b16 %v4307, %v4305
    %v4416 = vpack.c.b16 %v4308, %v4306
    %v4417 = vpack.c.b16 %v4311, %v4309
    %v4418 = vpack.c.b16 %v4312, %v4310
    %v4419 = vpack.c.b16 %v4315, %v4313
    %v4420 = vpack.c.b16 %v4316, %v4314
    %v4421 = vpack.c.b16 %v4319, %v4317
    %v4422 = vpack.c.b16 %v4320, %v4318
    %v4423 = vpack.c.b16 %v4323, %v4321
    %v4424 = vpack.c.b16 %v4324, %v4322
    %v4425 = vpack.c.b16 %v4327, %v4325
    %v4426 = vpack.c.b16 %v4328, %v4326
    %v4427 = vpack.c.b16 %v4331, %v4329
    %v4428 = vpack.c.b16 %v4332, %v4330
    %v4429 = vpack.c.b16 %v4335, %v4333
    %v4430 = vpack.c.b16 %v4336, %v4334
    %v4431 = vpack.c.b16 %v4339, %v4337
    %v4432 = vpack.c.b16 %v4340, %v4338
    %v4433 = vpack.c.b16 %v4343, %v4341
    %v4434 = vpack.c.b16 %v4344, %v4342
    %v4435 = vpack.c.b16 %v4347, %v4345
    %v4436 = vpack.c.b16 %v4348, %v4346
    %v4437 = vpack.c.b16 %v4351, %v4349
    %v4438 = vpack.c.b16 %v4352, %v4350
    %v4439 = vpack.c.b16 %v4355, %v4353
    %v4440 = vpack.c.b16 %v4356, %v4354
    %v4441 = vpack.c.b16 %v4359, %v4357
    %v4442 = vpack.c.b16 %v4360, %v4358
    %v4443 = vpack.c.b16 %v4363, %v4361
    %v4444 = vpack.c.b16 %v4364, %v4362
    %v4445 = vpack.c.b16 %v4367, %v4365
    %v4446 = vpack.c.b16 %v4368, %v4366
    %v4447 = vpack.c.b16 %v4371, %v4369
    %v4448 = vpack.c.b16 %v4372, %v4370
    %v4449 = vpack.c.b16 %v4375, %v4373
    %v4450 = vpack.c.b16 %v4376, %v4374
    %v4451 = vpack.c.b16 %v4379, %v4377
    %v4452 = vpack.c.b16 %v4380, %v4378
    %v4453 = vpack.c.b16 %v4383, %v4381
    %v4454 = vpack.c.b16 %v4384, %v4382
    %v4455 = vpack.c.b16 %v4387, %v4385
    %v4456 = vpack.c.b16 %v4388, %v4386
    %v4457 = vpack.c.b16 %v4391, %v4389
    %v4458 = vpack.c.b16 %v4392, %v4390
    %v4459 = vpack.c.b16 %v4395, %v4393
    %v4460 = vpack.c.b16 %v4396, %v4394
    %4525 = vmatprep.subr.bf16.mxu0 %v4398
    %4526 = vmatpush1.bf16.msra.mxu0 %v4397
    %4527 = vmatprep.subr.bf16.mxu0 %v4400
    %4528 = vmatpush1.bf16.msra.mxu0 %v4399
    %4529 = vmatprep.subr.bf16.mxu0 %v4402
    %4530 = vmatpush1.bf16.msra.mxu0 %v4401
    %4531 = vmatprep.subr.bf16.mxu0 %v4404
    %4532 = vmatpush1.bf16.msra.mxu0 %v4403
    %4533 = vmatprep.subr.bf16.mxu0 %v4406
    %4534 = vmatpush1.bf16.msra.mxu0 %v4405
    %4535 = vmatprep.subr.bf16.mxu0 %v4408
    %4536 = vmatpush1.bf16.msra.mxu0 %v4407
    %4537 = vmatprep.subr.bf16.mxu0 %v4410
    %4538 = vmatpush1.bf16.msra.mxu0 %v4409
    %4539 = vmatprep.subr.bf16.mxu0 %v4412
    %4540 = vmatpush1.bf16.msra.mxu0 %v4411
    %4541 = vmatprep.subr.bf16.mxu0 %v4414
    %4542 = vmatpush1.bf16.msra.mxu0 %v4413
    %4543 = vmatprep.subr.bf16.mxu0 %v4416
    %4544 = vmatpush1.bf16.msra.mxu0 %v4415
    %4545 = vmatprep.subr.bf16.mxu0 %v4418
    %4546 = vmatpush1.bf16.msra.mxu0 %v4417
    %4547 = vmatprep.subr.bf16.mxu0 %v4420
    %4548 = vmatpush1.bf16.msra.mxu0 %v4419
    %4549 = vmatprep.subr.bf16.mxu0 %v4422
    %4550 = vmatpush1.bf16.msra.mxu0 %v4421
    %4551 = vmatprep.subr.bf16.mxu0 %v4424
    %4552 = vmatpush1.bf16.msra.mxu0 %v4423
    %4553 = vmatprep.subr.bf16.mxu0 %v4426
    %4554 = vmatpush1.bf16.msra.mxu0 %v4425
    %4555 = vmatprep.subr.bf16.mxu0 %v4428
    %4556 = vmatpush1.bf16.msra.mxu0 %v4427
    %4557 = vmatprep.mubr.bf16.mxu0 %v4125
    %4558 = vmatmul.mubr.bf16.gmra.mrb[0].mxu0 %v4124
    %v4559 = vpop.f32.mrb[0].mxu0
    %v4560 = vadd.f32 %v4198, %v4559
    %v4561 = vpop.f32.mrb[0].mxu0
    %v4562 = vadd.f32 %v4202, %v4561
    %v4563 = vpop.f32.mrb[0].mxu0
    %v4564 = vpop.f32.mrb[0].mxu0
    %4565 = vdwg.mxu0
    %4566 = vmatprep.subr.bf16.mxu0 %v4430
    %4567 = vmatpush1.bf16.msra.mxu0 %v4429
    %4568 = vmatprep.subr.bf16.mxu0 %v4432
    %4569 = vmatpush1.bf16.msra.mxu0 %v4431
    %4570 = vmatprep.subr.bf16.mxu0 %v4434
    %4571 = vmatpush1.bf16.msra.mxu0 %v4433
    %4572 = vmatprep.subr.bf16.mxu0 %v4436
    %4573 = vmatpush1.bf16.msra.mxu0 %v4435
    %4574 = vmatprep.subr.bf16.mxu0 %v4438
    %4575 = vmatpush1.bf16.msra.mxu0 %v4437
    %4576 = vmatprep.subr.bf16.mxu0 %v4440
    %4577 = vmatpush1.bf16.msra.mxu0 %v4439
    %4578 = vmatprep.subr.bf16.mxu0 %v4442
    %4579 = vmatpush1.bf16.msra.mxu0 %v4441
    %4580 = vmatprep.subr.bf16.mxu0 %v4444
    %4581 = vmatpush1.bf16.msra.mxu0 %v4443
    %4582 = vmatprep.subr.bf16.mxu0 %v4446
    %4583 = vmatpush1.bf16.msra.mxu0 %v4445
    %4584 = vmatprep.subr.bf16.mxu0 %v4448
    %4585 = vmatpush1.bf16.msra.mxu0 %v4447
    %4586 = vmatprep.subr.bf16.mxu0 %v4450
    %4587 = vmatpush1.bf16.msra.mxu0 %v4449
    %4588 = vmatprep.subr.bf16.mxu0 %v4452
    %4589 = vmatpush1.bf16.msra.mxu0 %v4451
    %4590 = vmatprep.subr.bf16.mxu0 %v4454
    %4591 = vmatpush1.bf16.msra.mxu0 %v4453
    %4592 = vmatprep.subr.bf16.mxu0 %v4456
    %4593 = vmatpush1.bf16.msra.mxu0 %v4455
    %4594 = vmatprep.subr.bf16.mxu0 %v4458
    %4595 = vmatpush1.bf16.msra.mxu0 %v4457
    %4596 = vmatprep.subr.bf16.mxu0 %v4460
    %4597 = vmatpush1.bf16.msra.mxu0 %v4459
    %4598 = vmatprep.mubr.bf16.mxu0 %v4127
    %4599 = vmatmul.mubr.bf16.gmra.mrb[0].mxu0 %v4126
    %v4600 = vpop.f32.mrb[0].mxu0
    %v4601 = vadd.f32 %v4560, %v4600
    %v4602 = vpop.f32.mrb[0].mxu0
    %v4603 = vadd.f32 %v4562, %v4602
    %v4604 = vpop.f32.mrb[0].mxu0
    %v4605 = vpop.f32.mrb[0].mxu0
    %4606 = vdwg.mxu0
    %vm4607 = vcmp.gt.f32.partialorder %v4601, 0.0
    %vm4608 = vcmp.gt.f32.partialorder %v4603, 0.0
    %v4609 = vmul.f32 %v4601, 0.01
    %v4610 = vmul.f32 %v4603, 0.01
    %v4611 = vsel %vm4607, %v4601, %v4609
    %v4612 = vsel %vm4608, %v4603, %v4610
    %v4613 = vpack.c.bf16 %v4611, %v4611
    %v4614 = vpack.c.bf16 %v4612, %v4612
    %v4615 = vld [vmem:[#allocation2 + $0x1088] sm:$0xff]
    %v4616 = vld [vmem:[#allocation2 + $0x1098] sm:$0xff]
    %v4617 = vld [vmem:[#allocation2 + $0x10a8] sm:$0xff]
    %v4618 = vld [vmem:[#allocation2 + $0x10b8] sm:$0xff]
    %v4619 = vld [vmem:[#allocation2 + $0x10c8] sm:$0xff]
    %v4620 = vld [vmem:[#allocation2 + $0x10d8] sm:$0xff]
    %v4621 = vld [vmem:[#allocation2 + $0x10e8] sm:$0xff]
    %v4622 = vld [vmem:[#allocation2 + $0x10f8] sm:$0xff]
    %v4623 = vld [vmem:[#allocation2 + $0x1108] sm:$0xff]
    %v4624 = vld [vmem:[#allocation2 + $0x1118] sm:$0xff]
    %v4625 = vld [vmem:[#allocation2 + $0x1128] sm:$0xff]
    %v4626 = vld [vmem:[#allocation2 + $0x1138] sm:$0xff]
    %v4627 = vld [vmem:[#allocation2 + $0x1148] sm:$0xff]
    %v4628 = vld [vmem:[#allocation2 + $0x1158] sm:$0xff]
    %v4629 = vld [vmem:[#allocation2 + $0x1168] sm:$0xff]
    %v4630 = vld [vmem:[#allocation2 + $0x1178] sm:$0xff]
    %v4631 = vld [vmem:[#allocation2 + $0x1188] sm:$0xff]
    %v4632 = vld [vmem:[#allocation2 + $0x1198] sm:$0xff]
    %v4633 = vld [vmem:[#allocation2 + $0x11a8] sm:$0xff]
    %v4634 = vld [vmem:[#allocation2 + $0x11b8] sm:$0xff]
    %v4635 = vld [vmem:[#allocation2 + $0x11c8] sm:$0xff]
    %v4636 = vld [vmem:[#allocation2 + $0x11d8] sm:$0xff]
    %v4637 = vld [vmem:[#allocation2 + $0x11e8] sm:$0xff]
    %v4638 = vld [vmem:[#allocation2 + $0x11f8] sm:$0xff]
    %v4639 = vld [vmem:[#allocation2 + $0x1208] sm:$0xff]
    %v4640 = vld [vmem:[#allocation2 + $0x1218] sm:$0xff]
    %v4641 = vld [vmem:[#allocation2 + $0x1228] sm:$0xff]
    %v4642 = vld [vmem:[#allocation2 + $0x1238] sm:$0xff]
    %v4643 = vld [vmem:[#allocation2 + $0x1248] sm:$0xff]
    %v4644 = vld [vmem:[#allocation2 + $0x1258] sm:$0xff]
    %v4645 = vld [vmem:[#allocation2 + $0x1268] sm:$0xff]
    %v4646 = vld [vmem:[#allocation2 + $0x1278] sm:$0xff]
    %s4647 = scalar_lea.vmem [#allocation4], 5
    %v4648 = vld [vmem:[%s4647] ss:$8 sm:$0x3]
    %v4650 = vlaneseq
    %v4651 = vshrl.u32 %v4650, 7
    %v4652 = vsub.s32 0, %v4651
    %v4653 = vrot.slane %v4648, %v4652
    %v4654 = vlaneseq
    %v4655 = vshrl.u32 %v4654, 7
    %v4656 = vsub.s32 1, %v4655
    %v4657 = vrot.slane %v4648, %v4656
    %v4692 = vunpack.c.l.b16 %v4615
    %v4693 = vunpack.c.h.b16 %v4615
    %v4694 = vunpack.c.l.b16 %v4616
    %v4695 = vunpack.c.h.b16 %v4616
    %v4696 = vunpack.c.l.b16 %v4617
    %v4697 = vunpack.c.h.b16 %v4617
    %v4698 = vunpack.c.l.b16 %v4618
    %v4699 = vunpack.c.h.b16 %v4618
    %v4700 = vunpack.c.l.b16 %v4619
    %v4701 = vunpack.c.h.b16 %v4619
    %v4702 = vunpack.c.l.b16 %v4620
    %v4703 = vunpack.c.h.b16 %v4620
    %v4704 = vunpack.c.l.b16 %v4621
    %v4705 = vunpack.c.h.b16 %v4621
    %v4706 = vunpack.c.l.b16 %v4622
    %v4707 = vunpack.c.h.b16 %v4622
    %v4708 = vunpack.c.l.b16 %v4623
    %v4709 = vunpack.c.h.b16 %v4623
    %v4710 = vunpack.c.l.b16 %v4624
    %v4711 = vunpack.c.h.b16 %v4624
    %v4712 = vunpack.c.l.b16 %v4625
    %v4713 = vunpack.c.h.b16 %v4625
    %v4714 = vunpack.c.l.b16 %v4626
    %v4715 = vunpack.c.h.b16 %v4626
    %v4716 = vunpack.c.l.b16 %v4627
    %v4717 = vunpack.c.h.b16 %v4627
    %v4718 = vunpack.c.l.b16 %v4628
    %v4719 = vunpack.c.h.b16 %v4628
    %v4720 = vunpack.c.l.b16 %v4629
    %v4721 = vunpack.c.h.b16 %v4629
    %v4722 = vunpack.c.l.b16 %v4630
    %v4723 = vunpack.c.h.b16 %v4630
    %v4724 = vunpack.c.l.b16 %v4631
    %v4725 = vunpack.c.h.b16 %v4631
    %v4726 = vunpack.c.l.b16 %v4632
    %v4727 = vunpack.c.h.b16 %v4632
    %v4728 = vunpack.c.l.b16 %v4633
    %v4729 = vunpack.c.h.b16 %v4633
    %v4730 = vunpack.c.l.b16 %v4634
    %v4731 = vunpack.c.h.b16 %v4634
    %v4732 = vunpack.c.l.b16 %v4635
    %v4733 = vunpack.c.h.b16 %v4635
    %v4734 = vunpack.c.l.b16 %v4636
    %v4735 = vunpack.c.h.b16 %v4636
    %v4736 = vunpack.c.l.b16 %v4637
    %v4737 = vunpack.c.h.b16 %v4637
    %v4738 = vunpack.c.l.b16 %v4638
    %v4739 = vunpack.c.h.b16 %v4638
    %v4740 = vunpack.c.l.b16 %v4639
    %v4741 = vunpack.c.h.b16 %v4639
    %v4742 = vunpack.c.l.b16 %v4640
    %v4743 = vunpack.c.h.b16 %v4640
    %v4744 = vunpack.c.l.b16 %v4641
    %v4745 = vunpack.c.h.b16 %v4641
    %v4746 = vunpack.c.l.b16 %v4642
    %v4747 = vunpack.c.h.b16 %v4642
    %v4748 = vunpack.c.l.b16 %v4643
    %v4749 = vunpack.c.h.b16 %v4643
    %v4750 = vunpack.c.l.b16 %v4644
    %v4751 = vunpack.c.h.b16 %v4644
    %v4752 = vunpack.c.l.b16 %v4645
    %v4753 = vunpack.c.h.b16 %v4645
    %v4754 = vunpack.c.l.b16 %v4646
    %v4755 = vunpack.c.h.b16 %v4646
    %v4756 = vpack.c.b16 %v4694, %v4692
    %v4757 = vpack.c.b16 %v4695, %v4693
    %v4758 = vpack.c.b16 %v4698, %v4696
    %v4759 = vpack.c.b16 %v4699, %v4697
    %v4760 = vpack.c.b16 %v4702, %v4700
    %v4761 = vpack.c.b16 %v4703, %v4701
    %v4762 = vpack.c.b16 %v4706, %v4704
    %v4763 = vpack.c.b16 %v4707, %v4705
    %v4764 = vpack.c.b16 %v4710, %v4708
    %v4765 = vpack.c.b16 %v4711, %v4709
    %v4766 = vpack.c.b16 %v4714, %v4712
    %v4767 = vpack.c.b16 %v4715, %v4713
    %v4768 = vpack.c.b16 %v4718, %v4716
    %v4769 = vpack.c.b16 %v4719, %v4717
    %v4770 = vpack.c.b16 %v4722, %v4720
    %v4771 = vpack.c.b16 %v4723, %v4721
    %v4772 = vpack.c.b16 %v4726, %v4724
    %v4773 = vpack.c.b16 %v4727, %v4725
    %v4774 = vpack.c.b16 %v4730, %v4728
    %v4775 = vpack.c.b16 %v4731, %v4729
    %v4776 = vpack.c.b16 %v4734, %v4732
    %v4777 = vpack.c.b16 %v4735, %v4733
    %v4778 = vpack.c.b16 %v4738, %v4736
    %v4779 = vpack.c.b16 %v4739, %v4737
    %v4780 = vpack.c.b16 %v4742, %v4740
    %v4781 = vpack.c.b16 %v4743, %v4741
    %v4782 = vpack.c.b16 %v4746, %v4744
    %v4783 = vpack.c.b16 %v4747, %v4745
    %v4784 = vpack.c.b16 %v4750, %v4748
    %v4785 = vpack.c.b16 %v4751, %v4749
    %v4786 = vpack.c.b16 %v4754, %v4752
    %v4787 = vpack.c.b16 %v4755, %v4753
    %4820 = vmatprep.subr.bf16.mxu0 %v4757
    %4821 = vmatpush1.bf16.msra.mxu0 %v4756
    %4822 = vmatprep.subr.bf16.mxu0 %v4759
    %4823 = vmatpush1.bf16.msra.mxu0 %v4758
    %4824 = vmatprep.subr.bf16.mxu0 %v4761
    %4825 = vmatpush1.bf16.msra.mxu0 %v4760
    %4826 = vmatprep.subr.bf16.mxu0 %v4763
    %4827 = vmatpush1.bf16.msra.mxu0 %v4762
    %4828 = vmatprep.subr.bf16.mxu0 %v4765
    %4829 = vmatpush1.bf16.msra.mxu0 %v4764
    %4830 = vmatprep.subr.bf16.mxu0 %v4767
    %4831 = vmatpush1.bf16.msra.mxu0 %v4766
    %4832 = vmatprep.subr.bf16.mxu0 %v4769
    %4833 = vmatpush1.bf16.msra.mxu0 %v4768
    %4834 = vmatprep.subr.bf16.mxu0 %v4771
    %4835 = vmatpush1.bf16.msra.mxu0 %v4770
    %4836 = vmatprep.subr.bf16.mxu0 %v4773
    %4837 = vmatpush1.bf16.msra.mxu0 %v4772
    %4838 = vmatprep.subr.bf16.mxu0 %v4775
    %4839 = vmatpush1.bf16.msra.mxu0 %v4774
    %4840 = vmatprep.subr.bf16.mxu0 %v4777
    %4841 = vmatpush1.bf16.msra.mxu0 %v4776
    %4842 = vmatprep.subr.bf16.mxu0 %v4779
    %4843 = vmatpush1.bf16.msra.mxu0 %v4778
    %4844 = vmatprep.subr.bf16.mxu0 %v4781
    %4845 = vmatpush1.bf16.msra.mxu0 %v4780
    %4846 = vmatprep.subr.bf16.mxu0 %v4783
    %4847 = vmatpush1.bf16.msra.mxu0 %v4782
    %4848 = vmatprep.subr.bf16.mxu0 %v4785
    %4849 = vmatpush1.bf16.msra.mxu0 %v4784
    %4850 = vmatprep.subr.bf16.mxu0 %v4787
    %4851 = vmatpush1.bf16.msra.mxu0 %v4786
    %4852 = vmatprep.mubr.bf16.mxu0 %v4614
    %4853 = vmatmul.mubr.bf16.gmra.mrb[0].mxu0 %v4613
    %v4854 = vpop.f32.mrb[0].mxu0
    %v4855 = vadd.f32 %v4653, %v4854
    %v4856 = vpop.f32.mrb[0].mxu0
    %v4857 = vadd.f32 %v4657, %v4856
    %v4858 = vpop.f32.mrb[0].mxu0
    %v4859 = vpop.f32.mrb[0].mxu0
    %4860 = vdwg.mxu0
    %vm4861 = vcmp.gt.f32.partialorder %v4855, 0.0
    %vm4862 = vcmp.gt.f32.partialorder %v4857, 0.0
    %v4863 = vmul.f32 %v4855, 0.01
    %v4864 = vmul.f32 %v4857, 0.01
    %v4865 = vsel %vm4861, %v4855, %v4863
    %v4866 = vsel %vm4862, %v4857, %v4864
    %v4867 = vpack.c.bf16 %v4865, %v4865
    %v4868 = vpack.c.bf16 %v4866, %v4866
    %v4869 = vld [vmem:[#allocation2 + $0x1288] sm:$0xff]
    %v4870 = vld [vmem:[#allocation2 + $0x1298] sm:$0xff]
    %v4871 = vld [vmem:[#allocation2 + $0x12a8] sm:$0xff]
    %v4872 = vld [vmem:[#allocation2 + $0x12b8] sm:$0xff]
    %v4873 = vld [vmem:[#allocation2 + $0x12c8] sm:$0xff]
    %v4874 = vld [vmem:[#allocation2 + $0x12d8] sm:$0xff]
    %v4875 = vld [vmem:[#allocation2 + $0x12e8] sm:$0xff]
    %v4876 = vld [vmem:[#allocation2 + $0x12f8] sm:$0xff]
    %v4877 = vld [vmem:[#allocation2 + $0x1308] sm:$0xff]
    %v4878 = vld [vmem:[#allocation2 + $0x1318] sm:$0xff]
    %v4879 = vld [vmem:[#allocation2 + $0x1328] sm:$0xff]
    %v4880 = vld [vmem:[#allocation2 + $0x1338] sm:$0xff]
    %v4881 = vld [vmem:[#allocation2 + $0x1348] sm:$0xff]
    %v4882 = vld [vmem:[#allocation2 + $0x1358] sm:$0xff]
    %v4883 = vld [vmem:[#allocation2 + $0x1368] sm:$0xff]
    %v4884 = vld [vmem:[#allocation2 + $0x1378] sm:$0xff]
    %v4885 = vld [vmem:[#allocation2 + $0x1388] sm:$0xff]
    %v4886 = vld [vmem:[#allocation2 + $0x1398] sm:$0xff]
    %v4887 = vld [vmem:[#allocation2 + $0x13a8] sm:$0xff]
    %v4888 = vld [vmem:[#allocation2 + $0x13b8] sm:$0xff]
    %v4889 = vld [vmem:[#allocation2 + $0x13c8] sm:$0xff]
    %v4890 = vld [vmem:[#allocation2 + $0x13d8] sm:$0xff]
    %v4891 = vld [vmem:[#allocation2 + $0x13e8] sm:$0xff]
    %v4892 = vld [vmem:[#allocation2 + $0x13f8] sm:$0xff]
    %v4893 = vld [vmem:[#allocation2 + $0x1408] sm:$0xff]
    %v4894 = vld [vmem:[#allocation2 + $0x1418] sm:$0xff]
    %v4895 = vld [vmem:[#allocation2 + $0x1428] sm:$0xff]
    %v4896 = vld [vmem:[#allocation2 + $0x1438] sm:$0xff]
    %v4897 = vld [vmem:[#allocation2 + $0x1448] sm:$0xff]
    %v4898 = vld [vmem:[#allocation2 + $0x1458] sm:$0xff]
    %v4899 = vld [vmem:[#allocation2 + $0x1468] sm:$0xff]
    %v4900 = vld [vmem:[#allocation2 + $0x1478] sm:$0xff]
    %s4901 = scalar_lea.vmem [#allocation4], 6
    %v4902 = vld [vmem:[%s4901] ss:$8 sm:$0x3]
    %v4904 = vlaneseq
    %v4905 = vshrl.u32 %v4904, 7
    %v4906 = vsub.s32 0, %v4905
    %v4907 = vrot.slane %v4902, %v4906
    %v4908 = vlaneseq
    %v4909 = vshrl.u32 %v4908, 7
    %v4910 = vsub.s32 1, %v4909
    %v4911 = vrot.slane %v4902, %v4910
    %v4946 = vunpack.c.l.b16 %v4869
    %v4947 = vunpack.c.h.b16 %v4869
    %v4948 = vunpack.c.l.b16 %v4870
    %v4949 = vunpack.c.h.b16 %v4870
    %v4950 = vunpack.c.l.b16 %v4871
    %v4951 = vunpack.c.h.b16 %v4871
    %v4952 = vunpack.c.l.b16 %v4872
    %v4953 = vunpack.c.h.b16 %v4872
    %v4954 = vunpack.c.l.b16 %v4873
    %v4955 = vunpack.c.h.b16 %v4873
    %v4956 = vunpack.c.l.b16 %v4874
    %v4957 = vunpack.c.h.b16 %v4874
    %v4958 = vunpack.c.l.b16 %v4875
    %v4959 = vunpack.c.h.b16 %v4875
    %v4960 = vunpack.c.l.b16 %v4876
    %v4961 = vunpack.c.h.b16 %v4876
    %v4962 = vunpack.c.l.b16 %v4877
    %v4963 = vunpack.c.h.b16 %v4877
    %v4964 = vunpack.c.l.b16 %v4878
    %v4965 = vunpack.c.h.b16 %v4878
    %v4966 = vunpack.c.l.b16 %v4879
    %v4967 = vunpack.c.h.b16 %v4879
    %v4968 = vunpack.c.l.b16 %v4880
    %v4969 = vunpack.c.h.b16 %v4880
    %v4970 = vunpack.c.l.b16 %v4881
    %v4971 = vunpack.c.h.b16 %v4881
    %v4972 = vunpack.c.l.b16 %v4882
    %v4973 = vunpack.c.h.b16 %v4882
    %v4974 = vunpack.c.l.b16 %v4883
    %v4975 = vunpack.c.h.b16 %v4883
    %v4976 = vunpack.c.l.b16 %v4884
    %v4977 = vunpack.c.h.b16 %v4884
    %v4978 = vunpack.c.l.b16 %v4885
    %v4979 = vunpack.c.h.b16 %v4885
    %v4980 = vunpack.c.l.b16 %v4886
    %v4981 = vunpack.c.h.b16 %v4886
    %v4982 = vunpack.c.l.b16 %v4887
    %v4983 = vunpack.c.h.b16 %v4887
    %v4984 = vunpack.c.l.b16 %v4888
    %v4985 = vunpack.c.h.b16 %v4888
    %v4986 = vunpack.c.l.b16 %v4889
    %v4987 = vunpack.c.h.b16 %v4889
    %v4988 = vunpack.c.l.b16 %v4890
    %v4989 = vunpack.c.h.b16 %v4890
    %v4990 = vunpack.c.l.b16 %v4891
    %v4991 = vunpack.c.h.b16 %v4891
    %v4992 = vunpack.c.l.b16 %v4892
    %v4993 = vunpack.c.h.b16 %v4892
    %v4994 = vunpack.c.l.b16 %v4893
    %v4995 = vunpack.c.h.b16 %v4893
    %v4996 = vunpack.c.l.b16 %v4894
    %v4997 = vunpack.c.h.b16 %v4894
    %v4998 = vunpack.c.l.b16 %v4895
    %v4999 = vunpack.c.h.b16 %v4895
    %v5000 = vunpack.c.l.b16 %v4896
    %v5001 = vunpack.c.h.b16 %v4896
    %v5002 = vunpack.c.l.b16 %v4897
    %v5003 = vunpack.c.h.b16 %v4897
    %v5004 = vunpack.c.l.b16 %v4898
    %v5005 = vunpack.c.h.b16 %v4898
    %v5006 = vunpack.c.l.b16 %v4899
    %v5007 = vunpack.c.h.b16 %v4899
    %v5008 = vunpack.c.l.b16 %v4900
    %v5009 = vunpack.c.h.b16 %v4900
    %v5010 = vpack.c.b16 %v4948, %v4946
    %v5011 = vpack.c.b16 %v4949, %v4947
    %v5012 = vpack.c.b16 %v4952, %v4950
    %v5013 = vpack.c.b16 %v4953, %v4951
    %v5014 = vpack.c.b16 %v4956, %v4954
    %v5015 = vpack.c.b16 %v4957, %v4955
    %v5016 = vpack.c.b16 %v4960, %v4958
    %v5017 = vpack.c.b16 %v4961, %v4959
    %v5018 = vpack.c.b16 %v4964, %v4962
    %v5019 = vpack.c.b16 %v4965, %v4963
    %v5020 = vpack.c.b16 %v4968, %v4966
    %v5021 = vpack.c.b16 %v4969, %v4967
    %v5022 = vpack.c.b16 %v4972, %v4970
    %v5023 = vpack.c.b16 %v4973, %v4971
    %v5024 = vpack.c.b16 %v4976, %v4974
    %v5025 = vpack.c.b16 %v4977, %v4975
    %v5026 = vpack.c.b16 %v4980, %v4978
    %v5027 = vpack.c.b16 %v4981, %v4979
    %v5028 = vpack.c.b16 %v4984, %v4982
    %v5029 = vpack.c.b16 %v4985, %v4983
    %v5030 = vpack.c.b16 %v4988, %v4986
    %v5031 = vpack.c.b16 %v4989, %v4987
    %v5032 = vpack.c.b16 %v4992, %v4990
    %v5033 = vpack.c.b16 %v4993, %v4991
    %v5034 = vpack.c.b16 %v4996, %v4994
    %v5035 = vpack.c.b16 %v4997, %v4995
    %v5036 = vpack.c.b16 %v5000, %v4998
    %v5037 = vpack.c.b16 %v5001, %v4999
    %v5038 = vpack.c.b16 %v5004, %v5002
    %v5039 = vpack.c.b16 %v5005, %v5003
    %v5040 = vpack.c.b16 %v5008, %v5006
    %v5041 = vpack.c.b16 %v5009, %v5007
    %5074 = vmatprep.subr.bf16.mxu0 %v5011
    %5075 = vmatpush1.bf16.msra.mxu0 %v5010
    %5076 = vmatprep.subr.bf16.mxu0 %v5013
    %5077 = vmatpush1.bf16.msra.mxu0 %v5012
    %5078 = vmatprep.subr.bf16.mxu0 %v5015
    %5079 = vmatpush1.bf16.msra.mxu0 %v5014
    %5080 = vmatprep.subr.bf16.mxu0 %v5017
    %5081 = vmatpush1.bf16.msra.mxu0 %v5016
    %5082 = vmatprep.subr.bf16.mxu0 %v5019
    %5083 = vmatpush1.bf16.msra.mxu0 %v5018
    %5084 = vmatprep.subr.bf16.mxu0 %v5021
    %5085 = vmatpush1.bf16.msra.mxu0 %v5020
    %5086 = vmatprep.subr.bf16.mxu0 %v5023
    %5087 = vmatpush1.bf16.msra.mxu0 %v5022
    %5088 = vmatprep.subr.bf16.mxu0 %v5025
    %5089 = vmatpush1.bf16.msra.mxu0 %v5024
    %5090 = vmatprep.subr.bf16.mxu0 %v5027
    %5091 = vmatpush1.bf16.msra.mxu0 %v5026
    %5092 = vmatprep.subr.bf16.mxu0 %v5029
    %5093 = vmatpush1.bf16.msra.mxu0 %v5028
    %5094 = vmatprep.subr.bf16.mxu0 %v5031
    %5095 = vmatpush1.bf16.msra.mxu0 %v5030
    %5096 = vmatprep.subr.bf16.mxu0 %v5033
    %5097 = vmatpush1.bf16.msra.mxu0 %v5032
    %5098 = vmatprep.subr.bf16.mxu0 %v5035
    %5099 = vmatpush1.bf16.msra.mxu0 %v5034
    %5100 = vmatprep.subr.bf16.mxu0 %v5037
    %5101 = vmatpush1.bf16.msra.mxu0 %v5036
    %5102 = vmatprep.subr.bf16.mxu0 %v5039
    %5103 = vmatpush1.bf16.msra.mxu0 %v5038
    %5104 = vmatprep.subr.bf16.mxu0 %v5041
    %5105 = vmatpush1.bf16.msra.mxu0 %v5040
    %5106 = vmatprep.mubr.bf16.mxu0 %v4868
    %5107 = vmatmul.mubr.bf16.gmra.mrb[0].mxu0 %v4867
    %v5108 = vpop.f32.mrb[0].mxu0
    %v5109 = vadd.f32 %v4907, %v5108
    %v5110 = vpop.f32.mrb[0].mxu0
    %v5111 = vadd.f32 %v4911, %v5110
    %v5112 = vpop.f32.mrb[0].mxu0
    %v5113 = vpop.f32.mrb[0].mxu0
    %5114 = vdwg.mxu0
    %vm5115 = vcmp.gt.f32.partialorder %v5109, 0.0
    %vm5116 = vcmp.gt.f32.partialorder %v5111, 0.0
    %v5117 = vmul.f32 %v5109, 0.01
    %v5118 = vmul.f32 %v5111, 0.01
    %v5119 = vsel %vm5115, %v5109, %v5117
    %v5120 = vsel %vm5116, %v5111, %v5118
    %v5121 = vpack.c.bf16 %v5119, %v5119
    %v5122 = vpack.c.bf16 %v5120, %v5120
    %v5123 = vld [vmem:[#allocation2 + $0x1480] sm:$0xff]
    %v5124 = vld [vmem:[#allocation2 + $0x1490] sm:$0xff]
    %v5125 = vld [vmem:[#allocation2 + $0x14a0] sm:$0xff]
    %v5126 = vld [vmem:[#allocation2 + $0x14b0] sm:$0xff]
    %v5127 = vld [vmem:[#allocation2 + $0x14c0] sm:$0xff]
    %v5128 = vld [vmem:[#allocation2 + $0x14d0] sm:$0xff]
    %v5129 = vld [vmem:[#allocation2 + $0x14e0] sm:$0xff]
    %v5130 = vld [vmem:[#allocation2 + $0x14f0] sm:$0xff]
    %v5131 = vld [vmem:[#allocation2 + $0x1500] sm:$0xff]
    %v5132 = vld [vmem:[#allocation2 + $0x1510] sm:$0xff]
    %v5133 = vld [vmem:[#allocation2 + $0x1520] sm:$0xff]
    %v5134 = vld [vmem:[#allocation2 + $0x1530] sm:$0xff]
    %v5135 = vld [vmem:[#allocation2 + $0x1540] sm:$0xff]
    %v5136 = vld [vmem:[#allocation2 + $0x1550] sm:$0xff]
    %v5137 = vld [vmem:[#allocation2 + $0x1560] sm:$0xff]
    %v5138 = vld [vmem:[#allocation2 + $0x1570] sm:$0xff]
    %v5139 = vld [vmem:[#allocation2 + $0x1580] sm:$0xff]
    %v5140 = vld [vmem:[#allocation2 + $0x1590] sm:$0xff]
    %v5141 = vld [vmem:[#allocation2 + $0x15a0] sm:$0xff]
    %v5142 = vld [vmem:[#allocation2 + $0x15b0] sm:$0xff]
    %v5143 = vld [vmem:[#allocation2 + $0x15c0] sm:$0xff]
    %v5144 = vld [vmem:[#allocation2 + $0x15d0] sm:$0xff]
    %v5145 = vld [vmem:[#allocation2 + $0x15e0] sm:$0xff]
    %v5146 = vld [vmem:[#allocation2 + $0x15f0] sm:$0xff]
    %v5147 = vld [vmem:[#allocation2 + $0x1600] sm:$0xff]
    %v5148 = vld [vmem:[#allocation2 + $0x1610] sm:$0xff]
    %v5149 = vld [vmem:[#allocation2 + $0x1620] sm:$0xff]
    %v5150 = vld [vmem:[#allocation2 + $0x1630] sm:$0xff]
    %v5151 = vld [vmem:[#allocation2 + $0x1640] sm:$0xff]
    %v5152 = vld [vmem:[#allocation2 + $0x1650] sm:$0xff]
    %v5153 = vld [vmem:[#allocation2 + $0x1660] sm:$0xff]
    %v5154 = vld [vmem:[#allocation2 + $0x1670] sm:$0xff]
    %s5155 = scalar_lea.vmem [#allocation4], 7
    %v5156 = vld [vmem:[%s5155] ss:$8 sm:$0x3]
    %v5158 = vlaneseq
    %v5159 = vshrl.u32 %v5158, 7
    %v5160 = vsub.s32 0, %v5159
    %v5161 = vrot.slane %v5156, %v5160
    %v5162 = vlaneseq
    %v5163 = vshrl.u32 %v5162, 7
    %v5164 = vsub.s32 1, %v5163
    %v5165 = vrot.slane %v5156, %v5164
    %v5200 = vunpack.c.l.b16 %v5123
    %v5201 = vunpack.c.h.b16 %v5123
    %v5202 = vunpack.c.l.b16 %v5124
    %v5203 = vunpack.c.h.b16 %v5124
    %v5204 = vunpack.c.l.b16 %v5125
    %v5205 = vunpack.c.h.b16 %v5125
    %v5206 = vunpack.c.l.b16 %v5126
    %v5207 = vunpack.c.h.b16 %v5126
    %v5208 = vunpack.c.l.b16 %v5127
    %v5209 = vunpack.c.h.b16 %v5127
    %v5210 = vunpack.c.l.b16 %v5128
    %v5211 = vunpack.c.h.b16 %v5128
    %v5212 = vunpack.c.l.b16 %v5129
    %v5213 = vunpack.c.h.b16 %v5129
    %v5214 = vunpack.c.l.b16 %v5130
    %v5215 = vunpack.c.h.b16 %v5130
    %v5216 = vunpack.c.l.b16 %v5131
    %v5217 = vunpack.c.h.b16 %v5131
    %v5218 = vunpack.c.l.b16 %v5132
    %v5219 = vunpack.c.h.b16 %v5132
    %v5220 = vunpack.c.l.b16 %v5133
    %v5221 = vunpack.c.h.b16 %v5133
    %v5222 = vunpack.c.l.b16 %v5134
    %v5223 = vunpack.c.h.b16 %v5134
    %v5224 = vunpack.c.l.b16 %v5135
    %v5225 = vunpack.c.h.b16 %v5135
    %v5226 = vunpack.c.l.b16 %v5136
    %v5227 = vunpack.c.h.b16 %v5136
    %v5228 = vunpack.c.l.b16 %v5137
    %v5229 = vunpack.c.h.b16 %v5137
    %v5230 = vunpack.c.l.b16 %v5138
    %v5231 = vunpack.c.h.b16 %v5138
    %v5232 = vunpack.c.l.b16 %v5139
    %v5233 = vunpack.c.h.b16 %v5139
    %v5234 = vunpack.c.l.b16 %v5140
    %v5235 = vunpack.c.h.b16 %v5140
    %v5236 = vunpack.c.l.b16 %v5141
    %v5237 = vunpack.c.h.b16 %v5141
    %v5238 = vunpack.c.l.b16 %v5142
    %v5239 = vunpack.c.h.b16 %v5142
    %v5240 = vunpack.c.l.b16 %v5143
    %v5241 = vunpack.c.h.b16 %v5143
    %v5242 = vunpack.c.l.b16 %v5144
    %v5243 = vunpack.c.h.b16 %v5144
    %v5244 = vunpack.c.l.b16 %v5145
    %v5245 = vunpack.c.h.b16 %v5145
    %v5246 = vunpack.c.l.b16 %v5146
    %v5247 = vunpack.c.h.b16 %v5146
    %v5248 = vunpack.c.l.b16 %v5147
    %v5249 = vunpack.c.h.b16 %v5147
    %v5250 = vunpack.c.l.b16 %v5148
    %v5251 = vunpack.c.h.b16 %v5148
    %v5252 = vunpack.c.l.b16 %v5149
    %v5253 = vunpack.c.h.b16 %v5149
    %v5254 = vunpack.c.l.b16 %v5150
    %v5255 = vunpack.c.h.b16 %v5150
    %v5256 = vunpack.c.l.b16 %v5151
    %v5257 = vunpack.c.h.b16 %v5151
    %v5258 = vunpack.c.l.b16 %v5152
    %v5259 = vunpack.c.h.b16 %v5152
    %v5260 = vunpack.c.l.b16 %v5153
    %v5261 = vunpack.c.h.b16 %v5153
    %v5262 = vunpack.c.l.b16 %v5154
    %v5263 = vunpack.c.h.b16 %v5154
    %v5264 = vpack.c.b16 %v5202, %v5200
    %v5265 = vpack.c.b16 %v5203, %v5201
    %v5266 = vpack.c.b16 %v5206, %v5204
    %v5267 = vpack.c.b16 %v5207, %v5205
    %v5268 = vpack.c.b16 %v5210, %v5208
    %v5269 = vpack.c.b16 %v5211, %v5209
    %v5270 = vpack.c.b16 %v5214, %v5212
    %v5271 = vpack.c.b16 %v5215, %v5213
    %v5272 = vpack.c.b16 %v5218, %v5216
    %v5273 = vpack.c.b16 %v5219, %v5217
    %v5274 = vpack.c.b16 %v5222, %v5220
    %v5275 = vpack.c.b16 %v5223, %v5221
    %v5276 = vpack.c.b16 %v5226, %v5224
    %v5277 = vpack.c.b16 %v5227, %v5225
    %v5278 = vpack.c.b16 %v5230, %v5228
    %v5279 = vpack.c.b16 %v5231, %v5229
    %v5280 = vpack.c.b16 %v5234, %v5232
    %v5281 = vpack.c.b16 %v5235, %v5233
    %v5282 = vpack.c.b16 %v5238, %v5236
    %v5283 = vpack.c.b16 %v5239, %v5237
    %v5284 = vpack.c.b16 %v5242, %v5240
    %v5285 = vpack.c.b16 %v5243, %v5241
    %v5286 = vpack.c.b16 %v5246, %v5244
    %v5287 = vpack.c.b16 %v5247, %v5245
    %v5288 = vpack.c.b16 %v5250, %v5248
    %v5289 = vpack.c.b16 %v5251, %v5249
    %v5290 = vpack.c.b16 %v5254, %v5252
    %v5291 = vpack.c.b16 %v5255, %v5253
    %v5292 = vpack.c.b16 %v5258, %v5256
    %v5293 = vpack.c.b16 %v5259, %v5257
    %v5294 = vpack.c.b16 %v5262, %v5260
    %v5295 = vpack.c.b16 %v5263, %v5261
    %5328 = vmatprep.subr.bf16.mxu0 %v5265
    %5329 = vmatpush1.bf16.msra.mxu0 %v5264
    %5330 = vmatprep.subr.bf16.mxu0 %v5267
    %5331 = vmatpush1.bf16.msra.mxu0 %v5266
    %5332 = vmatprep.subr.bf16.mxu0 %v5269
    %5333 = vmatpush1.bf16.msra.mxu0 %v5268
    %5334 = vmatprep.subr.bf16.mxu0 %v5271
    %5335 = vmatpush1.bf16.msra.mxu0 %v5270
    %5336 = vmatprep.subr.bf16.mxu0 %v5273
    %5337 = vmatpush1.bf16.msra.mxu0 %v5272
    %5338 = vmatprep.subr.bf16.mxu0 %v5275
    %5339 = vmatpush1.bf16.msra.mxu0 %v5274
    %5340 = vmatprep.subr.bf16.mxu0 %v5277
    %5341 = vmatpush1.bf16.msra.mxu0 %v5276
    %5342 = vmatprep.subr.bf16.mxu0 %v5279
    %5343 = vmatpush1.bf16.msra.mxu0 %v5278
    %5344 = vmatprep.subr.bf16.mxu0 %v5281
    %5345 = vmatpush1.bf16.msra.mxu0 %v5280
    %5346 = vmatprep.subr.bf16.mxu0 %v5283
    %5347 = vmatpush1.bf16.msra.mxu0 %v5282
    %5348 = vmatprep.subr.bf16.mxu0 %v5285
    %5349 = vmatpush1.bf16.msra.mxu0 %v5284
    %5350 = vmatprep.subr.bf16.mxu0 %v5287
    %5351 = vmatpush1.bf16.msra.mxu0 %v5286
    %5352 = vmatprep.subr.bf16.mxu0 %v5289
    %5353 = vmatpush1.bf16.msra.mxu0 %v5288
    %5354 = vmatprep.subr.bf16.mxu0 %v5291
    %5355 = vmatpush1.bf16.msra.mxu0 %v5290
    %5356 = vmatprep.subr.bf16.mxu0 %v5293
    %5357 = vmatpush1.bf16.msra.mxu0 %v5292
    %5358 = vmatprep.subr.bf16.mxu0 %v5295
    %5359 = vmatpush1.bf16.msra.mxu0 %v5294
    %5360 = vmatprep.mubr.bf16.mxu0 %v5122
    %5361 = vmatmul.mubr.bf16.gmra.mrb[0].mxu0 %v5121
    %v5362 = vpop.f32.mrb[0].mxu0
    %v5363 = vadd.f32 %v5161, %v5362
    %v5364 = vpop.f32.mrb[0].mxu0
    %v5365 = vadd.f32 %v5165, %v5364
    %v5366 = vpop.f32.mrb[0].mxu0
    %v5367 = vpop.f32.mrb[0].mxu0
    %5368 = vdwg.mxu0
    %vm5369 = vcmp.gt.f32.partialorder %v5363, 0.0
    %vm5370 = vcmp.gt.f32.partialorder %v5365, 0.0
    %v5371 = vmul.f32 %v5363, 0.01
    %v5372 = vmul.f32 %v5365, 0.01
    %v5373 = vsel %vm5369, %v5363, %v5371
    %v5374 = vsel %vm5370, %v5365, %v5372
    %v5375 = vpack.c.bf16 %v5373, %v5373
    %v5376 = vpack.c.bf16 %v5374, %v5374
    %v5377 = vld [vmem:[#allocation2 + $0x1488] sm:$0xf]
    %v5378 = vld [vmem:[#allocation2 + $0x1498] sm:$0xf]
    %v5379 = vld [vmem:[#allocation2 + $0x14a8] sm:$0xf]
    %v5380 = vld [vmem:[#allocation2 + $0x14b8] sm:$0xf]
    %v5381 = vld [vmem:[#allocation2 + $0x14c8] sm:$0xf]
    %v5382 = vld [vmem:[#allocation2 + $0x14d8] sm:$0xf]
    %v5383 = vld [vmem:[#allocation2 + $0x14e8] sm:$0xf]
    %v5384 = vld [vmem:[#allocation2 + $0x14f8] sm:$0xf]
    %v5385 = vld [vmem:[#allocation2 + $0x1508] sm:$0xf]
    %v5386 = vld [vmem:[#allocation2 + $0x1518] sm:$0xf]
    %v5387 = vld [vmem:[#allocation2 + $0x1528] sm:$0xf]
    %v5388 = vld [vmem:[#allocation2 + $0x1538] sm:$0xf]
    %v5389 = vld [vmem:[#allocation2 + $0x1548] sm:$0xf]
    %v5390 = vld [vmem:[#allocation2 + $0x1558] sm:$0xf]
    %v5391 = vld [vmem:[#allocation2 + $0x1568] sm:$0xf]
    %v5392 = vld [vmem:[#allocation2 + $0x1578] sm:$0xf]
    %v5393 = vld [vmem:[#allocation2 + $0x1588] sm:$0xf]
    %v5394 = vld [vmem:[#allocation2 + $0x1598] sm:$0xf]
    %v5395 = vld [vmem:[#allocation2 + $0x15a8] sm:$0xf]
    %v5396 = vld [vmem:[#allocation2 + $0x15b8] sm:$0xf]
    %v5397 = vld [vmem:[#allocation2 + $0x15c8] sm:$0xf]
    %v5398 = vld [vmem:[#allocation2 + $0x15d8] sm:$0xf]
    %v5399 = vld [vmem:[#allocation2 + $0x15e8] sm:$0xf]
    %v5400 = vld [vmem:[#allocation2 + $0x15f8] sm:$0xf]
    %v5401 = vld [vmem:[#allocation2 + $0x1608] sm:$0xf]
    %v5402 = vld [vmem:[#allocation2 + $0x1618] sm:$0xf]
    %v5403 = vld [vmem:[#allocation2 + $0x1628] sm:$0xf]
    %v5404 = vld [vmem:[#allocation2 + $0x1638] sm:$0xf]
    %v5405 = vld [vmem:[#allocation2 + $0x1648] sm:$0xf]
    %v5406 = vld [vmem:[#allocation2 + $0x1658] sm:$0xf]
    %v5407 = vld [vmem:[#allocation2 + $0x1668] sm:$0xf]
    %v5408 = vld [vmem:[#allocation2 + $0x1678] sm:$0xf]
    %v5409 = vld [vmem:[#allocation4 + $0x20] ss:$0 sm:$0xff]
    %v5442 = vunpack.c.l.b16 %v5377
    %v5443 = vunpack.c.l.b16 %v5378
    %v5444 = vunpack.c.l.b16 %v5379
    %v5445 = vunpack.c.l.b16 %v5380
    %v5446 = vunpack.c.l.b16 %v5381
    %v5447 = vunpack.c.l.b16 %v5382
    %v5448 = vunpack.c.l.b16 %v5383
    %v5449 = vunpack.c.l.b16 %v5384
    %v5450 = vunpack.c.l.b16 %v5385
    %v5451 = vunpack.c.l.b16 %v5386
    %v5452 = vunpack.c.l.b16 %v5387
    %v5453 = vunpack.c.l.b16 %v5388
    %v5454 = vunpack.c.l.b16 %v5389
    %v5455 = vunpack.c.l.b16 %v5390
    %v5456 = vunpack.c.l.b16 %v5391
    %v5457 = vunpack.c.l.b16 %v5392
    %v5458 = vunpack.c.l.b16 %v5393
    %v5459 = vunpack.c.l.b16 %v5394
    %v5460 = vunpack.c.l.b16 %v5395
    %v5461 = vunpack.c.l.b16 %v5396
    %v5462 = vunpack.c.l.b16 %v5397
    %v5463 = vunpack.c.l.b16 %v5398
    %v5464 = vunpack.c.l.b16 %v5399
    %v5465 = vunpack.c.l.b16 %v5400
    %v5466 = vunpack.c.l.b16 %v5401
    %v5467 = vunpack.c.l.b16 %v5402
    %v5468 = vunpack.c.l.b16 %v5403
    %v5469 = vunpack.c.l.b16 %v5404
    %v5470 = vunpack.c.l.b16 %v5405
    %v5471 = vunpack.c.l.b16 %v5406
    %v5472 = vunpack.c.l.b16 %v5407
    %v5473 = vunpack.c.l.b16 %v5408
    %v5474 = vpack.c.b16 %v5443, %v5442
    %v5475 = vpack.c.b16 %v5445, %v5444
    %v5476 = vpack.c.b16 %v5447, %v5446
    %v5477 = vpack.c.b16 %v5449, %v5448
    %v5478 = vpack.c.b16 %v5451, %v5450
    %v5479 = vpack.c.b16 %v5453, %v5452
    %v5480 = vpack.c.b16 %v5455, %v5454
    %v5481 = vpack.c.b16 %v5457, %v5456
    %v5482 = vpack.c.b16 %v5459, %v5458
    %v5483 = vpack.c.b16 %v5461, %v5460
    %v5484 = vpack.c.b16 %v5463, %v5462
    %v5485 = vpack.c.b16 %v5465, %v5464
    %v5486 = vpack.c.b16 %v5467, %v5466
    %v5487 = vpack.c.b16 %v5469, %v5468
    %v5488 = vpack.c.b16 %v5471, %v5470
    %v5489 = vpack.c.b16 %v5473, %v5472
    %5506 = vmatprep.subr.bf16.mxu0 0
    %5507 = vmatpush1.bf16.msra.mxu0 %v5474
    %5508 = vmatprep.subr.bf16.mxu0 0
    %5509 = vmatpush1.bf16.msra.mxu0 %v5475
    %5510 = vmatprep.subr.bf16.mxu0 0
    %5511 = vmatpush1.bf16.msra.mxu0 %v5476
    %5512 = vmatprep.subr.bf16.mxu0 0
    %5513 = vmatpush1.bf16.msra.mxu0 %v5477
    %5514 = vmatprep.subr.bf16.mxu0 0
    %5515 = vmatpush1.bf16.msra.mxu0 %v5478
    %5516 = vmatprep.subr.bf16.mxu0 0
    %5517 = vmatpush1.bf16.msra.mxu0 %v5479
    %5518 = vmatprep.subr.bf16.mxu0 0
    %5519 = vmatpush1.bf16.msra.mxu0 %v5480
    %5520 = vmatprep.subr.bf16.mxu0 0
    %5521 = vmatpush1.bf16.msra.mxu0 %v5481
    %5522 = vmatprep.subr.bf16.mxu0 0
    %5523 = vmatpush1.bf16.msra.mxu0 %v5482
    %5524 = vmatprep.subr.bf16.mxu0 0
    %5525 = vmatpush1.bf16.msra.mxu0 %v5483
    %5526 = vmatprep.subr.bf16.mxu0 0
    %5527 = vmatpush1.bf16.msra.mxu0 %v5484
    %5528 = vmatprep.subr.bf16.mxu0 0
    %5529 = vmatpush1.bf16.msra.mxu0 %v5485
    %5530 = vmatprep.subr.bf16.mxu0 0
    %5531 = vmatpush1.bf16.msra.mxu0 %v5486
    %5532 = vmatprep.subr.bf16.mxu0 0
    %5533 = vmatpush1.bf16.msra.mxu0 %v5487
    %5534 = vmatprep.subr.bf16.mxu0 0
    %5535 = vmatpush1.bf16.msra.mxu0 %v5488
    %5536 = vmatprep.subr.bf16.mxu0 0
    %5537 = vmatpush1.bf16.msra.mxu0 %v5489
    %5538 = vmatprep.mubr.bf16.mxu0 %v5376
    %5539 = vmatmul.mubr.bf16.gmra.mrb[0].mxu0 %v5375
    %v5540 = vpop.f32.mrb[0].mxu0
    %v5541 = vadd.f32 %v5409, %v5540
    %v5542 = vpop.f32.mrb[0].mxu0
    %v5543 = vpop.f32.mrb[0].mxu0
    %v5544 = vpop.f32.mrb[0].mxu0
    %5545 = vdwg.mxu0
    %vm5546 = vcmp.gt.f32.partialorder %v5541, 0.0
    %v5547 = vmul.f32 %v5541, 0.01
    %v5548 = vsel %vm5546, %v5541, %v5547
    %v5549 = vpack.c.bf16 %v5548, %v5548
    %v5550 = vld [vmem:[#allocation2 + $0x148c] sm:$0xf]
    %v5551 = vld [vmem:[#allocation2 + $0x149c] sm:$0xf]
    %v5552 = vld [vmem:[#allocation2 + $0x14ac] sm:$0xf]
    %v5553 = vld [vmem:[#allocation2 + $0x14bc] sm:$0xf]
    %v5554 = vld [vmem:[#allocation2 + $0x14cc] sm:$0xf]
    %v5555 = vld [vmem:[#allocation2 + $0x14dc] sm:$0xf]
    %v5556 = vld [vmem:[#allocation2 + $0x14ec] sm:$0xf]
    %v5557 = vld [vmem:[#allocation2 + $0x14fc] sm:$0xf]
    %v5558 = vld [vmem:[#allocation2 + $0x150c] sm:$0xf]
    %v5559 = vld [vmem:[#allocation2 + $0x151c] sm:$0xf]
    %v5560 = vld [vmem:[#allocation2 + $0x152c] sm:$0xf]
    %v5561 = vld [vmem:[#allocation2 + $0x153c] sm:$0xf]
    %v5562 = vld [vmem:[#allocation2 + $0x154c] sm:$0xf]
    %v5563 = vld [vmem:[#allocation2 + $0x155c] sm:$0xf]
    %v5564 = vld [vmem:[#allocation2 + $0x156c] sm:$0xf]
    %v5565 = vld [vmem:[#allocation2 + $0x157c] sm:$0xf]
    %v5566 = vld [vmem:[#allocation4 + $0x21] ss:$0 sm:$0xff]
    %v5583 = vunpack.c.l.b16 %v5550
    %v5584 = vunpack.c.l.b16 %v5551
    %v5585 = vunpack.c.l.b16 %v5552
    %v5586 = vunpack.c.l.b16 %v5553
    %v5587 = vunpack.c.l.b16 %v5554
    %v5588 = vunpack.c.l.b16 %v5555
    %v5589 = vunpack.c.l.b16 %v5556
    %v5590 = vunpack.c.l.b16 %v5557
    %v5591 = vunpack.c.l.b16 %v5558
    %v5592 = vunpack.c.l.b16 %v5559
    %v5593 = vunpack.c.l.b16 %v5560
    %v5594 = vunpack.c.l.b16 %v5561
    %v5595 = vunpack.c.l.b16 %v5562
    %v5596 = vunpack.c.l.b16 %v5563
    %v5597 = vunpack.c.l.b16 %v5564
    %v5598 = vunpack.c.l.b16 %v5565
    %v5599 = vpack.c.b16 %v5584, %v5583
    %v5600 = vpack.c.b16 %v5586, %v5585
    %v5601 = vpack.c.b16 %v5588, %v5587
    %v5602 = vpack.c.b16 %v5590, %v5589
    %v5603 = vpack.c.b16 %v5592, %v5591
    %v5604 = vpack.c.b16 %v5594, %v5593
    %v5605 = vpack.c.b16 %v5596, %v5595
    %v5606 = vpack.c.b16 %v5598, %v5597
    %5615 = vmatprep.subr.bf16.mxu0 0
    %5616 = vmatpush1.bf16.msra.mxu0 %v5599
    %5617 = vmatprep.subr.bf16.mxu0 0
    %5618 = vmatpush1.bf16.msra.mxu0 %v5600
    %5619 = vmatprep.subr.bf16.mxu0 0
    %5620 = vmatpush1.bf16.msra.mxu0 %v5601
    %5621 = vmatprep.subr.bf16.mxu0 0
    %5622 = vmatpush1.bf16.msra.mxu0 %v5602
    %5623 = vmatprep.subr.bf16.mxu0 0
    %5624 = vmatpush1.bf16.msra.mxu0 %v5603
    %5625 = vmatprep.subr.bf16.mxu0 0
    %5626 = vmatpush1.bf16.msra.mxu0 %v5604
    %5627 = vmatprep.subr.bf16.mxu0 0
    %5628 = vmatpush1.bf16.msra.mxu0 %v5605
    %5629 = vmatprep.subr.bf16.mxu0 0
    %5630 = vmatpush1.bf16.msra.mxu0 %v5606
    %5631 = vmatprep.subr.bf16.mxu0 0
    %5632 = vmatpush1.bf16.msra.mxu0 0
    %5633 = vmatprep.subr.bf16.mxu0 0
    %5634 = vmatpush1.bf16.msra.mxu0 0
    %5635 = vmatprep.subr.bf16.mxu0 0
    %5636 = vmatpush1.bf16.msra.mxu0 0
    %5637 = vmatprep.subr.bf16.mxu0 0
    %5638 = vmatpush1.bf16.msra.mxu0 0
    %5639 = vmatprep.subr.bf16.mxu0 0
    %5640 = vmatpush1.bf16.msra.mxu0 0
    %5641 = vmatprep.subr.bf16.mxu0 0
    %5642 = vmatpush1.bf16.msra.mxu0 0
    %5643 = vmatprep.subr.bf16.mxu0 0
    %5644 = vmatpush1.bf16.msra.mxu0 0
    %5645 = vmatprep.subr.bf16.mxu0 0
    %5646 = vmatpush1.bf16.msra.mxu0 0
    %5647 = vmatprep.mubr.bf16.mxu0 0
    %5648 = vmatmul.mubr.bf16.gmra.mrb[0].mxu0 %v5549
    %v5649 = vpop.f32.mrb[0].mxu0
    %v5650 = vadd.f32 %v5566, %v5649
    %v5651 = vpop.f32.mrb[0].mxu0
    %v5652 = vpop.f32.mrb[0].mxu0
    %v5653 = vpop.f32.mrb[0].mxu0
    %5654 = vdwg.mxu0
    %vm5655 = vcmp.gt.f32.partialorder %v5650, 0.0
    %v5656 = vmul.f32 %v5650, 0.01
    %v5657 = vsel %vm5655, %v5650, %v5656
    %v5658 = vpack.c.bf16 %v5657, %v5657
    %v5659 = vld [vmem:[#allocation2 + $0x158c] sm:$0xf]
    %v5660 = vld [vmem:[#allocation2 + $0x159c] sm:$0xf]
    %v5661 = vld [vmem:[#allocation2 + $0x15ac] sm:$0xf]
    %v5662 = vld [vmem:[#allocation2 + $0x15bc] sm:$0xf]
    %v5663 = vld [vmem:[#allocation2 + $0x15cc] sm:$0xf]
    %v5664 = vld [vmem:[#allocation2 + $0x15dc] sm:$0xf]
    %v5665 = vld [vmem:[#allocation2 + $0x15ec] sm:$0xf]
    %v5666 = vld [vmem:[#allocation2 + $0x15fc] sm:$0xf]
    %v5667 = vld [vmem:[#allocation2 + $0x160c] sm:$0xf]
    %v5668 = vld [vmem:[#allocation2 + $0x161c] sm:$0xf]
    %v5669 = vld [vmem:[#allocation2 + $0x162c] sm:$0xf]
    %v5670 = vld [vmem:[#allocation2 + $0x163c] sm:$0xf]
    %v5671 = vld [vmem:[#allocation2 + $0x164c] sm:$0xf]
    %v5672 = vld [vmem:[#allocation2 + $0x165c] sm:$0xf]
    %v5673 = vld [vmem:[#allocation2 + $0x166c] sm:$0xf]
    %v5674 = vld [vmem:[#allocation2 + $0x167c] sm:$0xf]
    %v5675 = vld [vmem:[#allocation4 + $0x22] ss:$0 sm:$0xff]
    %v5692 = vunpack.c.l.b16 %v5659
    %v5693 = vunpack.c.l.b16 %v5660
    %v5694 = vunpack.c.l.b16 %v5661
    %v5695 = vunpack.c.l.b16 %v5662
    %v5696 = vunpack.c.l.b16 %v5663
    %v5697 = vunpack.c.l.b16 %v5664
    %v5698 = vunpack.c.l.b16 %v5665
    %v5699 = vunpack.c.l.b16 %v5666
    %v5700 = vunpack.c.l.b16 %v5667
    %v5701 = vunpack.c.l.b16 %v5668
    %v5702 = vunpack.c.l.b16 %v5669
    %v5703 = vunpack.c.l.b16 %v5670
    %v5704 = vunpack.c.l.b16 %v5671
    %v5705 = vunpack.c.l.b16 %v5672
    %v5706 = vunpack.c.l.b16 %v5673
    %v5707 = vunpack.c.l.b16 %v5674
    %v5708 = vpack.c.b16 %v5693, %v5692
    %v5709 = vpack.c.b16 %v5695, %v5694
    %v5710 = vpack.c.b16 %v5697, %v5696
    %v5711 = vpack.c.b16 %v5699, %v5698
    %v5712 = vpack.c.b16 %v5701, %v5700
    %v5713 = vpack.c.b16 %v5703, %v5702
    %v5714 = vpack.c.b16 %v5705, %v5704
    %v5715 = vpack.c.b16 %v5707, %v5706
    %5724 = vmatprep.subr.bf16.mxu0 0
    %5725 = vmatpush1.bf16.msra.mxu0 %v5708
    %5726 = vmatprep.subr.bf16.mxu0 0
    %5727 = vmatpush1.bf16.msra.mxu0 %v5709
    %5728 = vmatprep.subr.bf16.mxu0 0
    %5729 = vmatpush1.bf16.msra.mxu0 %v5710
    %5730 = vmatprep.subr.bf16.mxu0 0
    %5731 = vmatpush1.bf16.msra.mxu0 %v5711
    %5732 = vmatprep.subr.bf16.mxu0 0
    %5733 = vmatpush1.bf16.msra.mxu0 %v5712
    %5734 = vmatprep.subr.bf16.mxu0 0
    %5735 = vmatpush1.bf16.msra.mxu0 %v5713
    %5736 = vmatprep.subr.bf16.mxu0 0
    %5737 = vmatpush1.bf16.msra.mxu0 %v5714
    %5738 = vmatprep.subr.bf16.mxu0 0
    %5739 = vmatpush1.bf16.msra.mxu0 %v5715
    %5740 = vmatprep.subr.bf16.mxu0 0
    %5741 = vmatpush1.bf16.msra.mxu0 0
    %5742 = vmatprep.subr.bf16.mxu0 0
    %5743 = vmatpush1.bf16.msra.mxu0 0
    %5744 = vmatprep.subr.bf16.mxu0 0
    %5745 = vmatpush1.bf16.msra.mxu0 0
    %5746 = vmatprep.subr.bf16.mxu0 0
    %5747 = vmatpush1.bf16.msra.mxu0 0
    %5748 = vmatprep.subr.bf16.mxu0 0
    %5749 = vmatpush1.bf16.msra.mxu0 0
    %5750 = vmatprep.subr.bf16.mxu0 0
    %5751 = vmatpush1.bf16.msra.mxu0 0
    %5752 = vmatprep.subr.bf16.mxu0 0
    %5753 = vmatpush1.bf16.msra.mxu0 0
    %5754 = vmatprep.subr.bf16.mxu0 0
    %5755 = vmatpush1.bf16.msra.mxu0 0
    %5756 = vmatprep.mubr.bf16.mxu0 0
    %5757 = vmatmul.mubr.bf16.gmra.mrb[0].mxu0 %v5658
    %v5758 = vpop.f32.mrb[0].mxu0
    %v5759 = vadd.f32 %v5675, %v5758
    %v5760 = vpop.f32.mrb[0].mxu0
    %v5761 = vpop.f32.mrb[0].mxu0
    %v5762 = vpop.f32.mrb[0].mxu0
    %5763 = vdwg.mxu0
    %vm5764 = vcmp.gt.f32.partialorder %v5759, 0.0
    %v5765 = vmul.f32 %v5759, 0.01
    %v5766 = vsel %vm5764, %v5759, %v5765
    %v5767 = vpack.c.bf16 %v5766, %v5766
    %v5768 = vld [vmem:[#allocation2 + $0x1680] sm:$0xf]
    %v5769 = vld [vmem:[#allocation2 + $0x1690] sm:$0xf]
    %v5770 = vld [vmem:[#allocation2 + $0x16a0] sm:$0xf]
    %v5771 = vld [vmem:[#allocation2 + $0x16b0] sm:$0xf]
    %v5772 = vld [vmem:[#allocation2 + $0x16c0] sm:$0xf]
    %v5773 = vld [vmem:[#allocation2 + $0x16d0] sm:$0xf]
    %v5774 = vld [vmem:[#allocation2 + $0x16e0] sm:$0xf]
    %v5775 = vld [vmem:[#allocation2 + $0x16f0] sm:$0xf]
    %v5776 = vld [vmem:[#allocation2 + $0x1700] sm:$0xf]
    %v5777 = vld [vmem:[#allocation2 + $0x1710] sm:$0xf]
    %v5778 = vld [vmem:[#allocation2 + $0x1720] sm:$0xf]
    %v5779 = vld [vmem:[#allocation2 + $0x1730] sm:$0xf]
    %v5780 = vld [vmem:[#allocation2 + $0x1740] sm:$0xf]
    %v5781 = vld [vmem:[#allocation2 + $0x1750] sm:$0xf]
    %v5782 = vld [vmem:[#allocation2 + $0x1760] sm:$0xf]
    %v5783 = vld [vmem:[#allocation2 + $0x1770] sm:$0xf]
    %v5784 = vld [vmem:[#allocation4 + $0x23] ss:$0 sm:$0xff]
    %v5801 = vunpack.c.l.b16 %v5768
    %v5802 = vunpack.c.l.b16 %v5769
    %v5803 = vunpack.c.l.b16 %v5770
    %v5804 = vunpack.c.l.b16 %v5771
    %v5805 = vunpack.c.l.b16 %v5772
    %v5806 = vunpack.c.l.b16 %v5773
    %v5807 = vunpack.c.l.b16 %v5774
    %v5808 = vunpack.c.l.b16 %v5775
    %v5809 = vunpack.c.l.b16 %v5776
    %v5810 = vunpack.c.l.b16 %v5777
    %v5811 = vunpack.c.l.b16 %v5778
    %v5812 = vunpack.c.l.b16 %v5779
    %v5813 = vunpack.c.l.b16 %v5780
    %v5814 = vunpack.c.l.b16 %v5781
    %v5815 = vunpack.c.l.b16 %v5782
    %v5816 = vunpack.c.l.b16 %v5783
    %v5817 = vpack.c.b16 %v5802, %v5801
    %v5818 = vpack.c.b16 %v5804, %v5803
    %v5819 = vpack.c.b16 %v5806, %v5805
    %v5820 = vpack.c.b16 %v5808, %v5807
    %v5821 = vpack.c.b16 %v5810, %v5809
    %v5822 = vpack.c.b16 %v5812, %v5811
    %v5823 = vpack.c.b16 %v5814, %v5813
    %v5824 = vpack.c.b16 %v5816, %v5815
    %5833 = vmatprep.subr.bf16.mxu0 0
    %5834 = vmatpush1.bf16.msra.mxu0 %v5817
    %5835 = vmatprep.subr.bf16.mxu0 0
    %5836 = vmatpush1.bf16.msra.mxu0 %v5818
    %5837 = vmatprep.subr.bf16.mxu0 0
    %5838 = vmatpush1.bf16.msra.mxu0 %v5819
    %5839 = vmatprep.subr.bf16.mxu0 0
    %5840 = vmatpush1.bf16.msra.mxu0 %v5820
    %5841 = vmatprep.subr.bf16.mxu0 0
    %5842 = vmatpush1.bf16.msra.mxu0 %v5821
    %5843 = vmatprep.subr.bf16.mxu0 0
    %5844 = vmatpush1.bf16.msra.mxu0 %v5822
    %5845 = vmatprep.subr.bf16.mxu0 0
    %5846 = vmatpush1.bf16.msra.mxu0 %v5823
    %5847 = vmatprep.subr.bf16.mxu0 0
    %5848 = vmatpush1.bf16.msra.mxu0 %v5824
    %5849 = vmatprep.subr.bf16.mxu0 0
    %5850 = vmatpush1.bf16.msra.mxu0 0
    %5851 = vmatprep.subr.bf16.mxu0 0
    %5852 = vmatpush1.bf16.msra.mxu0 0
    %5853 = vmatprep.subr.bf16.mxu0 0
    %5854 = vmatpush1.bf16.msra.mxu0 0
    %5855 = vmatprep.subr.bf16.mxu0 0
    %5856 = vmatpush1.bf16.msra.mxu0 0
    %5857 = vmatprep.subr.bf16.mxu0 0
    %5858 = vmatpush1.bf16.msra.mxu0 0
    %5859 = vmatprep.subr.bf16.mxu0 0
    %5860 = vmatpush1.bf16.msra.mxu0 0
    %5861 = vmatprep.subr.bf16.mxu0 0
    %5862 = vmatpush1.bf16.msra.mxu0 0
    %5863 = vmatprep.subr.bf16.mxu0 0
    %5864 = vmatpush1.bf16.msra.mxu0 0
    %5865 = vmatprep.mubr.bf16.mxu0 0
    %5866 = vmatmul.mubr.bf16.gmra.mrb[0].mxu0 %v5767
    %v5867 = vpop.f32.mrb[0].mxu0
    %v5868 = vadd.f32 %v5784, %v5867
    %v5869 = vpop.f32.mrb[0].mxu0
    %v5870 = vpop.f32.mrb[0].mxu0
    %v5871 = vpop.f32.mrb[0].mxu0
    %5872 = vdwg.mxu0
    %5873 = vst [vmem:[%s3] sm:$0xff] %v5868
    // Predicated region
    $region22: #{linear_model_forward.1} parent=1 // pred_check
      _
    $region23: #{linear_model_forward.1} parent=1 // pred_check_branch
      %5875 = sbr.rel (0) target = $region25
    $region24: #{linear_model_forward.1} parent=1 // pred_region
      _
    $region25: #{linear_model_forward.1} parent=1 // pred_fallthru
      _
    // Predicated region
    $region26: #{linear_model_forward.1} parent=1 // pred_check
      _
    $region27: #{linear_model_forward.1} parent=1 // pred_check_branch
      %5877 = sbr.rel (0) target = $region29
    $region28: #{linear_model_forward.1} parent=1 // pred_region
      _
    $region29: #{linear_model_forward.1} parent=1 // pred_fallthru
      _
    %5878 = vsyncpa [#allocation3], 1
    %5879 = vsyncpa [#allocation5], 1

</llo_original>
